<compile_context>
chip_gen: v5e
topology: v5e:2x2
jax: 0.10.0
libtpu: 0.0.40
codegen_flags: <defaults>
</compile_context>

<pallas_src>
from functools import partial

import jax
import jax.numpy as jnp
from jax import lax
from jax.experimental import pallas as pl
from jax.experimental.pallas import tpu as pltpu


def _round_up(x, m):
    return (x + m - 1) // m * m


# ----------------------------------------------------------------------------
# Pallas kernel 1: gridded (M-tiled) matmul + bias + activation, lane-padded Cout
# ----------------------------------------------------------------------------
def _fused_matmul_kernel(a_ref, w_ref, b_ref, o_ref, *, act):
    acc = jnp.dot(a_ref[...], w_ref[...], preferred_element_type=jnp.float32)
    acc = acc + b_ref[...]            # (1, Cp) broadcasts over rows
    if act == "relu":
        acc = jnp.maximum(acc, 0.0)
    elif act == "tanh":
        acc = jnp.tanh(acc)
    o_ref[...] = acc.astype(o_ref.dtype)


def fused_matmul(a, w, b, act, tm=256):
    """act(a @ w + b). a: [M, K], w: [K, Cout], b: [Cout] -> [M, Cout] (f32).

    Pads K to a multiple of 8 sublanes, Cout to 128 lanes (lane-dense stores,
    full-width MXU N), tiles M into `tm`-row blocks over a 1-D "parallel" grid.
    """
    M, K = a.shape
    K2, Cout = w.shape
    assert K == K2

    Kp = _round_up(K, 8)
    Cp = _round_up(Cout, 128)
    Mp = _round_up(M, 8)
    tm = min(tm, Mp)
    Mp = _round_up(Mp, tm)

    a_p = jnp.pad(a, ((0, Mp - M), (0, Kp - K)))
    w_p = jnp.pad(w, ((0, Kp - K), (0, Cp - Cout)))
    b_p = jnp.pad(b, (0, Cp - Cout)).reshape(1, Cp)

    out = pl.pallas_call(
        partial(_fused_matmul_kernel, act=act),
        out_shape=jax.ShapeDtypeStruct((Mp, Cp), jnp.float32),
        grid=(Mp // tm,),
        in_specs=[
            pl.BlockSpec((tm, Kp), lambda i: (i, 0)),
            pl.BlockSpec((Kp, Cp), lambda i: (0, 0)),
            pl.BlockSpec((1, Cp), lambda i: (0, 0)),
        ],
        out_specs=pl.BlockSpec((tm, Cp), lambda i: (i, 0)),
        compiler_params=pltpu.CompilerParams(
            dimension_semantics=("parallel",)),
    )(a_p, w_p, b_p)
    return out[:M, :Cout]


# ----------------------------------------------------------------------------
# Pallas kernel 2: fused bottleneck (enc3 dense + dec1 dense + ReLU), one call,
# intermediate stays in VMEM/vregs.
# ----------------------------------------------------------------------------
def _bottleneck_kernel(x_ref, we_ref, be_ref, wd_ref, bd_ref, o_ref):
    h = jnp.dot(x_ref[...], we_ref[...], preferred_element_type=jnp.float32)
    h = h + be_ref[...]                                   # enc3: no activation
    y = jnp.dot(h, wd_ref[...], preferred_element_type=jnp.float32)
    y = y + bd_ref[...]
    o_ref[...] = jnp.maximum(y, 0.0).astype(o_ref.dtype)  # dec1: ReLU


def bottleneck_block(x_nhwc, enc3_params, dec1_params):
    """enc3 (Conv2d 32->64, k=7 on a 7x7 map) + dec1 (ConvTranspose2d 64->32, k=7 on
    a 1x1 map) expressed as two chained dense matmuls in a single pallas_call."""
    we, be = enc3_params          # we: [64, 32, 7, 7] OIHW, be: [64]
    wt, bd = dec1_params          # wt: [64, 32, 7, 7] (Cin, Cout, kh, kw), bd: [32]

    N, H, W, C = x_nhwc.shape     # (N, 7, 7, 32)
    Cout_e = we.shape[0]          # 64
    Cout_d, kh, kw = wt.shape[1], wt.shape[2], wt.shape[3]   # 32, 7, 7

    K1 = H * W * C                # 1568
    K2 = kh * kw * Cout_d         # 1568

    x_flat = x_nhwc.reshape(N, K1)                                    # row order (h, w, c)
    we_mat = jnp.transpose(we, (2, 3, 1, 0)).reshape(K1, Cout_e)      # rows (kh, kw, cin)
    wd_mat = jnp.transpose(wt, (0, 2, 3, 1)).reshape(Cout_e, K2)      # cols (kh, kw, cout)
    bd_full = jnp.broadcast_to(bd, (kh, kw, Cout_d)).reshape(1, K2)

    Np = _round_up(N, 8)
    Hp = _round_up(Cout_e, 128)   # pad hidden width 64 -> 128 lanes

    x_p = jnp.pad(x_flat, ((0, Np - N), (0, 0)))
    we_p = jnp.pad(we_mat, ((0, 0), (0, Hp - Cout_e)))
    be_p = jnp.pad(be, (0, Hp - Cout_e)).reshape(1, Hp)
    wd_p = jnp.pad(wd_mat, ((0, Hp - Cout_e), (0, 0)))

    out = pl.pallas_call(
        _bottleneck_kernel,
        out_shape=jax.ShapeDtypeStruct((Np, K2), jnp.float32),
        in_specs=[
            pl.BlockSpec((Np, K1), lambda: (0, 0)),
            pl.BlockSpec((K1, Hp), lambda: (0, 0)),
            pl.BlockSpec((1, Hp), lambda: (0, 0)),
            pl.BlockSpec((Hp, K2), lambda: (0, 0)),
            pl.BlockSpec((1, K2), lambda: (0, 0)),
        ],
        out_specs=pl.BlockSpec((Np, K2), lambda: (0, 0)),
    )(x_p, we_p, be_p, wd_p, bd_full)

    return out[:N].reshape(N, kh, kw, Cout_d)    # NHWC (N, 7, 7, 32)


# ----------------------------------------------------------------------------
# Glue: NHWC im2col patch extraction (layout-only, no FLOPs)
# ----------------------------------------------------------------------------
def _im2col(x_nhwc, kh, kw, stride):
    N, H, W, C = x_nhwc.shape
    Ho = (H - kh) // stride + 1
    Wo = (W - kw) // stride + 1
    cols = []
    for di in range(kh):
        for dj in range(kw):
            cols.append(x_nhwc[:, di:di + stride * Ho:stride,
                               dj:dj + stride * Wo:stride, :])   # [N, Ho, Wo, C]
    patches = jnp.stack(cols, axis=3)                            # [N, Ho, Wo, kh*kw, C]
    return patches.reshape(N * Ho * Wo, kh * kw * C), (N, Ho, Wo)


def conv2d_nhwc(x_nhwc, weight, bias, stride, padding, act):
    """weight: [Cout, Cin, kh, kw] (PyTorch OIHW). x / output: NHWC."""
    Cout, Cin, kh, kw = weight.shape
    x = x_nhwc
    if padding > 0:
        x = jnp.pad(x, ((0, 0), (padding, padding), (padding, padding), (0, 0)))
    patches, (N, Ho, Wo) = _im2col(x, kh, kw, stride)
    w_mat = jnp.transpose(weight, (2, 3, 1, 0)).reshape(kh * kw * Cin, Cout)
    out = fused_matmul(patches, w_mat, bias, act)                # [N*Ho*Wo, Cout]
    return out.reshape(N, Ho, Wo, Cout)


def conv_transpose2d_nhwc(x_nhwc, weight_t, bias, stride, padding,
                          output_padding, act):
    """weight_t: [Cin, Cout, kh, kw] (PyTorch ConvTranspose2d). x / output: NHWC."""
    Cin, Cout, kh, kw = weight_t.shape
    # equivalent forward-conv weight: swap channels + flip spatially
    w_conv = jnp.transpose(weight_t[:, :, ::-1, ::-1], (1, 0, 2, 3))  # OIHW

    x = x_nhwc
    N, H, W, C = x.shape
    if stride > 1:
        Hd = H + (H - 1) * (stride - 1)
        Wd = W + (W - 1) * (stride - 1)
        xd = jnp.zeros((N, Hd, Wd, C), x.dtype)
        x = xd.at[:, ::stride, ::stride, :].set(x)
    ph_lo, ph_hi = kh - 1 - padding, kh - 1 - padding + output_padding
    pw_lo, pw_hi = kw - 1 - padding, kw - 1 - padding + output_padding
    x = jnp.pad(x, ((0, 0), (ph_lo, ph_hi), (pw_lo, pw_hi), (0, 0)))

    patches, (N, Ho, Wo) = _im2col(x, kh, kw, 1)
    w_mat = jnp.transpose(w_conv, (2, 3, 1, 0)).reshape(kh * kw * Cin, Cout)
    out = fused_matmul(patches, w_mat, bias, act)
    return out.reshape(N, Ho, Wo, Cout)


# ----------------------------------------------------------------------------
# Parameter init (deterministic, PyTorch-default-like uniform)
# ----------------------------------------------------------------------------
def _init_conv(key, cout, cin, k):
    kw_key, kb_key = jax.random.split(key)
    fan_in = cin * k * k
    bound = 1.0 / jnp.sqrt(fan_in)
    w = jax.random.uniform(kw_key, (cout, cin, k, k), jnp.float32, -bound, bound)
    b = jax.random.uniform(kb_key, (cout,), jnp.float32, -bound, bound)
    return w, b


def _init_convT(key, cin, cout, k):
    kw_key, kb_key = jax.random.split(key)
    fan_in = cout * k * k
    bound = 1.0 / jnp.sqrt(fan_in)
    w = jax.random.uniform(kw_key, (cin, cout, k, k), jnp.float32, -bound, bound)
    b = jax.random.uniform(kb_key, (cout,), jnp.float32, -bound, bound)
    return w, b


def init_params(seed=0):
    keys = jax.random.split(jax.random.PRNGKey(seed), 6)
    return {
        "enc1": _init_conv(keys[0], 16, 1, 3),
        "enc2": _init_conv(keys[1], 32, 16, 3),
        "enc3": _init_conv(keys[2], 64, 32, 7),
        "dec1": _init_convT(keys[3], 64, 32, 7),
        "dec2": _init_convT(keys[4], 32, 16, 3),
        "dec3": _init_convT(keys[5], 16, 1, 3),
    }


# ----------------------------------------------------------------------------
# Forward pass (mirrors Autoencoder.forward) -- NHWC internally, NCHW boundary.
# ----------------------------------------------------------------------------
def autoencoder_forward(params, x_nchw):
    x = jnp.transpose(x_nchw, (0, 2, 3, 1))                                  # NHWC once
    # encoder
    x = conv2d_nhwc(x, *params["enc1"], stride=2, padding=1, act="relu")     # (N,14,14,16)
    x = conv2d_nhwc(x, *params["enc2"], stride=2, padding=1, act="relu")     # (N, 7, 7,32)
    # fused bottleneck: enc3 (no act) + dec1 (ReLU) as dense matmuls, one kernel
    x = bottleneck_block(x, params["enc3"], params["dec1"])                  # (N, 7, 7,32)
    # decoder tail
    x = conv_transpose2d_nhwc(x, *params["dec2"], stride=2, padding=1,
                              output_padding=1, act="relu")                  # (N,14,14,16)
    x = conv_transpose2d_nhwc(x, *params["dec3"], stride=2, padding=1,
                              output_padding=1, act="tanh")                  # (N,28,28, 1)
    return jnp.transpose(x, (0, 3, 1, 2))                                    # NCHW once


# ----------------------------------------------------------------------------
# Pure-XLA reference (for correctness check only)
# ----------------------------------------------------------------------------
def _ref_conv(x, w, b, s, p):
    y = lax.conv_general_dilated(
        x, w, window_strides=(s, s), padding=[(p, p), (p, p)],
        dimension_numbers=("NCHW", "OIHW", "NCHW"))
    return y + b.reshape(1, -1, 1, 1)


def _ref_convT(x, wt, b, s, p, op):
    w_conv = jnp.transpose(wt[:, :, ::-1, ::-1], (1, 0, 2, 3))
    k = wt.shape[-1]
    y = lax.conv_general_dilated(
        x, w_conv, window_strides=(1, 1),
        padding=[(k - 1 - p, k - 1 - p + op)] * 2,
        lhs_dilation=(s, s),
        dimension_numbers=("NCHW", "OIHW", "NCHW"))
    return y + b.reshape(1, -1, 1, 1)


def reference_forward(params, x):
    x = jax.nn.relu(_ref_conv(x, *params["enc1"], 2, 1))
    x = jax.nn.relu(_ref_conv(x, *params["enc2"], 2, 1))
    x = _ref_conv(x, *params["enc3"], 1, 0)
    x = jax.nn.relu(_ref_convT(x, *params["dec1"], 1, 0, 0))
    x = jax.nn.relu(_ref_convT(x, *params["dec2"], 2, 1, 1))
    x = jnp.tanh(_ref_convT(x, *params["dec3"], 2, 1, 1))
    return x


if __name__ == "__main__":
    key = jax.random.PRNGKey(0)
    x = jax.random.normal(key, (2, 1, 28, 28), jnp.float32)  # NCHW, MNIST-like

    params = init_params(seed=0)

    out = jax.jit(autoencoder_forward)(params, x)
    out = jax.block_until_ready(out)

    assert out.shape == (2, 1, 28, 28), out.shape
    assert bool(jnp.all(jnp.isfinite(out)))

    ref = jax.block_until_ready(reference_forward(params, x))
    assert bool(jnp.allclose(out, ref, rtol=1e-3, atol=5e-4)), "mismatch vs XLA reference"

    print("KERNEL_OK")
</pallas_src>

<mosaic_0001>
module attributes {stable_mosaic.version = 11 : i64} {
  func.func @_fused_matmul_kernel(%arg0: i32, %arg1: memref<256x16xf32, #tpu.memory_space<vmem>>, %arg2: memref<16x128xf32, #tpu.memory_space<vmem>>, %arg3: memref<1x128xf32, #tpu.memory_space<vmem>>, %arg4: memref<256x128xf32, #tpu.memory_space<vmem>>) attributes {dimension_semantics = [#tpu.dimension_semantics<parallel>], iteration_bounds = array<i64: 2>, scalar_prefetch = 0 : i64, scratch_operands = 0 : i64, tpu.core_type = #tpu.core_type<tc>, window_params = [{transform_indices = @transform_0, window_bounds = array<i64: 256, 16>}, {pipeline_mode = #tpu.pipeline_mode<synchronous>, transform_indices = @transform_1, window_bounds = array<i64: 16, 128>}, {pipeline_mode = #tpu.pipeline_mode<synchronous>, transform_indices = @transform_2, window_bounds = array<i64: 1, 128>}, {transform_indices = @transform_3, window_bounds = array<i64: 256, 128>}]} {
    %c0 = arith.constant 0 : index
    %c0_0 = arith.constant 0 : index
    %0 = vector.load %arg1[%c0, %c0_0] : memref<256x16xf32, #tpu.memory_space<vmem>>, vector<256x16xf32>
    %c0_1 = arith.constant 0 : index
    %c0_2 = arith.constant 0 : index
    %1 = vector.load %arg2[%c0_1, %c0_2] : memref<16x128xf32, #tpu.memory_space<vmem>>, vector<16x128xf32>
    %cst = arith.constant dense<0.000000e+00> : vector<256x128xf32>
    %2 = tpu.matmul %0, %1, %cst {dimension_numbers = #tpu.dot_dimension_numbers<[1], [0], [0], [1], [0, 0, 1, 1], [], []>} : vector<256x16xf32>, vector<16x128xf32>, vector<256x128xf32> -> vector<256x128xf32>
    %c0_3 = arith.constant 0 : index
    %c0_4 = arith.constant 0 : index
    %3 = vector.load %arg3[%c0_3, %c0_4] : memref<1x128xf32, #tpu.memory_space<vmem>>, vector<1x128xf32>
    %4 = vector.broadcast %3 : vector<1x128xf32> to vector<256x128xf32>
    %5 = arith.addf %2, %4 : vector<256x128xf32>
    %cst_5 = arith.constant 0.000000e+00 : f32
    %6 = vector.broadcast %cst_5 : f32 to vector<256x128xf32>
    %7 = arith.maximumf %5, %6 : vector<256x128xf32>
    %c0_6 = arith.constant 0 : index
    %c0_7 = arith.constant 0 : index
    %8 = vector.load %arg4[%c0_6, %c0_7] : memref<256x128xf32, #tpu.memory_space<vmem>>, vector<256x128xf32>
    tpu.vector_store %arg4[%c0_6, %c0_7], %7 {strides = array<i32>} : memref<256x128xf32, #tpu.memory_space<vmem>>, vector<256x128xf32>,
    return
  }
  func.func @transform_0(%arg0: i32) -> (i32, i32) {
    %c0_i32 = arith.constant 0 : i32
    %c0_i32_0 = arith.constant 0 : i32
    return %arg0, %c0_i32 : i32, i32
  }
  func.func @transform_1(%arg0: i32) -> (i32, i32) {
    %c0_i32 = arith.constant 0 : i32
    %c0_i32_0 = arith.constant 0 : i32
    %c0_i32_1 = arith.constant 0 : i32
    return %c0_i32, %c0_i32_0 : i32, i32
  }
  func.func @transform_2(%arg0: i32) -> (i32, i32) {
    %c0_i32 = arith.constant 0 : i32
    %c0_i32_0 = arith.constant 0 : i32
    %c0_i32_1 = arith.constant 0 : i32
    return %c0_i32, %c0_i32_0 : i32, i32
  }
  func.func @transform_3(%arg0: i32) -> (i32, i32) {
    %c0_i32 = arith.constant 0 : i32
    %c0_i32_0 = arith.constant 0 : i32
    return %arg0, %c0_i32 : i32, i32
  }
}

module attributes {stable_mosaic.version = 11 : i64} {
  func.func @_fused_matmul_kernel(%arg0: i32, %arg1: memref<104x144xf32, #tpu.memory_space<vmem>>, %arg2: memref<144x128xf32, #tpu.memory_space<vmem>>, %arg3: memref<1x128xf32, #tpu.memory_space<vmem>>, %arg4: memref<104x128xf32, #tpu.memory_space<vmem>>) attributes {dimension_semantics = [#tpu.dimension_semantics<parallel>], iteration_bounds = array<i64: 1>, scalar_prefetch = 0 : i64, scratch_operands = 0 : i64, tpu.core_type = #tpu.core_type<tc>, window_params = [{transform_indices = @transform_0, window_bounds = array<i64: 104, 144>}, {pipeline_mode = #tpu.pipeline_mode<synchronous>, transform_indices = @transform_1, window_bounds = array<i64: 144, 128>}, {pipeline_mode = #tpu.pipeline_mode<synchronous>, transform_indices = @transform_2, window_bounds = array<i64: 1, 128>}, {transform_indices = @transform_3, window_bounds = array<i64: 104, 128>}]} {
    %c0 = arith.constant 0 : index
    %c0_0 = arith.constant 0 : index
    %0 = vector.load %arg1[%c0, %c0_0] : memref<104x144xf32, #tpu.memory_space<vmem>>, vector<104x144xf32>
    %c0_1 = arith.constant 0 : index
    %c0_2 = arith.constant 0 : index
    %1 = vector.load %arg2[%c0_1, %c0_2] : memref<144x128xf32, #tpu.memory_space<vmem>>, vector<144x128xf32>
    %cst = arith.constant dense<0.000000e+00> : vector<104x128xf32>
    %2 = tpu.matmul %0, %1, %cst {dimension_numbers = #tpu.dot_dimension_numbers<[1], [0], [0], [1], [0, 0, 1, 1], [], []>} : vector<104x144xf32>, vector<144x128xf32>, vector<104x128xf32> -> vector<104x128xf32>
    %c0_3 = arith.constant 0 : index
    %c0_4 = arith.constant 0 : index
    %3 = vector.load %arg3[%c0_3, %c0_4] : memref<1x128xf32, #tpu.memory_space<vmem>>, vector<1x128xf32>
    %4 = vector.broadcast %3 : vector<1x128xf32> to vector<104x128xf32>
    %5 = arith.addf %2, %4 : vector<104x128xf32>
    %cst_5 = arith.constant 0.000000e+00 : f32
    %6 = vector.broadcast %cst_5 : f32 to vector<104x128xf32>
    %7 = arith.maximumf %5, %6 : vector<104x128xf32>
    %c0_6 = arith.constant 0 : index
    %c0_7 = arith.constant 0 : index
    %8 = vector.load %arg4[%c0_6, %c0_7] : memref<104x128xf32, #tpu.memory_space<vmem>>, vector<104x128xf32>
    tpu.vector_store %arg4[%c0_6, %c0_7], %7 {strides = array<i32>} : memref<104x128xf32, #tpu.memory_space<vmem>>, vector<104x128xf32>,
    return
  }
  func.func @transform_0(%arg0: i32) -> (i32, i32) {
    %c0_i32 = arith.constant 0 : i32
    %c0_i32_0 = arith.constant 0 : i32
    return %arg0, %c0_i32 : i32, i32
  }
  func.func @transform_1(%arg0: i32) -> (i32, i32) {
    %c0_i32 = arith.constant 0 : i32
    %c0_i32_0 = arith.constant 0 : i32
    %c0_i32_1 = arith.constant 0 : i32
    return %c0_i32, %c0_i32_0 : i32, i32
  }
  func.func @transform_2(%arg0: i32) -> (i32, i32) {
    %c0_i32 = arith.constant 0 : i32
    %c0_i32_0 = arith.constant 0 : i32
    %c0_i32_1 = arith.constant 0 : i32
    return %c0_i32, %c0_i32_0 : i32, i32
  }
  func.func @transform_3(%arg0: i32) -> (i32, i32) {
    %c0_i32 = arith.constant 0 : i32
    %c0_i32_0 = arith.constant 0 : i32
    return %arg0, %c0_i32 : i32, i32
  }
}

module attributes {stable_mosaic.version = 11 : i64} {
  func.func @_bottleneck_kernel(%arg0: memref<8x1568xf32, #tpu.memory_space<vmem>>, %arg1: memref<1568x128xf32, #tpu.memory_space<vmem>>, %arg2: memref<1x128xf32, #tpu.memory_space<vmem>>, %arg3: memref<128x1568xf32, #tpu.memory_space<vmem>>, %arg4: memref<1x1568xf32, #tpu.memory_space<vmem>>, %arg5: memref<8x1568xf32, #tpu.memory_space<vmem>>) attributes {dimension_semantics = [], scalar_prefetch = 0 : i64, scratch_operands = 0 : i64, tpu.core_type = #tpu.core_type<tc>} {
    %c0 = arith.constant 0 : index
    %c0_0 = arith.constant 0 : index
    %0 = vector.load %arg0[%c0, %c0_0] : memref<8x1568xf32, #tpu.memory_space<vmem>>, vector<8x1568xf32>
    %c0_1 = arith.constant 0 : index
    %c0_2 = arith.constant 0 : index
    %1 = vector.load %arg1[%c0_1, %c0_2] : memref<1568x128xf32, #tpu.memory_space<vmem>>, vector<1568x128xf32>
    %cst = arith.constant dense<0.000000e+00> : vector<8x128xf32>
    %2 = tpu.matmul %0, %1, %cst {dimension_numbers = #tpu.dot_dimension_numbers<[1], [0], [0], [1], [0, 0, 1, 1], [], []>} : vector<8x1568xf32>, vector<1568x128xf32>, vector<8x128xf32> -> vector<8x128xf32>
    %c0_3 = arith.constant 0 : index
    %c0_4 = arith.constant 0 : index
    %3 = vector.load %arg2[%c0_3, %c0_4] : memref<1x128xf32, #tpu.memory_space<vmem>>, vector<1x128xf32>
    %4 = vector.broadcast %3 : vector<1x128xf32> to vector<8x128xf32>
    %5 = arith.addf %2, %4 : vector<8x128xf32>
    %c0_5 = arith.constant 0 : index
    %c0_6 = arith.constant 0 : index
    %6 = vector.load %arg3[%c0_5, %c0_6] : memref<128x1568xf32, #tpu.memory_space<vmem>>, vector<128x1568xf32>
    %cst_7 = arith.constant dense<0.000000e+00> : vector<8x1568xf32>
    %7 = tpu.matmul %5, %6, %cst_7 {dimension_numbers = #tpu.dot_dimension_numbers<[1], [0], [0], [1], [0, 0, 1, 1], [], []>} : vector<8x128xf32>, vector<128x1568xf32>, vector<8x1568xf32> -> vector<8x1568xf32>
    %c0_8 = arith.constant 0 : index
    %c0_9 = arith.constant 0 : index
    %8 = vector.load %arg4[%c0_8, %c0_9] : memref<1x1568xf32, #tpu.memory_space<vmem>>, vector<1x1568xf32>
    %9 = vector.broadcast %8 : vector<1x1568xf32> to vector<8x1568xf32>
    %10 = arith.addf %7, %9 : vector<8x1568xf32>
    %cst_10 = arith.constant 0.000000e+00 : f32
    %11 = vector.broadcast %cst_10 : f32 to vector<8x1568xf32>
    %12 = arith.maximumf %10, %11 : vector<8x1568xf32>
    %c0_11 = arith.constant 0 : index
    %c0_12 = arith.constant 0 : index
    %13 = vector.load %arg5[%c0_11, %c0_12] : memref<8x1568xf32, #tpu.memory_space<vmem>>, vector<8x1568xf32>
    tpu.vector_store %arg5[%c0_11, %c0_12], %12 {strides = array<i32>} : memref<8x1568xf32, #tpu.memory_space<vmem>>, vector<8x1568xf32>,
    return
  }
}

module attributes {stable_mosaic.version = 11 : i64} {
  func.func @_fused_matmul_kernel(%arg0: i32, %arg1: memref<256x288xf32, #tpu.memory_space<vmem>>, %arg2: memref<288x128xf32, #tpu.memory_space<vmem>>, %arg3: memref<1x128xf32, #tpu.memory_space<vmem>>, %arg4: memref<256x128xf32, #tpu.memory_space<vmem>>) attributes {dimension_semantics = [#tpu.dimension_semantics<parallel>], iteration_bounds = array<i64: 2>, scalar_prefetch = 0 : i64, scratch_operands = 0 : i64, tpu.core_type = #tpu.core_type<tc>, window_params = [{transform_indices = @transform_0, window_bounds = array<i64: 256, 288>}, {pipeline_mode = #tpu.pipeline_mode<synchronous>, transform_indices = @transform_1, window_bounds = array<i64: 288, 128>}, {pipeline_mode = #tpu.pipeline_mode<synchronous>, transform_indices = @transform_2, window_bounds = array<i64: 1, 128>}, {transform_indices = @transform_3, window_bounds = array<i64: 256, 128>}]} {
    %c0 = arith.constant 0 : index
    %c0_0 = arith.constant 0 : index
    %0 = vector.load %arg1[%c0, %c0_0] : memref<256x288xf32, #tpu.memory_space<vmem>>, vector<256x288xf32>
    %c0_1 = arith.constant 0 : index
    %c0_2 = arith.constant 0 : index
    %1 = vector.load %arg2[%c0_1, %c0_2] : memref<288x128xf32, #tpu.memory_space<vmem>>, vector<288x128xf32>
    %cst = arith.constant dense<0.000000e+00> : vector<256x128xf32>
    %2 = tpu.matmul %0, %1, %cst {dimension_numbers = #tpu.dot_dimension_numbers<[1], [0], [0], [1], [0, 0, 1, 1], [], []>} : vector<256x288xf32>, vector<288x128xf32>, vector<256x128xf32> -> vector<256x128xf32>
    %c0_3 = arith.constant 0 : index
    %c0_4 = arith.constant 0 : index
    %3 = vector.load %arg3[%c0_3, %c0_4] : memref<1x128xf32, #tpu.memory_space<vmem>>, vector<1x128xf32>
    %4 = vector.broadcast %3 : vector<1x128xf32> to vector<256x128xf32>
    %5 = arith.addf %2, %4 : vector<256x128xf32>
    %cst_5 = arith.constant 0.000000e+00 : f32
    %6 = vector.broadcast %cst_5 : f32 to vector<256x128xf32>
    %7 = arith.maximumf %5, %6 : vector<256x128xf32>
    %c0_6 = arith.constant 0 : index
    %c0_7 = arith.constant 0 : index
    %8 = vector.load %arg4[%c0_6, %c0_7] : memref<256x128xf32, #tpu.memory_space<vmem>>, vector<256x128xf32>
    tpu.vector_store %arg4[%c0_6, %c0_7], %7 {strides = array<i32>} : memref<256x128xf32, #tpu.memory_space<vmem>>, vector<256x128xf32>,
    return
  }
  func.func @transform_0(%arg0: i32) -> (i32, i32) {
    %c0_i32 = arith.constant 0 : i32
    %c0_i32_0 = arith.constant 0 : i32
    return %arg0, %c0_i32 : i32, i32
  }
  func.func @transform_1(%arg0: i32) -> (i32, i32) {
    %c0_i32 = arith.constant 0 : i32
    %c0_i32_0 = arith.constant 0 : i32
    %c0_i32_1 = arith.constant 0 : i32
    return %c0_i32, %c0_i32_0 : i32, i32
  }
  func.func @transform_2(%arg0: i32) -> (i32, i32) {
    %c0_i32 = arith.constant 0 : i32
    %c0_i32_0 = arith.constant 0 : i32
    %c0_i32_1 = arith.constant 0 : i32
    return %c0_i32, %c0_i32_0 : i32, i32
  }
  func.func @transform_3(%arg0: i32) -> (i32, i32) {
    %c0_i32 = arith.constant 0 : i32
    %c0_i32_0 = arith.constant 0 : i32
    return %arg0, %c0_i32 : i32, i32
  }
}

module attributes {stable_mosaic.version = 11 : i64} {
  func.func @_fused_matmul_kernel(%arg0: i32, %arg1: memref<256x144xf32, #tpu.memory_space<vmem>>, %arg2: memref<144x128xf32, #tpu.memory_space<vmem>>, %arg3: memref<1x128xf32, #tpu.memory_space<vmem>>, %arg4: memref<256x128xf32, #tpu.memory_space<vmem>>) attributes {dimension_semantics = [#tpu.dimension_semantics<parallel>], iteration_bounds = array<i64: 7>, scalar_prefetch = 0 : i64, scratch_operands = 0 : i64, tpu.core_type = #tpu.core_type<tc>, window_params = [{transform_indices = @transform_0, window_bounds = array<i64: 256, 144>}, {pipeline_mode = #tpu.pipeline_mode<synchronous>, transform_indices = @transform_1, window_bounds = array<i64: 144, 128>}, {pipeline_mode = #tpu.pipeline_mode<synchronous>, transform_indices = @transform_2, window_bounds = array<i64: 1, 128>}, {transform_indices = @transform_3, window_bounds = array<i64: 256, 128>}]} {
    %c0 = arith.constant 0 : index
    %c0_0 = arith.constant 0 : index
    %0 = vector.load %arg1[%c0, %c0_0] : memref<256x144xf32, #tpu.memory_space<vmem>>, vector<256x144xf32>
    %c0_1 = arith.constant 0 : index
    %c0_2 = arith.constant 0 : index
    %1 = vector.load %arg2[%c0_1, %c0_2] : memref<144x128xf32, #tpu.memory_space<vmem>>, vector<144x128xf32>
    %cst = arith.constant dense<0.000000e+00> : vector<256x128xf32>
    %2 = tpu.matmul %0, %1, %cst {dimension_numbers = #tpu.dot_dimension_numbers<[1], [0], [0], [1], [0, 0, 1, 1], [], []>} : vector<256x144xf32>, vector<144x128xf32>, vector<256x128xf32> -> vector<256x128xf32>
    %c0_3 = arith.constant 0 : index
    %c0_4 = arith.constant 0 : index
    %3 = vector.load %arg3[%c0_3, %c0_4] : memref<1x128xf32, #tpu.memory_space<vmem>>, vector<1x128xf32>
    %4 = vector.broadcast %3 : vector<1x128xf32> to vector<256x128xf32>
    %5 = arith.addf %2, %4 : vector<256x128xf32>
    %6 = math.tanh %5 : vector<256x128xf32>
    %c0_5 = arith.constant 0 : index
    %c0_6 = arith.constant 0 : index
    %7 = vector.load %arg4[%c0_5, %c0_6] : memref<256x128xf32, #tpu.memory_space<vmem>>, vector<256x128xf32>
    tpu.vector_store %arg4[%c0_5, %c0_6], %6 {strides = array<i32>} : memref<256x128xf32, #tpu.memory_space<vmem>>, vector<256x128xf32>,
    return
  }
  func.func @transform_0(%arg0: i32) -> (i32, i32) {
    %c0_i32 = arith.constant 0 : i32
    %c0_i32_0 = arith.constant 0 : i32
    return %arg0, %c0_i32 : i32, i32
  }
  func.func @transform_1(%arg0: i32) -> (i32, i32) {
    %c0_i32 = arith.constant 0 : i32
    %c0_i32_0 = arith.constant 0 : i32
    %c0_i32_1 = arith.constant 0 : i32
    return %c0_i32, %c0_i32_0 : i32, i32
  }
  func.func @transform_2(%arg0: i32) -> (i32, i32) {
    %c0_i32 = arith.constant 0 : i32
    %c0_i32_0 = arith.constant 0 : i32
    %c0_i32_1 = arith.constant 0 : i32
    return %c0_i32, %c0_i32_0 : i32, i32
  }
  func.func @transform_3(%arg0: i32) -> (i32, i32) {
    %c0_i32 = arith.constant 0 : i32
    %c0_i32_0 = arith.constant 0 : i32
    return %arg0, %c0_i32 : i32, i32
  }
}

</mosaic_0001>

<llo_original>
// kernel: autoencoder_forward.5
$region0: #{autoencoder_forward.5}
  #allocation0 [shape = 'u32[]', space=smem, size = 0x4, offset = 0x4, fixed_abs, tag = 'smem constant byte address 0x4 - core index']
  #allocation1 [shape = 'u32[72,128]{1,0:T(1,128)}', space=vmem, size = 0x9000, scoped, tag = 'internal scratch']
  %s0 = inlined_call_operand.vmem [shape: f32[512,16], index: 0, kind: input, shape index: {}]
  %s1 = inlined_call_operand.vmem [shape: f32[16,128], index: 1, kind: input, shape index: {}]
  %s2 = inlined_call_operand.vmem [shape: f32[1,128], index: 2, kind: input, shape index: {}]
  %s3 = inlined_call_operand.vmem [shape: f32[512,128], index: 3, kind: output, shape index: {}]
  %s4 = sld [smem:[#allocation0]]
  $region45: #{autoencoder_forward.5} parent=0
    _
  %s6 = ssub.s32 1, %s4
  %s7 = scalar_select 0, %s6, %s4
  loop: start=0, step=1, limit=4
  $region2: #{autoencoder_forward.5} parent=0 // loop_pre_header
    _
  $region3: #{autoencoder_forward.5} parent=0 // loop_header
    %s9 = sphi 0, %s13
    %p10 = scmp.ge.s32.totalorder %s9, 4
    %s19 = sphi 0, %s21
    %s22 = sphi 0, %s19
    %s23 = sphi 0, %s22
    %s39 = sphi 0, %s23
    %s43 = sphi 0, %s43
    %s45 = sphi 0, %s43
    %s46 = sphi 0, %s45
    %s60 = sphi 0, %s46
    %s64 = sphi 0, %s64
    %s66 = sphi 0, %s64
    %s67 = sphi 0, %s66
    %s81 = sphi 0, %s67
    %s87 = sphi 0, %s89
    %s90 = sphi 0, %s87
    %s91 = sphi 0, %s90
    %s107 = sphi 0, %s91
  $region4: #{autoencoder_forward.5} parent=0 // loop_header_branch
    %12 = sbr.rel (%p10) target = $region8
  $region5: #{autoencoder_forward.5} parent=0 // loop_body
    %s14 = ssub.s32 %s9, 1
    %s15 = ssub.s32 %s9, 2
    %s16 = sadd.s32 %s9, 1
    %s17 = ssub.s32 %s9, %s16
    %p18 = scmp.eq.s32.totalorder %s17, 0
    %s20 = sadd.s32 %s19, 1
    %s21 = scalar_select %p18, %s19, %s20
    %p24 = pneg %p18
    %p25 = scmp.eq.s32.totalorder %s9, 1
    %p26 = por %p24, %p25
    %p27 = scmp.ne.s32.totalorder %s19, %s22
    %p28 = scmp.eq.s32.totalorder %s9, 0
    %p29 = por %p27, %p28
    %p30 = scmp.ne.s32.totalorder %s19, %s22
    %p31 = scmp.eq.s32.totalorder %s14, 1
    %p32 = por %p30, %p31
    %p33 = scmp.ne.s32.totalorder %s22, %s23
    %p34 = scmp.eq.s32.totalorder %s14, 0
    %p35 = por %p33, %p34
    %p36 = scmp.ne.s32.totalorder %s22, %s23
    %p37 = scmp.eq.s32.totalorder %s15, 1
    %p38 = por %p36, %p37
    %p40 = scmp.ne.s32.totalorder %s23, %s39
    %p41 = scmp.eq.s32.totalorder %s15, 0
    %p42 = por %p40, %p41
    %s44 = sadd.s32 %s43, 1
    %p47 = scmp.eq.s32.totalorder %s9, 1
    %p48 = scmp.ne.s32.totalorder %s43, %s45
    %p49 = scmp.eq.s32.totalorder %s9, 0
    %p50 = por %p48, %p49
    %p51 = scmp.ne.s32.totalorder %s43, %s45
    %p52 = scmp.eq.s32.totalorder %s14, 1
    %p53 = por %p51, %p52
    %p54 = scmp.ne.s32.totalorder %s45, %s46
    %p55 = scmp.eq.s32.totalorder %s14, 0
    %p56 = por %p54, %p55
    %p57 = scmp.ne.s32.totalorder %s45, %s46
    %p58 = scmp.eq.s32.totalorder %s15, 1
    %p59 = por %p57, %p58
    %p61 = scmp.ne.s32.totalorder %s46, %s60
    %p62 = scmp.eq.s32.totalorder %s15, 0
    %p63 = por %p61, %p62
    %s65 = sadd.s32 %s64, 1
    %p68 = scmp.eq.s32.totalorder %s9, 1
    %p69 = scmp.ne.s32.totalorder %s64, %s66
    %p70 = scmp.eq.s32.totalorder %s9, 0
    %p71 = por %p69, %p70
    %p72 = scmp.ne.s32.totalorder %s64, %s66
    %p73 = scmp.eq.s32.totalorder %s14, 1
    %p74 = por %p72, %p73
    %p75 = scmp.ne.s32.totalorder %s66, %s67
    %p76 = scmp.eq.s32.totalorder %s14, 0
    %p77 = por %p75, %p76
    %p78 = scmp.ne.s32.totalorder %s66, %s67
    %p79 = scmp.eq.s32.totalorder %s15, 1
    %p80 = por %p78, %p79
    %p82 = scmp.ne.s32.totalorder %s67, %s81
    %p83 = scmp.eq.s32.totalorder %s15, 0
    %p84 = por %p82, %p83
    %s85 = ssub.s32 %s9, %s16
    %p86 = scmp.eq.s32.totalorder %s85, 0
    %s88 = sadd.s32 %s87, 1
    %s89 = scalar_select %p86, %s87, %s88
    %p92 = pneg %p86
    %p93 = scmp.eq.s32.totalorder %s9, 1
    %p94 = por %p92, %p93
    %p95 = scmp.ne.s32.totalorder %s87, %s90
    %p96 = scmp.eq.s32.totalorder %s9, 0
    %p97 = por %p95, %p96
    %p98 = scmp.ne.s32.totalorder %s87, %s90
    %p99 = scmp.eq.s32.totalorder %s14, 1
    %p100 = por %p98, %p99
    %p101 = scmp.ne.s32.totalorder %s90, %s91
    %p102 = scmp.eq.s32.totalorder %s14, 0
    %p103 = por %p101, %p102
    %p104 = scmp.ne.s32.totalorder %s90, %s91
    %p105 = scmp.eq.s32.totalorder %s15, 1
    %p106 = por %p104, %p105
    %p108 = scmp.ne.s32.totalorder %s91, %s107
    %p109 = scmp.eq.s32.totalorder %s15, 0
    %p110 = por %p108, %p109
    %p111 = scmp.le.s32.totalorder 1, %s9
    %p112 = scmp.lt.s32.totalorder %s9, 3
    %p113 = pnand %p111, %p112
    %p114 = pneg %p113
    // Predicated region
    $region9: #{autoencoder_forward.5} parent=5 // pred_check
      _
    $region10: #{autoencoder_forward.5} parent=5 // pred_check_branch
      %116 = sbr.rel (%p113) target = $region12
    $region11: #{autoencoder_forward.5} parent=5 // pred_region
      %s117 = ssub.s32 %s9, 1
      // Predicated region
      $region13: #{autoencoder_forward.5} parent=11 // pred_check
        %p118 = pneg %p56
      $region14: #{autoencoder_forward.5} parent=11 // pred_check_branch
        %120 = sbr.rel (%p118) target = $region16
      $region15: #{autoencoder_forward.5} parent=11 // pred_region
        _
      $region16: #{autoencoder_forward.5} parent=11 // pred_fallthru
        _
      // Predicated region
      $region17: #{autoencoder_forward.5} parent=11 // pred_check
        %p121 = pneg %p77
      $region18: #{autoencoder_forward.5} parent=11 // pred_check_branch
        %123 = sbr.rel (%p121) target = $region20
      $region19: #{autoencoder_forward.5} parent=11 // pred_region
        _
      $region20: #{autoencoder_forward.5} parent=11 // pred_fallthru
        _
    $region12: #{autoencoder_forward.5} parent=5 // pred_fallthru
      _
    %p124 = scmp.lt.s32.totalorder %s9, 2
    // Predicated region
    $region21: #{autoencoder_forward.5} parent=5 // pred_check
      %p125 = pneg %p124
    $region22: #{autoencoder_forward.5} parent=5 // pred_check_branch
      %127 = sbr.rel (%p125) target = $region24
    $region23: #{autoencoder_forward.5} parent=5 // pred_region
      // Predicated region
      $region25: #{autoencoder_forward.5} parent=23 // pred_check
        %p128 = pneg %p29
      $region26: #{autoencoder_forward.5} parent=23 // pred_check_branch
        %130 = sbr.rel (%p128) target = $region28
      $region27: #{autoencoder_forward.5} parent=23 // pred_region
        %s131 = smul.u32 32, %s9
        %p132 = scmp.lt.s32.totalorder %s131, 63
        %s133 = scalar_select %p132, %s131, 63
        %s134 = smul.addr %s133, 8
        %s135 = scalar_lea.vmem %s0, %s134
        %s136 = smul.u32 32, %s9
      $region28: #{autoencoder_forward.5} parent=23 // pred_fallthru
        _
    $region24: #{autoencoder_forward.5} parent=5 // pred_fallthru
      _
    %p137 = scmp.le.s32.totalorder 1, %s9
    %p138 = scmp.lt.s32.totalorder %s9, 3
    %p139 = pnand %p137, %p138
    %p140 = pneg %p139
    // Predicated region
    $region29: #{autoencoder_forward.5} parent=5 // pred_check
      _
    $region30: #{autoencoder_forward.5} parent=5 // pred_check_branch
      %142 = sbr.rel (%p139) target = $region32
    $region31: #{autoencoder_forward.5} parent=5 // pred_region
      %s143 = ssub.s32 %s9, 1
      %s144 = smul.u32 32, %s14
      %p145 = scmp.lt.s32.totalorder %s144, 63
      %s146 = scalar_select %p145, %s144, 63
      %s147 = smul.addr %s146, 8
      %s148 = scalar_lea.vmem %s0, %s147
      %p149 = pneg %p35
      %p150 = pneg %p32
      %p151 = pneg %p56
      %p152 = pneg %p53
      %p153 = pneg %p77
      %p154 = pneg %p74
      %p155 = pneg %p103
      %p156 = pneg %p100
      %s157 = smul.u32 32, %s14
      %p158 = scmp.lt.s32.totalorder %s157, 63
      %s159 = scalar_select %p158, %s157, 63
      %s160 = smul.addr %s159, 8
      %s161 = scalar_lea.vmem %s3, %s160
      %s162 = smul.u32 32, %s14
      %p163 = scmp.lt.s32.totalorder %s162, 63
      %s164 = scalar_select %p163, %s162, 63
      %s165 = smul.addr %s164, 8
      %s166 = scalar_lea.vmem %s0, %s165
      %s167 = smul.u32 32, %s14
      %s168 = smul.u32 32, %s14
      %p169 = scmp.lt.s32.totalorder %s168, 63
      %s170 = scalar_select %p169, %s168, 63
      %s171 = smul.addr %s170, 8
      %s172 = scalar_lea.vmem %s3, %s171
      %s173 = smul.u32 32, %s14
      %v174 = vld [vmem:[%s166] sm:$0xff]
      %v175 = vld [vmem:[%s166 + $0x8] sm:$0xff]
      %v176 = vld [vmem:[%s166 + $0x10] sm:$0xff]
      %v177 = vld [vmem:[%s166 + $0x18] sm:$0xff]
      %v178 = vld [vmem:[%s166 + $0x20] sm:$0xff]
      %v179 = vld [vmem:[%s166 + $0x28] sm:$0xff]
      %v180 = vld [vmem:[%s166 + $0x30] sm:$0xff]
      %v181 = vld [vmem:[%s166 + $0x38] sm:$0xff]
      %v182 = vld [vmem:[%s166 + $0x40] sm:$0xff]
      %v183 = vld [vmem:[%s166 + $0x48] sm:$0xff]
      %v184 = vld [vmem:[%s166 + $0x50] sm:$0xff]
      %v185 = vld [vmem:[%s166 + $0x58] sm:$0xff]
      %v186 = vld [vmem:[%s166 + $0x60] sm:$0xff]
      %v187 = vld [vmem:[%s166 + $0x68] sm:$0xff]
      %v188 = vld [vmem:[%s166 + $0x70] sm:$0xff]
      %v189 = vld [vmem:[%s166 + $0x78] sm:$0xff]
      %v190 = vld [vmem:[%s166 + $0x80] sm:$0xff]
      %v191 = vld [vmem:[%s166 + $0x88] sm:$0xff]
      %v192 = vld [vmem:[%s166 + $0x90] sm:$0xff]
      %v193 = vld [vmem:[%s166 + $0x98] sm:$0xff]
      %v194 = vld [vmem:[%s166 + $0xa0] sm:$0xff]
      %v195 = vld [vmem:[%s166 + $0xa8] sm:$0xff]
      %v196 = vld [vmem:[%s166 + $0xb0] sm:$0xff]
      %v197 = vld [vmem:[%s166 + $0xb8] sm:$0xff]
      %v198 = vld [vmem:[%s166 + $0xc0] sm:$0xff]
      %v199 = vld [vmem:[%s166 + $0xc8] sm:$0xff]
      %v200 = vld [vmem:[%s166 + $0xd0] sm:$0xff]
      %v201 = vld [vmem:[%s166 + $0xd8] sm:$0xff]
      %v202 = vld [vmem:[%s166 + $0xe0] sm:$0xff]
      %v203 = vld [vmem:[%s166 + $0xe8] sm:$0xff]
      %v204 = vld [vmem:[%s166 + $0xf0] sm:$0xff]
      %v205 = vld [vmem:[%s166 + $0xf8] sm:$0xff]
      %v206 = vld [vmem:[%s1] sm:$0xff]
      %v207 = vld [vmem:[%s1 + $0x8] sm:$0xff]
      %v208 = vld [vmem:[%s2] sm:$0x1]
      %v210 = vperm.slane %v208, 0
      %vm212 = vcmask 130048
      %v214 = vsel %vm212, %v174, 0
      %v217 = vsel %vm212, %v175, 0
      %v220 = vsel %vm212, %v176, 0
      %v223 = vsel %vm212, %v177, 0
      %v226 = vsel %vm212, %v178, 0
      %v229 = vsel %vm212, %v179, 0
      %v232 = vsel %vm212, %v180, 0
      %v235 = vsel %vm212, %v181, 0
      %v238 = vsel %vm212, %v182, 0
      %v241 = vsel %vm212, %v183, 0
      %v244 = vsel %vm212, %v184, 0
      %v247 = vsel %vm212, %v185, 0
      %v250 = vsel %vm212, %v186, 0
      %v253 = vsel %vm212, %v187, 0
      %v256 = vsel %vm212, %v188, 0
      %v259 = vsel %vm212, %v189, 0
      %v262 = vsel %vm212, %v190, 0
      %v265 = vsel %vm212, %v191, 0
      %v268 = vsel %vm212, %v192, 0
      %v271 = vsel %vm212, %v193, 0
      %v274 = vsel %vm212, %v194, 0
      %v277 = vsel %vm212, %v195, 0
      %v280 = vsel %vm212, %v196, 0
      %v283 = vsel %vm212, %v197, 0
      %v286 = vsel %vm212, %v198, 0
      %v289 = vsel %vm212, %v199, 0
      %v292 = vsel %vm212, %v200, 0
      %v295 = vsel %vm212, %v201, 0
      %v298 = vsel %vm212, %v202, 0
      %v301 = vsel %vm212, %v203, 0
      %v304 = vsel %vm212, %v204, 0
      %v307 = vsel %vm212, %v205, 0
      %309 = vmatpush.msra.mxu0 0.0
      %310 = vmatpush.msra.mxu0 0.0
      %311 = vmatpush.msra.mxu0 0.0
      %312 = vmatpush.msra.mxu0 0.0
      %313 = vmatpush.msra.mxu0 0.0
      %314 = vmatpush.msra.mxu0 0.0
      %315 = vmatpush.msra.mxu0 0.0
      %316 = vmatpush.msra.mxu0 0.0
      %317 = vmatpush.msra.mxu0 0.0
      %318 = vmatpush.msra.mxu0 0.0
      %319 = vmatpush.msra.mxu0 0.0
      %320 = vmatpush.msra.mxu0 0.0
      %321 = vmatpush.msra.mxu0 0.0
      %322 = vmatpush.msra.mxu0 0.0
      %323 = vmatpush.msra.mxu0 %v207
      %324 = vmatpush.msra.mxu0 %v206
      %325 = vmatmul.f32.gmra.mxu0 %v214
      %v326 = vpop.f32.mrf.mxu0
      %v327 = vadd.f32 %v210, %v326
      %328 = vmatmul.f32.gmra.mxu0 %v217
      %v329 = vpop.f32.mrf.mxu0
      %v330 = vadd.f32 %v210, %v329
      %331 = vmatmul.f32.gmra.mxu0 %v220
      %v332 = vpop.f32.mrf.mxu0
      %v333 = vadd.f32 %v210, %v332
      %334 = vmatmul.f32.gmra.mxu0 %v223
      %v335 = vpop.f32.mrf.mxu0
      %v336 = vadd.f32 %v210, %v335
      %337 = vmatmul.f32.gmra.mxu0 %v226
      %v338 = vpop.f32.mrf.mxu0
      %v339 = vadd.f32 %v210, %v338
      %340 = vmatmul.f32.gmra.mxu0 %v229
      %v341 = vpop.f32.mrf.mxu0
      %v342 = vadd.f32 %v210, %v341
      %343 = vmatmul.f32.gmra.mxu0 %v232
      %v344 = vpop.f32.mrf.mxu0
      %v345 = vadd.f32 %v210, %v344
      %346 = vmatmul.f32.gmra.mxu0 %v235
      %v347 = vpop.f32.mrf.mxu0
      %v348 = vadd.f32 %v210, %v347
      %349 = vmatmul.f32.gmra.mxu0 %v238
      %v350 = vpop.f32.mrf.mxu0
      %v351 = vadd.f32 %v210, %v350
      %352 = vmatmul.f32.gmra.mxu0 %v241
      %v353 = vpop.f32.mrf.mxu0
      %v354 = vadd.f32 %v210, %v353
      %355 = vmatmul.f32.gmra.mxu0 %v244
      %v356 = vpop.f32.mrf.mxu0
      %v357 = vadd.f32 %v210, %v356
      %358 = vmatmul.f32.gmra.mxu0 %v247
      %v359 = vpop.f32.mrf.mxu0
      %v360 = vadd.f32 %v210, %v359
      %361 = vmatmul.f32.gmra.mxu0 %v250
      %v362 = vpop.f32.mrf.mxu0
      %v363 = vadd.f32 %v210, %v362
      %364 = vmatmul.f32.gmra.mxu0 %v253
      %v365 = vpop.f32.mrf.mxu0
      %v366 = vadd.f32 %v210, %v365
      %367 = vmatmul.f32.gmra.mxu0 %v256
      %v368 = vpop.f32.mrf.mxu0
      %v369 = vadd.f32 %v210, %v368
      %370 = vmatmul.f32.gmra.mxu0 %v259
      %v371 = vpop.f32.mrf.mxu0
      %v372 = vadd.f32 %v210, %v371
      %373 = vmatmul.f32.gmra.mxu0 %v262
      %v374 = vpop.f32.mrf.mxu0
      %v375 = vadd.f32 %v210, %v374
      %376 = vmatmul.f32.gmra.mxu0 %v265
      %v377 = vpop.f32.mrf.mxu0
      %v378 = vadd.f32 %v210, %v377
      %379 = vmatmul.f32.gmra.mxu0 %v268
      %v380 = vpop.f32.mrf.mxu0
      %v381 = vadd.f32 %v210, %v380
      %382 = vmatmul.f32.gmra.mxu0 %v271
      %v383 = vpop.f32.mrf.mxu0
      %v384 = vadd.f32 %v210, %v383
      %385 = vmatmul.f32.gmra.mxu0 %v274
      %v386 = vpop.f32.mrf.mxu0
      %v387 = vadd.f32 %v210, %v386
      %388 = vmatmul.f32.gmra.mxu0 %v277
      %v389 = vpop.f32.mrf.mxu0
      %v390 = vadd.f32 %v210, %v389
      %391 = vmatmul.f32.gmra.mxu0 %v280
      %v392 = vpop.f32.mrf.mxu0
      %v393 = vadd.f32 %v210, %v392
      %394 = vmatmul.f32.gmra.mxu0 %v283
      %v395 = vpop.f32.mrf.mxu0
      %v396 = vadd.f32 %v210, %v395
      %397 = vmatmul.f32.gmra.mxu0 %v286
      %v398 = vpop.f32.mrf.mxu0
      %v399 = vadd.f32 %v210, %v398
      %400 = vmatmul.f32.gmra.mxu0 %v289
      %v401 = vpop.f32.mrf.mxu0
      %v402 = vadd.f32 %v210, %v401
      %403 = vmatmul.f32.gmra.mxu0 %v292
      %v404 = vpop.f32.mrf.mxu0
      %v405 = vadd.f32 %v210, %v404
      %406 = vmatmul.f32.gmra.mxu0 %v295
      %v407 = vpop.f32.mrf.mxu0
      %v408 = vadd.f32 %v210, %v407
      %409 = vmatmul.f32.gmra.mxu0 %v298
      %v410 = vpop.f32.mrf.mxu0
      %v411 = vadd.f32 %v210, %v410
      %412 = vmatmul.f32.gmra.mxu0 %v301
      %v413 = vpop.f32.mrf.mxu0
      %v414 = vadd.f32 %v210, %v413
      %415 = vmatmul.f32.gmra.mxu0 %v304
      %v416 = vpop.f32.mrf.mxu0
      %v417 = vadd.f32 %v210, %v416
      %418 = vmatmul.f32.gmra.mxu0 %v307
      %v419 = vpop.f32.mrf.mxu0
      %v420 = vadd.f32 %v210, %v419
      %421 = vdwg.mxu0
      %v422 = vmax.f32 %v327, 0.0
      %v423 = vmax.f32 %v330, 0.0
      %v424 = vmax.f32 %v333, 0.0
      %v425 = vmax.f32 %v336, 0.0
      %v426 = vmax.f32 %v339, 0.0
      %v427 = vmax.f32 %v342, 0.0
      %v428 = vmax.f32 %v345, 0.0
      %v429 = vmax.f32 %v348, 0.0
      %v430 = vmax.f32 %v351, 0.0
      %v431 = vmax.f32 %v354, 0.0
      %v432 = vmax.f32 %v357, 0.0
      %v433 = vmax.f32 %v360, 0.0
      %v434 = vmax.f32 %v363, 0.0
      %v435 = vmax.f32 %v366, 0.0
      %v436 = vmax.f32 %v369, 0.0
      %v437 = vmax.f32 %v372, 0.0
      %v438 = vmax.f32 %v375, 0.0
      %v439 = vmax.f32 %v378, 0.0
      %v440 = vmax.f32 %v381, 0.0
      %v441 = vmax.f32 %v384, 0.0
      %v442 = vmax.f32 %v387, 0.0
      %v443 = vmax.f32 %v390, 0.0
      %v444 = vmax.f32 %v393, 0.0
      %v445 = vmax.f32 %v396, 0.0
      %v446 = vmax.f32 %v399, 0.0
      %v447 = vmax.f32 %v402, 0.0
      %v448 = vmax.f32 %v405, 0.0
      %v449 = vmax.f32 %v408, 0.0
      %v450 = vmax.f32 %v411, 0.0
      %v451 = vmax.f32 %v414, 0.0
      %v452 = vmax.f32 %v417, 0.0
      %v453 = vmax.f32 %v420, 0.0
      %454 = vst [vmem:[%s172] sm:$0xff] %v422
      %455 = vst [vmem:[%s172 + $0x8] sm:$0xff] %v423
      %456 = vst [vmem:[%s172 + $0x10] sm:$0xff] %v424
      %457 = vst [vmem:[%s172 + $0x18] sm:$0xff] %v425
      %458 = vst [vmem:[%s172 + $0x20] sm:$0xff] %v426
      %459 = vst [vmem:[%s172 + $0x28] sm:$0xff] %v427
      %460 = vst [vmem:[%s172 + $0x30] sm:$0xff] %v428
      %461 = vst [vmem:[%s172 + $0x38] sm:$0xff] %v429
      %462 = vst [vmem:[%s172 + $0x40] sm:$0xff] %v430
      %463 = vst [vmem:[%s172 + $0x48] sm:$0xff] %v431
      %464 = vst [vmem:[%s172 + $0x50] sm:$0xff] %v432
      %465 = vst [vmem:[%s172 + $0x58] sm:$0xff] %v433
      %466 = vst [vmem:[%s172 + $0x60] sm:$0xff] %v434
      %467 = vst [vmem:[%s172 + $0x68] sm:$0xff] %v435
      %468 = vst [vmem:[%s172 + $0x70] sm:$0xff] %v436
      %469 = vst [vmem:[%s172 + $0x78] sm:$0xff] %v437
      %470 = vst [vmem:[%s172 + $0x80] sm:$0xff] %v438
      %471 = vst [vmem:[%s172 + $0x88] sm:$0xff] %v439
      %472 = vst [vmem:[%s172 + $0x90] sm:$0xff] %v440
      %473 = vst [vmem:[%s172 + $0x98] sm:$0xff] %v441
      %474 = vst [vmem:[%s172 + $0xa0] sm:$0xff] %v442
      %475 = vst [vmem:[%s172 + $0xa8] sm:$0xff] %v443
      %476 = vst [vmem:[%s172 + $0xb0] sm:$0xff] %v444
      %477 = vst [vmem:[%s172 + $0xb8] sm:$0xff] %v445
      %478 = vst [vmem:[%s172 + $0xc0] sm:$0xff] %v446
      %479 = vst [vmem:[%s172 + $0xc8] sm:$0xff] %v447
      %480 = vst [vmem:[%s172 + $0xd0] sm:$0xff] %v448
      %481 = vst [vmem:[%s172 + $0xd8] sm:$0xff] %v449
      %482 = vst [vmem:[%s172 + $0xe0] sm:$0xff] %v450
      %483 = vst [vmem:[%s172 + $0xe8] sm:$0xff] %v451
      %484 = vst [vmem:[%s172 + $0xf0] sm:$0xff] %v452
      %485 = vst [vmem:[%s172 + $0xf8] sm:$0xff] %v453
      %s486 = smul.u32 32, %s14
      %p487 = scmp.lt.s32.totalorder %s486, 63
      %s488 = scalar_select %p487, %s486, 63
      %s489 = smul.addr %s488, 8
      %s490 = scalar_lea.vmem %s3, %s489
      // Predicated region
      $region33: #{autoencoder_forward.5} parent=31 // pred_check
        %p491 = pneg %p100
      $region34: #{autoencoder_forward.5} parent=31 // pred_check_branch
        %493 = sbr.rel (%p491) target = $region36
      $region35: #{autoencoder_forward.5} parent=31 // pred_region
        %s494 = smul.u32 32, %s14
      $region36: #{autoencoder_forward.5} parent=31 // pred_fallthru
        _
    $region32: #{autoencoder_forward.5} parent=5 // pred_fallthru
      _
    %p495 = scmp.le.s32.totalorder 2, %s9
    // Predicated region
    $region37: #{autoencoder_forward.5} parent=5 // pred_check
      %p496 = pneg %p495
    $region38: #{autoencoder_forward.5} parent=5 // pred_check_branch
      %498 = sbr.rel (%p496) target = $region40
    $region39: #{autoencoder_forward.5} parent=5 // pred_region
      %s499 = ssub.s32 %s9, 2
      // Predicated region
      $region41: #{autoencoder_forward.5} parent=39 // pred_check
        %p500 = pneg %p106
      $region42: #{autoencoder_forward.5} parent=39 // pred_check_branch
        %502 = sbr.rel (%p500) target = $region44
      $region43: #{autoencoder_forward.5} parent=39 // pred_region
        %s503 = smul.u32 32, %s15
        %p504 = scmp.lt.s32.totalorder %s503, 63
        %s505 = scalar_select %p504, %s503, 63
        %s506 = smul.addr %s505, 8
        %s507 = scalar_lea.vmem %s3, %s506
      $region44: #{autoencoder_forward.5} parent=39 // pred_fallthru
        _
    $region40: #{autoencoder_forward.5} parent=5 // pred_fallthru
      _
  $region6: #{autoencoder_forward.5} parent=0 // loop_footer
    %s13 = sadd.s32 1, %s9
  $region7: #{autoencoder_forward.5} parent=0 // loop_footer_branch
    %8 = sbr.rel target = $region3
  $region8: #{autoencoder_forward.5} parent=0 // loop_exit
    _

// kernel: autoencoder_forward.6
$region0: #{autoencoder_forward.6}
  #allocation0 [shape = 'u32[]', space=smem, size = 0x4, offset = 0x4, fixed_abs, tag = 'smem constant byte address 0x4 - core index']
  #allocation1 [shape = 'u32[72,128]{1,0:T(1,128)}', space=vmem, size = 0x9000, scoped, tag = 'internal scratch']
  %s0 = inlined_call_operand.vmem [shape: f32[104,144], index: 0, kind: input, shape index: {}]
  %s1 = inlined_call_operand.vmem [shape: f32[144,128], index: 1, kind: input, shape index: {}]
  %s2 = inlined_call_operand.vmem [shape: f32[1,128], index: 2, kind: input, shape index: {}]
  %s3 = inlined_call_operand.vmem [shape: f32[104,128], index: 3, kind: output, shape index: {}]
  %s4 = sld [smem:[#allocation0]]
  $region22: #{autoencoder_forward.6} parent=0
    _
  %s6 = ssub.s32 1, %s4
  %s7 = scalar_select 0, %s6, %s4
  // Predicated region
  $region2: #{autoencoder_forward.6} parent=0 // pred_check
    _
  $region3: #{autoencoder_forward.6} parent=0 // pred_check_branch
    %9 = sbr.rel (0) target = $region5
  $region4: #{autoencoder_forward.6} parent=0 // pred_region
    _
  $region5: #{autoencoder_forward.6} parent=0 // pred_fallthru
    _
  // Predicated region
  $region6: #{autoencoder_forward.6} parent=0 // pred_check
    _
  $region7: #{autoencoder_forward.6} parent=0 // pred_check_branch
    %11 = sbr.rel (0) target = $region9
  $region8: #{autoencoder_forward.6} parent=0 // pred_region
    _
  $region9: #{autoencoder_forward.6} parent=0 // pred_fallthru
    _
  // Predicated region
  $region10: #{autoencoder_forward.6} parent=0 // pred_check
    _
  $region11: #{autoencoder_forward.6} parent=0 // pred_check_branch
    %13 = sbr.rel (0) target = $region13
  $region12: #{autoencoder_forward.6} parent=0 // pred_region
    _
  $region13: #{autoencoder_forward.6} parent=0 // pred_fallthru
    _
  %v14 = vld [vmem:[%s0] sm:$0xff]
  %v15 = vld [vmem:[%s0 + $0x8] sm:$0xff]
  %v16 = vld [vmem:[%s0 + $0x10] sm:$0xff]
  %v17 = vld [vmem:[%s0 + $0x18] sm:$0xff]
  %v18 = vld [vmem:[%s0 + $0x20] sm:$0xff]
  %v19 = vld [vmem:[%s0 + $0x28] sm:$0xff]
  %v20 = vld [vmem:[%s0 + $0x30] sm:$0xff]
  %v21 = vld [vmem:[%s0 + $0x38] sm:$0xff]
  %v22 = vld [vmem:[%s0 + $0x40] sm:$0xff]
  %v23 = vld [vmem:[%s0 + $0x48] sm:$0xff]
  %v24 = vld [vmem:[%s0 + $0x50] sm:$0xff]
  %v25 = vld [vmem:[%s0 + $0x58] sm:$0xff]
  %v26 = vld [vmem:[%s0 + $0x60] sm:$0xff]
  %v27 = vld [vmem:[%s0 + $0x68] sm:$0xff]
  %v28 = vld [vmem:[%s0 + $0x70] sm:$0xff]
  %v29 = vld [vmem:[%s0 + $0x78] sm:$0xff]
  %v30 = vld [vmem:[%s0 + $0x80] sm:$0xff]
  %v31 = vld [vmem:[%s0 + $0x88] sm:$0xff]
  %v32 = vld [vmem:[%s0 + $0x90] sm:$0xff]
  %v33 = vld [vmem:[%s0 + $0x98] sm:$0xff]
  %v34 = vld [vmem:[%s0 + $0xa0] sm:$0xff]
  %v35 = vld [vmem:[%s0 + $0xa8] sm:$0xff]
  %v36 = vld [vmem:[%s0 + $0xb0] sm:$0xff]
  %v37 = vld [vmem:[%s0 + $0xb8] sm:$0xff]
  %v38 = vld [vmem:[%s0 + $0xc0] sm:$0xff]
  %v39 = vld [vmem:[%s0 + $0xc8] sm:$0xff]
  %v40 = vld [vmem:[%s1] sm:$0xff]
  %v41 = vld [vmem:[%s1 + $0x8] sm:$0xff]
  %v42 = vld [vmem:[%s1 + $0x10] sm:$0xff]
  %v43 = vld [vmem:[%s1 + $0x18] sm:$0xff]
  %v44 = vld [vmem:[%s1 + $0x20] sm:$0xff]
  %v45 = vld [vmem:[%s1 + $0x28] sm:$0xff]
  %v46 = vld [vmem:[%s1 + $0x30] sm:$0xff]
  %v47 = vld [vmem:[%s1 + $0x38] sm:$0xff]
  %v48 = vld [vmem:[%s1 + $0x40] sm:$0xff]
  %v49 = vld [vmem:[%s1 + $0x48] sm:$0xff]
  %v50 = vld [vmem:[%s1 + $0x50] sm:$0xff]
  %v51 = vld [vmem:[%s1 + $0x58] sm:$0xff]
  %v52 = vld [vmem:[%s1 + $0x60] sm:$0xff]
  %v53 = vld [vmem:[%s1 + $0x68] sm:$0xff]
  %v54 = vld [vmem:[%s1 + $0x70] sm:$0xff]
  %v55 = vld [vmem:[%s1 + $0x78] sm:$0xff]
  %v56 = vld [vmem:[%s1 + $0x80] sm:$0xff]
  %v57 = vld [vmem:[%s1 + $0x88] sm:$0xff]
  %v58 = vld [vmem:[%s2] sm:$0x1]
  %v60 = vperm.slane %v58, 0
  %vm62 = vcmask 130048
  %v64 = vsel %vm62, %v15, 0
  %v67 = vsel %vm62, %v17, 0
  %v70 = vsel %vm62, %v19, 0
  %v73 = vsel %vm62, %v21, 0
  %v76 = vsel %vm62, %v23, 0
  %v79 = vsel %vm62, %v25, 0
  %v82 = vsel %vm62, %v27, 0
  %v85 = vsel %vm62, %v29, 0
  %v88 = vsel %vm62, %v31, 0
  %v91 = vsel %vm62, %v33, 0
  %v94 = vsel %vm62, %v35, 0
  %v97 = vsel %vm62, %v37, 0
  %v100 = vsel %vm62, %v39, 0
  %102 = vmatpush.msra.mxu0 %v55
  %103 = vmatpush.msra.mxu0 %v54
  %104 = vmatpush.msra.mxu0 %v53
  %105 = vmatpush.msra.mxu0 %v52
  %106 = vmatpush.msra.mxu0 %v51
  %107 = vmatpush.msra.mxu0 %v50
  %108 = vmatpush.msra.mxu0 %v49
  %109 = vmatpush.msra.mxu0 %v48
  %110 = vmatpush.msra.mxu0 %v47
  %111 = vmatpush.msra.mxu0 %v46
  %112 = vmatpush.msra.mxu0 %v45
  %113 = vmatpush.msra.mxu0 %v44
  %114 = vmatpush.msra.mxu0 %v43
  %115 = vmatpush.msra.mxu0 %v42
  %116 = vmatpush.msra.mxu0 %v41
  %117 = vmatpush.msra.mxu0 %v40
  %118 = vmatmul.f32.gmra.mxu0 %v14
  %v119 = vpop.f32.mrf.mxu0
  %v120 = vadd.f32 %v60, %v119
  %121 = vmatmul.f32.gmra.mxu0 %v16
  %v122 = vpop.f32.mrf.mxu0
  %v123 = vadd.f32 %v60, %v122
  %124 = vmatmul.f32.gmra.mxu0 %v18
  %v125 = vpop.f32.mrf.mxu0
  %v126 = vadd.f32 %v60, %v125
  %127 = vmatmul.f32.gmra.mxu0 %v20
  %v128 = vpop.f32.mrf.mxu0
  %v129 = vadd.f32 %v60, %v128
  %130 = vmatmul.f32.gmra.mxu0 %v22
  %v131 = vpop.f32.mrf.mxu0
  %v132 = vadd.f32 %v60, %v131
  %133 = vmatmul.f32.gmra.mxu0 %v24
  %v134 = vpop.f32.mrf.mxu0
  %v135 = vadd.f32 %v60, %v134
  %136 = vmatmul.f32.gmra.mxu0 %v26
  %v137 = vpop.f32.mrf.mxu0
  %v138 = vadd.f32 %v60, %v137
  %139 = vmatmul.f32.gmra.mxu0 %v28
  %v140 = vpop.f32.mrf.mxu0
  %v141 = vadd.f32 %v60, %v140
  %142 = vmatmul.f32.gmra.mxu0 %v30
  %v143 = vpop.f32.mrf.mxu0
  %v144 = vadd.f32 %v60, %v143
  %145 = vmatmul.f32.gmra.mxu0 %v32
  %v146 = vpop.f32.mrf.mxu0
  %v147 = vadd.f32 %v60, %v146
  %148 = vmatmul.f32.gmra.mxu0 %v34
  %v149 = vpop.f32.mrf.mxu0
  %v150 = vadd.f32 %v60, %v149
  %151 = vmatmul.f32.gmra.mxu0 %v36
  %v152 = vpop.f32.mrf.mxu0
  %v153 = vadd.f32 %v60, %v152
  %154 = vmatmul.f32.gmra.mxu0 %v38
  %v155 = vpop.f32.mrf.mxu0
  %v156 = vadd.f32 %v60, %v155
  %157 = vdwg.mxu0
  %158 = vmatpush.msra.mxu0 0.0
  %159 = vmatpush.msra.mxu0 0.0
  %160 = vmatpush.msra.mxu0 0.0
  %161 = vmatpush.msra.mxu0 0.0
  %162 = vmatpush.msra.mxu0 0.0
  %163 = vmatpush.msra.mxu0 0.0
  %164 = vmatpush.msra.mxu0 0.0
  %165 = vmatpush.msra.mxu0 0.0
  %166 = vmatpush.msra.mxu0 0.0
  %167 = vmatpush.msra.mxu0 0.0
  %168 = vmatpush.msra.mxu0 0.0
  %169 = vmatpush.msra.mxu0 0.0
  %170 = vmatpush.msra.mxu0 0.0
  %171 = vmatpush.msra.mxu0 0.0
  %172 = vmatpush.msra.mxu0 %v57
  %173 = vmatpush.msra.mxu0 %v56
  %174 = vmatmul.f32.gmra.mxu0 %v64
  %v175 = vpop.f32.mrf.mxu0
  %v176 = vadd.f32 %v120, %v175
  %177 = vmatmul.f32.gmra.mxu0 %v67
  %v178 = vpop.f32.mrf.mxu0
  %v179 = vadd.f32 %v123, %v178
  %180 = vmatmul.f32.gmra.mxu0 %v70
  %v181 = vpop.f32.mrf.mxu0
  %v182 = vadd.f32 %v126, %v181
  %183 = vmatmul.f32.gmra.mxu0 %v73
  %v184 = vpop.f32.mrf.mxu0
  %v185 = vadd.f32 %v129, %v184
  %186 = vmatmul.f32.gmra.mxu0 %v76
  %v187 = vpop.f32.mrf.mxu0
  %v188 = vadd.f32 %v132, %v187
  %189 = vmatmul.f32.gmra.mxu0 %v79
  %v190 = vpop.f32.mrf.mxu0
  %v191 = vadd.f32 %v135, %v190
  %192 = vmatmul.f32.gmra.mxu0 %v82
  %v193 = vpop.f32.mrf.mxu0
  %v194 = vadd.f32 %v138, %v193
  %195 = vmatmul.f32.gmra.mxu0 %v85
  %v196 = vpop.f32.mrf.mxu0
  %v197 = vadd.f32 %v141, %v196
  %198 = vmatmul.f32.gmra.mxu0 %v88
  %v199 = vpop.f32.mrf.mxu0
  %v200 = vadd.f32 %v144, %v199
  %201 = vmatmul.f32.gmra.mxu0 %v91
  %v202 = vpop.f32.mrf.mxu0
  %v203 = vadd.f32 %v147, %v202
  %204 = vmatmul.f32.gmra.mxu0 %v94
  %v205 = vpop.f32.mrf.mxu0
  %v206 = vadd.f32 %v150, %v205
  %207 = vmatmul.f32.gmra.mxu0 %v97
  %v208 = vpop.f32.mrf.mxu0
  %v209 = vadd.f32 %v153, %v208
  %210 = vmatmul.f32.gmra.mxu0 %v100
  %v211 = vpop.f32.mrf.mxu0
  %v212 = vadd.f32 %v156, %v211
  %213 = vdwg.mxu0
  %v214 = vmax.f32 %v176, 0.0
  %v215 = vmax.f32 %v179, 0.0
  %v216 = vmax.f32 %v182, 0.0
  %v217 = vmax.f32 %v185, 0.0
  %v218 = vmax.f32 %v188, 0.0
  %v219 = vmax.f32 %v191, 0.0
  %v220 = vmax.f32 %v194, 0.0
  %v221 = vmax.f32 %v197, 0.0
  %v222 = vmax.f32 %v200, 0.0
  %v223 = vmax.f32 %v203, 0.0
  %v224 = vmax.f32 %v206, 0.0
  %v225 = vmax.f32 %v209, 0.0
  %v226 = vmax.f32 %v212, 0.0
  %227 = vst [vmem:[%s3] sm:$0xff] %v214
  %228 = vst [vmem:[%s3 + $0x8] sm:$0xff] %v215
  %229 = vst [vmem:[%s3 + $0x10] sm:$0xff] %v216
  %230 = vst [vmem:[%s3 + $0x18] sm:$0xff] %v217
  %231 = vst [vmem:[%s3 + $0x20] sm:$0xff] %v218
  %232 = vst [vmem:[%s3 + $0x28] sm:$0xff] %v219
  %233 = vst [vmem:[%s3 + $0x30] sm:$0xff] %v220
  %234 = vst [vmem:[%s3 + $0x38] sm:$0xff] %v221
  %235 = vst [vmem:[%s3 + $0x40] sm:$0xff] %v222
  %236 = vst [vmem:[%s3 + $0x48] sm:$0xff] %v223
  %237 = vst [vmem:[%s3 + $0x50] sm:$0xff] %v224
  %238 = vst [vmem:[%s3 + $0x58] sm:$0xff] %v225
  %239 = vst [vmem:[%s3 + $0x60] sm:$0xff] %v226
  // Predicated region
  $region14: #{autoencoder_forward.6} parent=0 // pred_check
    _
  $region15: #{autoencoder_forward.6} parent=0 // pred_check_branch
    %241 = sbr.rel (0) target = $region17
  $region16: #{autoencoder_forward.6} parent=0 // pred_region
    _
  $region17: #{autoencoder_forward.6} parent=0 // pred_fallthru
    _
  // Predicated region
  $region18: #{autoencoder_forward.6} parent=0 // pred_check
    _
  $region19: #{autoencoder_forward.6} parent=0 // pred_check_branch
    %243 = sbr.rel (0) target = $region21
  $region20: #{autoencoder_forward.6} parent=0 // pred_region
    _
  $region21: #{autoencoder_forward.6} parent=0 // pred_fallthru
    _

// kernel: autoencoder_forward.7
$region0: #{autoencoder_forward.7}
  #allocation0 [shape = 'u32[]', space=smem, size = 0x4, offset = 0x4, fixed_abs, tag = 'smem constant byte address 0x4 - core index']
  #allocation1 [shape = 'u32[72,128]{1,0:T(1,128)}', space=vmem, size = 0x9000, scoped, tag = 'internal scratch']
  %s0 = inlined_call_operand.vmem [shape: f32[8,1568], index: 0, kind: input, shape index: {}]
  %s1 = inlined_call_operand.vmem [shape: f32[1568,128], index: 1, kind: input, shape index: {}]
  %s2 = inlined_call_operand.vmem [shape: f32[1,128], index: 2, kind: input, shape index: {}]
  %s3 = inlined_call_operand.vmem [shape: f32[128,1568], index: 3, kind: input, shape index: {}]
  %s4 = inlined_call_operand.vmem [shape: f32[1,1568], index: 4, kind: input, shape index: {}]
  %s5 = inlined_call_operand.vmem [shape: f32[8,1568], index: 5, kind: output, shape index: {}]
  %s6 = sld [smem:[#allocation0]]
  $region30: #{autoencoder_forward.7} parent=0
    _
  %s8 = ssub.s32 1, %s6
  %s9 = scalar_select 0, %s8, %s6
  // Predicated region
  $region2: #{autoencoder_forward.7} parent=0 // pred_check
    _
  $region3: #{autoencoder_forward.7} parent=0 // pred_check_branch
    %11 = sbr.rel (0) target = $region5
  $region4: #{autoencoder_forward.7} parent=0 // pred_region
    _
  $region5: #{autoencoder_forward.7} parent=0 // pred_fallthru
    _
  // Predicated region
  $region6: #{autoencoder_forward.7} parent=0 // pred_check
    _
  $region7: #{autoencoder_forward.7} parent=0 // pred_check_branch
    %13 = sbr.rel (0) target = $region9
  $region8: #{autoencoder_forward.7} parent=0 // pred_region
    _
  $region9: #{autoencoder_forward.7} parent=0 // pred_fallthru
    _
  // Predicated region
  $region10: #{autoencoder_forward.7} parent=0 // pred_check
    _
  $region11: #{autoencoder_forward.7} parent=0 // pred_check_branch
    %15 = sbr.rel (0) target = $region13
  $region12: #{autoencoder_forward.7} parent=0 // pred_region
    _
  $region13: #{autoencoder_forward.7} parent=0 // pred_fallthru
    _
  // Predicated region
  $region14: #{autoencoder_forward.7} parent=0 // pred_check
    _
  $region15: #{autoencoder_forward.7} parent=0 // pred_check_branch
    %17 = sbr.rel (0) target = $region17
  $region16: #{autoencoder_forward.7} parent=0 // pred_region
    _
  $region17: #{autoencoder_forward.7} parent=0 // pred_fallthru
    _
  // Predicated region
  $region18: #{autoencoder_forward.7} parent=0 // pred_check
    _
  $region19: #{autoencoder_forward.7} parent=0 // pred_check_branch
    %19 = sbr.rel (0) target = $region21
  $region20: #{autoencoder_forward.7} parent=0 // pred_region
    _
  $region21: #{autoencoder_forward.7} parent=0 // pred_fallthru
    _
  %v20 = vld [vmem:[%s0] sm:$0xff]
  %v21 = vld [vmem:[%s0 + $0x8] sm:$0xff]
  %v22 = vld [vmem:[%s0 + $0x10] sm:$0xff]
  %v23 = vld [vmem:[%s0 + $0x18] sm:$0xff]
  %v24 = vld [vmem:[%s0 + $0x20] sm:$0xff]
  %v25 = vld [vmem:[%s0 + $0x28] sm:$0xff]
  %v26 = vld [vmem:[%s0 + $0x30] sm:$0xff]
  %v27 = vld [vmem:[%s0 + $0x38] sm:$0xff]
  %v28 = vld [vmem:[%s0 + $0x40] sm:$0xff]
  %v29 = vld [vmem:[%s0 + $0x48] sm:$0xff]
  %v30 = vld [vmem:[%s0 + $0x50] sm:$0xff]
  %v31 = vld [vmem:[%s0 + $0x58] sm:$0xff]
  %v32 = vld [vmem:[%s0 + $0x60] sm:$0xff]
  %v33 = vld [vmem:[%s1] sm:$0xff]
  %v34 = vld [vmem:[%s1 + $0x8] sm:$0xff]
  %v35 = vld [vmem:[%s1 + $0x10] sm:$0xff]
  %v36 = vld [vmem:[%s1 + $0x18] sm:$0xff]
  %v37 = vld [vmem:[%s1 + $0x20] sm:$0xff]
  %v38 = vld [vmem:[%s1 + $0x28] sm:$0xff]
  %v39 = vld [vmem:[%s1 + $0x30] sm:$0xff]
  %v40 = vld [vmem:[%s1 + $0x38] sm:$0xff]
  %v41 = vld [vmem:[%s1 + $0x40] sm:$0xff]
  %v42 = vld [vmem:[%s1 + $0x48] sm:$0xff]
  %v43 = vld [vmem:[%s1 + $0x50] sm:$0xff]
  %v44 = vld [vmem:[%s1 + $0x58] sm:$0xff]
  %v45 = vld [vmem:[%s1 + $0x60] sm:$0xff]
  %v46 = vld [vmem:[%s1 + $0x68] sm:$0xff]
  %v47 = vld [vmem:[%s1 + $0x70] sm:$0xff]
  %v48 = vld [vmem:[%s1 + $0x78] sm:$0xff]
  %v49 = vld [vmem:[%s1 + $0x80] sm:$0xff]
  %v50 = vld [vmem:[%s1 + $0x88] sm:$0xff]
  %v51 = vld [vmem:[%s1 + $0x90] sm:$0xff]
  %v52 = vld [vmem:[%s1 + $0x98] sm:$0xff]
  %v53 = vld [vmem:[%s1 + $0xa0] sm:$0xff]
  %v54 = vld [vmem:[%s1 + $0xa8] sm:$0xff]
  %v55 = vld [vmem:[%s1 + $0xb0] sm:$0xff]
  %v56 = vld [vmem:[%s1 + $0xb8] sm:$0xff]
  %v57 = vld [vmem:[%s1 + $0xc0] sm:$0xff]
  %v58 = vld [vmem:[%s1 + $0xc8] sm:$0xff]
  %v59 = vld [vmem:[%s1 + $0xd0] sm:$0xff]
  %v60 = vld [vmem:[%s1 + $0xd8] sm:$0xff]
  %v61 = vld [vmem:[%s1 + $0xe0] sm:$0xff]
  %v62 = vld [vmem:[%s1 + $0xe8] sm:$0xff]
  %v63 = vld [vmem:[%s1 + $0xf0] sm:$0xff]
  %v64 = vld [vmem:[%s1 + $0xf8] sm:$0xff]
  %v65 = vld [vmem:[%s1 + $0x100] sm:$0xff]
  %v66 = vld [vmem:[%s1 + $0x108] sm:$0xff]
  %v67 = vld [vmem:[%s1 + $0x110] sm:$0xff]
  %v68 = vld [vmem:[%s1 + $0x118] sm:$0xff]
  %v69 = vld [vmem:[%s1 + $0x120] sm:$0xff]
  %v70 = vld [vmem:[%s1 + $0x128] sm:$0xff]
  %v71 = vld [vmem:[%s1 + $0x130] sm:$0xff]
  %v72 = vld [vmem:[%s1 + $0x138] sm:$0xff]
  %v73 = vld [vmem:[%s1 + $0x140] sm:$0xff]
  %v74 = vld [vmem:[%s1 + $0x148] sm:$0xff]
  %v75 = vld [vmem:[%s1 + $0x150] sm:$0xff]
  %v76 = vld [vmem:[%s1 + $0x158] sm:$0xff]
  %v77 = vld [vmem:[%s1 + $0x160] sm:$0xff]
  %v78 = vld [vmem:[%s1 + $0x168] sm:$0xff]
  %v79 = vld [vmem:[%s1 + $0x170] sm:$0xff]
  %v80 = vld [vmem:[%s1 + $0x178] sm:$0xff]
  %v81 = vld [vmem:[%s1 + $0x180] sm:$0xff]
  %v82 = vld [vmem:[%s1 + $0x188] sm:$0xff]
  %v83 = vld [vmem:[%s1 + $0x190] sm:$0xff]
  %v84 = vld [vmem:[%s1 + $0x198] sm:$0xff]
  %v85 = vld [vmem:[%s1 + $0x1a0] sm:$0xff]
  %v86 = vld [vmem:[%s1 + $0x1a8] sm:$0xff]
  %v87 = vld [vmem:[%s1 + $0x1b0] sm:$0xff]
  %v88 = vld [vmem:[%s1 + $0x1b8] sm:$0xff]
  %v89 = vld [vmem:[%s1 + $0x1c0] sm:$0xff]
  %v90 = vld [vmem:[%s1 + $0x1c8] sm:$0xff]
  %v91 = vld [vmem:[%s1 + $0x1d0] sm:$0xff]
  %v92 = vld [vmem:[%s1 + $0x1d8] sm:$0xff]
  %v93 = vld [vmem:[%s1 + $0x1e0] sm:$0xff]
  %v94 = vld [vmem:[%s1 + $0x1e8] sm:$0xff]
  %v95 = vld [vmem:[%s1 + $0x1f0] sm:$0xff]
  %v96 = vld [vmem:[%s1 + $0x1f8] sm:$0xff]
  %v97 = vld [vmem:[%s1 + $0x200] sm:$0xff]
  %v98 = vld [vmem:[%s1 + $0x208] sm:$0xff]
  %v99 = vld [vmem:[%s1 + $0x210] sm:$0xff]
  %v100 = vld [vmem:[%s1 + $0x218] sm:$0xff]
  %v101 = vld [vmem:[%s1 + $0x220] sm:$0xff]
  %v102 = vld [vmem:[%s1 + $0x228] sm:$0xff]
  %v103 = vld [vmem:[%s1 + $0x230] sm:$0xff]
  %v104 = vld [vmem:[%s1 + $0x238] sm:$0xff]
  %v105 = vld [vmem:[%s1 + $0x240] sm:$0xff]
  %v106 = vld [vmem:[%s1 + $0x248] sm:$0xff]
  %v107 = vld [vmem:[%s1 + $0x250] sm:$0xff]
  %v108 = vld [vmem:[%s1 + $0x258] sm:$0xff]
  %v109 = vld [vmem:[%s1 + $0x260] sm:$0xff]
  %v110 = vld [vmem:[%s1 + $0x268] sm:$0xff]
  %v111 = vld [vmem:[%s1 + $0x270] sm:$0xff]
  %v112 = vld [vmem:[%s1 + $0x278] sm:$0xff]
  %v113 = vld [vmem:[%s1 + $0x280] sm:$0xff]
  %v114 = vld [vmem:[%s1 + $0x288] sm:$0xff]
  %v115 = vld [vmem:[%s1 + $0x290] sm:$0xff]
  %v116 = vld [vmem:[%s1 + $0x298] sm:$0xff]
  %v117 = vld [vmem:[%s1 + $0x2a0] sm:$0xff]
  %v118 = vld [vmem:[%s1 + $0x2a8] sm:$0xff]
  %v119 = vld [vmem:[%s1 + $0x2b0] sm:$0xff]
  %v120 = vld [vmem:[%s1 + $0x2b8] sm:$0xff]
  %v121 = vld [vmem:[%s1 + $0x2c0] sm:$0xff]
  %v122 = vld [vmem:[%s1 + $0x2c8] sm:$0xff]
  %v123 = vld [vmem:[%s1 + $0x2d0] sm:$0xff]
  %v124 = vld [vmem:[%s1 + $0x2d8] sm:$0xff]
  %v125 = vld [vmem:[%s1 + $0x2e0] sm:$0xff]
  %v126 = vld [vmem:[%s1 + $0x2e8] sm:$0xff]
  %v127 = vld [vmem:[%s1 + $0x2f0] sm:$0xff]
  %v128 = vld [vmem:[%s1 + $0x2f8] sm:$0xff]
  %v129 = vld [vmem:[%s1 + $0x300] sm:$0xff]
  %v130 = vld [vmem:[%s1 + $0x308] sm:$0xff]
  %v131 = vld [vmem:[%s1 + $0x310] sm:$0xff]
  %v132 = vld [vmem:[%s1 + $0x318] sm:$0xff]
  %v133 = vld [vmem:[%s1 + $0x320] sm:$0xff]
  %v134 = vld [vmem:[%s1 + $0x328] sm:$0xff]
  %v135 = vld [vmem:[%s1 + $0x330] sm:$0xff]
  %v136 = vld [vmem:[%s1 + $0x338] sm:$0xff]
  %v137 = vld [vmem:[%s1 + $0x340] sm:$0xff]
  %v138 = vld [vmem:[%s1 + $0x348] sm:$0xff]
  %v139 = vld [vmem:[%s1 + $0x350] sm:$0xff]
  %v140 = vld [vmem:[%s1 + $0x358] sm:$0xff]
  %v141 = vld [vmem:[%s1 + $0x360] sm:$0xff]
  %v142 = vld [vmem:[%s1 + $0x368] sm:$0xff]
  %v143 = vld [vmem:[%s1 + $0x370] sm:$0xff]
  %v144 = vld [vmem:[%s1 + $0x378] sm:$0xff]
  %v145 = vld [vmem:[%s1 + $0x380] sm:$0xff]
  %v146 = vld [vmem:[%s1 + $0x388] sm:$0xff]
  %v147 = vld [vmem:[%s1 + $0x390] sm:$0xff]
  %v148 = vld [vmem:[%s1 + $0x398] sm:$0xff]
  %v149 = vld [vmem:[%s1 + $0x3a0] sm:$0xff]
  %v150 = vld [vmem:[%s1 + $0x3a8] sm:$0xff]
  %v151 = vld [vmem:[%s1 + $0x3b0] sm:$0xff]
  %v152 = vld [vmem:[%s1 + $0x3b8] sm:$0xff]
  %v153 = vld [vmem:[%s1 + $0x3c0] sm:$0xff]
  %v154 = vld [vmem:[%s1 + $0x3c8] sm:$0xff]
  %v155 = vld [vmem:[%s1 + $0x3d0] sm:$0xff]
  %v156 = vld [vmem:[%s1 + $0x3d8] sm:$0xff]
  %v157 = vld [vmem:[%s1 + $0x3e0] sm:$0xff]
  %v158 = vld [vmem:[%s1 + $0x3e8] sm:$0xff]
  %v159 = vld [vmem:[%s1 + $0x3f0] sm:$0xff]
  %v160 = vld [vmem:[%s1 + $0x3f8] sm:$0xff]
  %v161 = vld [vmem:[%s1 + $0x400] sm:$0xff]
  %v162 = vld [vmem:[%s1 + $0x408] sm:$0xff]
  %v163 = vld [vmem:[%s1 + $0x410] sm:$0xff]
  %v164 = vld [vmem:[%s1 + $0x418] sm:$0xff]
  %v165 = vld [vmem:[%s1 + $0x420] sm:$0xff]
  %v166 = vld [vmem:[%s1 + $0x428] sm:$0xff]
  %v167 = vld [vmem:[%s1 + $0x430] sm:$0xff]
  %v168 = vld [vmem:[%s1 + $0x438] sm:$0xff]
  %v169 = vld [vmem:[%s1 + $0x440] sm:$0xff]
  %v170 = vld [vmem:[%s1 + $0x448] sm:$0xff]
  %v171 = vld [vmem:[%s1 + $0x450] sm:$0xff]
  %v172 = vld [vmem:[%s1 + $0x458] sm:$0xff]
  %v173 = vld [vmem:[%s1 + $0x460] sm:$0xff]
  %v174 = vld [vmem:[%s1 + $0x468] sm:$0xff]
  %v175 = vld [vmem:[%s1 + $0x470] sm:$0xff]
  %v176 = vld [vmem:[%s1 + $0x478] sm:$0xff]
  %v177 = vld [vmem:[%s1 + $0x480] sm:$0xff]
  %v178 = vld [vmem:[%s1 + $0x488] sm:$0xff]
  %v179 = vld [vmem:[%s1 + $0x490] sm:$0xff]
  %v180 = vld [vmem:[%s1 + $0x498] sm:$0xff]
  %v181 = vld [vmem:[%s1 + $0x4a0] sm:$0xff]
  %v182 = vld [vmem:[%s1 + $0x4a8] sm:$0xff]
  %v183 = vld [vmem:[%s1 + $0x4b0] sm:$0xff]
  %v184 = vld [vmem:[%s1 + $0x4b8] sm:$0xff]
  %v185 = vld [vmem:[%s1 + $0x4c0] sm:$0xff]
  %v186 = vld [vmem:[%s1 + $0x4c8] sm:$0xff]
  %v187 = vld [vmem:[%s1 + $0x4d0] sm:$0xff]
  %v188 = vld [vmem:[%s1 + $0x4d8] sm:$0xff]
  %v189 = vld [vmem:[%s1 + $0x4e0] sm:$0xff]
  %v190 = vld [vmem:[%s1 + $0x4e8] sm:$0xff]
  %v191 = vld [vmem:[%s1 + $0x4f0] sm:$0xff]
  %v192 = vld [vmem:[%s1 + $0x4f8] sm:$0xff]
  %v193 = vld [vmem:[%s1 + $0x500] sm:$0xff]
  %v194 = vld [vmem:[%s1 + $0x508] sm:$0xff]
  %v195 = vld [vmem:[%s1 + $0x510] sm:$0xff]
  %v196 = vld [vmem:[%s1 + $0x518] sm:$0xff]
  %v197 = vld [vmem:[%s1 + $0x520] sm:$0xff]
  %v198 = vld [vmem:[%s1 + $0x528] sm:$0xff]
  %v199 = vld [vmem:[%s1 + $0x530] sm:$0xff]
  %v200 = vld [vmem:[%s1 + $0x538] sm:$0xff]
  %v201 = vld [vmem:[%s1 + $0x540] sm:$0xff]
  %v202 = vld [vmem:[%s1 + $0x548] sm:$0xff]
  %v203 = vld [vmem:[%s1 + $0x550] sm:$0xff]
  %v204 = vld [vmem:[%s1 + $0x558] sm:$0xff]
  %v205 = vld [vmem:[%s1 + $0x560] sm:$0xff]
  %v206 = vld [vmem:[%s1 + $0x568] sm:$0xff]
  %v207 = vld [vmem:[%s1 + $0x570] sm:$0xff]
  %v208 = vld [vmem:[%s1 + $0x578] sm:$0xff]
  %v209 = vld [vmem:[%s1 + $0x580] sm:$0xff]
  %v210 = vld [vmem:[%s1 + $0x588] sm:$0xff]
  %v211 = vld [vmem:[%s1 + $0x590] sm:$0xff]
  %v212 = vld [vmem:[%s1 + $0x598] sm:$0xff]
  %v213 = vld [vmem:[%s1 + $0x5a0] sm:$0xff]
  %v214 = vld [vmem:[%s1 + $0x5a8] sm:$0xff]
  %v215 = vld [vmem:[%s1 + $0x5b0] sm:$0xff]
  %v216 = vld [vmem:[%s1 + $0x5b8] sm:$0xff]
  %v217 = vld [vmem:[%s1 + $0x5c0] sm:$0xff]
  %v218 = vld [vmem:[%s1 + $0x5c8] sm:$0xff]
  %v219 = vld [vmem:[%s1 + $0x5d0] sm:$0xff]
  %v220 = vld [vmem:[%s1 + $0x5d8] sm:$0xff]
  %v221 = vld [vmem:[%s1 + $0x5e0] sm:$0xff]
  %v222 = vld [vmem:[%s1 + $0x5e8] sm:$0xff]
  %v223 = vld [vmem:[%s1 + $0x5f0] sm:$0xff]
  %v224 = vld [vmem:[%s1 + $0x5f8] sm:$0xff]
  %v225 = vld [vmem:[%s1 + $0x600] sm:$0xff]
  %v226 = vld [vmem:[%s1 + $0x608] sm:$0xff]
  %v227 = vld [vmem:[%s1 + $0x610] sm:$0xff]
  %v228 = vld [vmem:[%s1 + $0x618] sm:$0xff]
  %v229 = vld [vmem:[%s2] sm:$0x1]
  %v231 = vperm.slane %v229, 0
  %vm233 = vcmask 261120
  %v235 = vsel %vm233, %v32, 0
  %237 = vmatpush.msra.mxu0 %v48
  %238 = vmatpush.msra.mxu0 %v47
  %239 = vmatpush.msra.mxu0 %v46
  %240 = vmatpush.msra.mxu0 %v45
  %241 = vmatpush.msra.mxu0 %v44
  %242 = vmatpush.msra.mxu0 %v43
  %243 = vmatpush.msra.mxu0 %v42
  %244 = vmatpush.msra.mxu0 %v41
  %245 = vmatpush.msra.mxu0 %v40
  %246 = vmatpush.msra.mxu0 %v39
  %247 = vmatpush.msra.mxu0 %v38
  %248 = vmatpush.msra.mxu0 %v37
  %249 = vmatpush.msra.mxu0 %v36
  %250 = vmatpush.msra.mxu0 %v35
  %251 = vmatpush.msra.mxu0 %v34
  %252 = vmatpush.msra.mxu0 %v33
  %253 = vmatmul.f32.gmra.mxu0 %v20
  %v254 = vpop.f32.mrf.mxu0
  %v255 = vadd.f32 %v231, %v254
  %256 = vdwg.mxu0
  %257 = vmatpush.msra.mxu0 %v64
  %258 = vmatpush.msra.mxu0 %v63
  %259 = vmatpush.msra.mxu0 %v62
  %260 = vmatpush.msra.mxu0 %v61
  %261 = vmatpush.msra.mxu0 %v60
  %262 = vmatpush.msra.mxu0 %v59
  %263 = vmatpush.msra.mxu0 %v58
  %264 = vmatpush.msra.mxu0 %v57
  %265 = vmatpush.msra.mxu0 %v56
  %266 = vmatpush.msra.mxu0 %v55
  %267 = vmatpush.msra.mxu0 %v54
  %268 = vmatpush.msra.mxu0 %v53
  %269 = vmatpush.msra.mxu0 %v52
  %270 = vmatpush.msra.mxu0 %v51
  %271 = vmatpush.msra.mxu0 %v50
  %272 = vmatpush.msra.mxu0 %v49
  %273 = vmatmul.f32.gmra.mxu0 %v21
  %v274 = vpop.f32.mrf.mxu0
  %v275 = vadd.f32 %v255, %v274
  %276 = vdwg.mxu0
  %277 = vmatpush.msra.mxu0 %v80
  %278 = vmatpush.msra.mxu0 %v79
  %279 = vmatpush.msra.mxu0 %v78
  %280 = vmatpush.msra.mxu0 %v77
  %281 = vmatpush.msra.mxu0 %v76
  %282 = vmatpush.msra.mxu0 %v75
  %283 = vmatpush.msra.mxu0 %v74
  %284 = vmatpush.msra.mxu0 %v73
  %285 = vmatpush.msra.mxu0 %v72
  %286 = vmatpush.msra.mxu0 %v71
  %287 = vmatpush.msra.mxu0 %v70
  %288 = vmatpush.msra.mxu0 %v69
  %289 = vmatpush.msra.mxu0 %v68
  %290 = vmatpush.msra.mxu0 %v67
  %291 = vmatpush.msra.mxu0 %v66
  %292 = vmatpush.msra.mxu0 %v65
  %293 = vmatmul.f32.gmra.mxu0 %v22
  %v294 = vpop.f32.mrf.mxu0
  %v295 = vadd.f32 %v275, %v294
  %296 = vdwg.mxu0
  %297 = vmatpush.msra.mxu0 %v96
  %298 = vmatpush.msra.mxu0 %v95
  %299 = vmatpush.msra.mxu0 %v94
  %300 = vmatpush.msra.mxu0 %v93
  %301 = vmatpush.msra.mxu0 %v92
  %302 = vmatpush.msra.mxu0 %v91
  %303 = vmatpush.msra.mxu0 %v90
  %304 = vmatpush.msra.mxu0 %v89
  %305 = vmatpush.msra.mxu0 %v88
  %306 = vmatpush.msra.mxu0 %v87
  %307 = vmatpush.msra.mxu0 %v86
  %308 = vmatpush.msra.mxu0 %v85
  %309 = vmatpush.msra.mxu0 %v84
  %310 = vmatpush.msra.mxu0 %v83
  %311 = vmatpush.msra.mxu0 %v82
  %312 = vmatpush.msra.mxu0 %v81
  %313 = vmatmul.f32.gmra.mxu0 %v23
  %v314 = vpop.f32.mrf.mxu0
  %v315 = vadd.f32 %v295, %v314
  %316 = vdwg.mxu0
  %317 = vmatpush.msra.mxu0 %v112
  %318 = vmatpush.msra.mxu0 %v111
  %319 = vmatpush.msra.mxu0 %v110
  %320 = vmatpush.msra.mxu0 %v109
  %321 = vmatpush.msra.mxu0 %v108
  %322 = vmatpush.msra.mxu0 %v107
  %323 = vmatpush.msra.mxu0 %v106
  %324 = vmatpush.msra.mxu0 %v105
  %325 = vmatpush.msra.mxu0 %v104
  %326 = vmatpush.msra.mxu0 %v103
  %327 = vmatpush.msra.mxu0 %v102
  %328 = vmatpush.msra.mxu0 %v101
  %329 = vmatpush.msra.mxu0 %v100
  %330 = vmatpush.msra.mxu0 %v99
  %331 = vmatpush.msra.mxu0 %v98
  %332 = vmatpush.msra.mxu0 %v97
  %333 = vmatmul.f32.gmra.mxu0 %v24
  %v334 = vpop.f32.mrf.mxu0
  %v335 = vadd.f32 %v315, %v334
  %336 = vdwg.mxu0
  %337 = vmatpush.msra.mxu0 %v128
  %338 = vmatpush.msra.mxu0 %v127
  %339 = vmatpush.msra.mxu0 %v126
  %340 = vmatpush.msra.mxu0 %v125
  %341 = vmatpush.msra.mxu0 %v124
  %342 = vmatpush.msra.mxu0 %v123
  %343 = vmatpush.msra.mxu0 %v122
  %344 = vmatpush.msra.mxu0 %v121
  %345 = vmatpush.msra.mxu0 %v120
  %346 = vmatpush.msra.mxu0 %v119
  %347 = vmatpush.msra.mxu0 %v118
  %348 = vmatpush.msra.mxu0 %v117
  %349 = vmatpush.msra.mxu0 %v116
  %350 = vmatpush.msra.mxu0 %v115
  %351 = vmatpush.msra.mxu0 %v114
  %352 = vmatpush.msra.mxu0 %v113
  %353 = vmatmul.f32.gmra.mxu0 %v25
  %v354 = vpop.f32.mrf.mxu0
  %v355 = vadd.f32 %v335, %v354
  %356 = vdwg.mxu0
  %357 = vmatpush.msra.mxu0 %v144
  %358 = vmatpush.msra.mxu0 %v143
  %359 = vmatpush.msra.mxu0 %v142
  %360 = vmatpush.msra.mxu0 %v141
  %361 = vmatpush.msra.mxu0 %v140
  %362 = vmatpush.msra.mxu0 %v139
  %363 = vmatpush.msra.mxu0 %v138
  %364 = vmatpush.msra.mxu0 %v137
  %365 = vmatpush.msra.mxu0 %v136
  %366 = vmatpush.msra.mxu0 %v135
  %367 = vmatpush.msra.mxu0 %v134
  %368 = vmatpush.msra.mxu0 %v133
  %369 = vmatpush.msra.mxu0 %v132
  %370 = vmatpush.msra.mxu0 %v131
  %371 = vmatpush.msra.mxu0 %v130
  %372 = vmatpush.msra.mxu0 %v129
  %373 = vmatmul.f32.gmra.mxu0 %v26
  %v374 = vpop.f32.mrf.mxu0
  %v375 = vadd.f32 %v355, %v374
  %376 = vdwg.mxu0
  %377 = vmatpush.msra.mxu0 %v160
  %378 = vmatpush.msra.mxu0 %v159
  %379 = vmatpush.msra.mxu0 %v158
  %380 = vmatpush.msra.mxu0 %v157
  %381 = vmatpush.msra.mxu0 %v156
  %382 = vmatpush.msra.mxu0 %v155
  %383 = vmatpush.msra.mxu0 %v154
  %384 = vmatpush.msra.mxu0 %v153
  %385 = vmatpush.msra.mxu0 %v152
  %386 = vmatpush.msra.mxu0 %v151
  %387 = vmatpush.msra.mxu0 %v150
  %388 = vmatpush.msra.mxu0 %v149
  %389 = vmatpush.msra.mxu0 %v148
  %390 = vmatpush.msra.mxu0 %v147
  %391 = vmatpush.msra.mxu0 %v146
  %392 = vmatpush.msra.mxu0 %v145
  %393 = vmatmul.f32.gmra.mxu0 %v27
  %v394 = vpop.f32.mrf.mxu0
  %v395 = vadd.f32 %v375, %v394
  %396 = vdwg.mxu0
  %397 = vmatpush.msra.mxu0 %v176
  %398 = vmatpush.msra.mxu0 %v175
  %399 = vmatpush.msra.mxu0 %v174
  %400 = vmatpush.msra.mxu0 %v173
  %401 = vmatpush.msra.mxu0 %v172
  %402 = vmatpush.msra.mxu0 %v171
  %403 = vmatpush.msra.mxu0 %v170
  %404 = vmatpush.msra.mxu0 %v169
  %405 = vmatpush.msra.mxu0 %v168
  %406 = vmatpush.msra.mxu0 %v167
  %407 = vmatpush.msra.mxu0 %v166
  %408 = vmatpush.msra.mxu0 %v165
  %409 = vmatpush.msra.mxu0 %v164
  %410 = vmatpush.msra.mxu0 %v163
  %411 = vmatpush.msra.mxu0 %v162
  %412 = vmatpush.msra.mxu0 %v161
  %413 = vmatmul.f32.gmra.mxu0 %v28
  %v414 = vpop.f32.mrf.mxu0
  %v415 = vadd.f32 %v395, %v414
  %416 = vdwg.mxu0
  %417 = vmatpush.msra.mxu0 %v192
  %418 = vmatpush.msra.mxu0 %v191
  %419 = vmatpush.msra.mxu0 %v190
  %420 = vmatpush.msra.mxu0 %v189
  %421 = vmatpush.msra.mxu0 %v188
  %422 = vmatpush.msra.mxu0 %v187
  %423 = vmatpush.msra.mxu0 %v186
  %424 = vmatpush.msra.mxu0 %v185
  %425 = vmatpush.msra.mxu0 %v184
  %426 = vmatpush.msra.mxu0 %v183
  %427 = vmatpush.msra.mxu0 %v182
  %428 = vmatpush.msra.mxu0 %v181
  %429 = vmatpush.msra.mxu0 %v180
  %430 = vmatpush.msra.mxu0 %v179
  %431 = vmatpush.msra.mxu0 %v178
  %432 = vmatpush.msra.mxu0 %v177
  %433 = vmatmul.f32.gmra.mxu0 %v29
  %v434 = vpop.f32.mrf.mxu0
  %v435 = vadd.f32 %v415, %v434
  %436 = vdwg.mxu0
  %437 = vmatpush.msra.mxu0 %v208
  %438 = vmatpush.msra.mxu0 %v207
  %439 = vmatpush.msra.mxu0 %v206
  %440 = vmatpush.msra.mxu0 %v205
  %441 = vmatpush.msra.mxu0 %v204
  %442 = vmatpush.msra.mxu0 %v203
  %443 = vmatpush.msra.mxu0 %v202
  %444 = vmatpush.msra.mxu0 %v201
  %445 = vmatpush.msra.mxu0 %v200
  %446 = vmatpush.msra.mxu0 %v199
  %447 = vmatpush.msra.mxu0 %v198
  %448 = vmatpush.msra.mxu0 %v197
  %449 = vmatpush.msra.mxu0 %v196
  %450 = vmatpush.msra.mxu0 %v195
  %451 = vmatpush.msra.mxu0 %v194
  %452 = vmatpush.msra.mxu0 %v193
  %453 = vmatmul.f32.gmra.mxu0 %v30
  %v454 = vpop.f32.mrf.mxu0
  %v455 = vadd.f32 %v435, %v454
  %456 = vdwg.mxu0
  %457 = vmatpush.msra.mxu0 %v224
  %458 = vmatpush.msra.mxu0 %v223
  %459 = vmatpush.msra.mxu0 %v222
  %460 = vmatpush.msra.mxu0 %v221
  %461 = vmatpush.msra.mxu0 %v220
  %462 = vmatpush.msra.mxu0 %v219
  %463 = vmatpush.msra.mxu0 %v218
  %464 = vmatpush.msra.mxu0 %v217
  %465 = vmatpush.msra.mxu0 %v216
  %466 = vmatpush.msra.mxu0 %v215
  %467 = vmatpush.msra.mxu0 %v214
  %468 = vmatpush.msra.mxu0 %v213
  %469 = vmatpush.msra.mxu0 %v212
  %470 = vmatpush.msra.mxu0 %v211
  %471 = vmatpush.msra.mxu0 %v210
  %472 = vmatpush.msra.mxu0 %v209
  %473 = vmatmul.f32.gmra.mxu0 %v31
  %v474 = vpop.f32.mrf.mxu0
  %v475 = vadd.f32 %v455, %v474
  %476 = vdwg.mxu0
  %477 = vmatpush.msra.mxu0 0.0
  %478 = vmatpush.msra.mxu0 0.0
  %479 = vmatpush.msra.mxu0 0.0
  %480 = vmatpush.msra.mxu0 0.0
  %481 = vmatpush.msra.mxu0 0.0
  %482 = vmatpush.msra.mxu0 0.0
  %483 = vmatpush.msra.mxu0 0.0
  %484 = vmatpush.msra.mxu0 0.0
  %485 = vmatpush.msra.mxu0 0.0
  %486 = vmatpush.msra.mxu0 0.0
  %487 = vmatpush.msra.mxu0 0.0
  %488 = vmatpush.msra.mxu0 0.0
  %489 = vmatpush.msra.mxu0 %v228
  %490 = vmatpush.msra.mxu0 %v227
  %491 = vmatpush.msra.mxu0 %v226
  %492 = vmatpush.msra.mxu0 %v225
  %493 = vmatmul.f32.gmra.mxu0 %v235
  %v494 = vpop.f32.mrf.mxu0
  %v495 = vadd.f32 %v475, %v494
  %496 = vdwg.mxu0
  %v497 = vld [vmem:[%s3] sm:$0xff]
  %v498 = vld [vmem:[%s3 + $0x8] sm:$0xff]
  %v499 = vld [vmem:[%s3 + $0x10] sm:$0xff]
  %v500 = vld [vmem:[%s3 + $0x18] sm:$0xff]
  %v501 = vld [vmem:[%s3 + $0x20] sm:$0xff]
  %v502 = vld [vmem:[%s3 + $0x28] sm:$0xff]
  %v503 = vld [vmem:[%s3 + $0x30] sm:$0xff]
  %v504 = vld [vmem:[%s3 + $0x38] sm:$0xff]
  %v505 = vld [vmem:[%s3 + $0x40] sm:$0xff]
  %v506 = vld [vmem:[%s3 + $0x48] sm:$0xff]
  %v507 = vld [vmem:[%s3 + $0x50] sm:$0xff]
  %v508 = vld [vmem:[%s3 + $0x58] sm:$0xff]
  %v509 = vld [vmem:[%s3 + $0x60] sm:$0xff]
  %v510 = vld [vmem:[%s3 + $0x68] sm:$0xff]
  %v511 = vld [vmem:[%s3 + $0x70] sm:$0xff]
  %v512 = vld [vmem:[%s3 + $0x78] sm:$0xff]
  %v513 = vld [vmem:[%s3 + $0x80] sm:$0xff]
  %v514 = vld [vmem:[%s3 + $0x88] sm:$0xff]
  %v515 = vld [vmem:[%s3 + $0x90] sm:$0xff]
  %v516 = vld [vmem:[%s3 + $0x98] sm:$0xff]
  %v517 = vld [vmem:[%s3 + $0xa0] sm:$0xff]
  %v518 = vld [vmem:[%s3 + $0xa8] sm:$0xff]
  %v519 = vld [vmem:[%s3 + $0xb0] sm:$0xff]
  %v520 = vld [vmem:[%s3 + $0xb8] sm:$0xff]
  %v521 = vld [vmem:[%s3 + $0xc0] sm:$0xff]
  %v522 = vld [vmem:[%s3 + $0xc8] sm:$0xff]
  %v523 = vld [vmem:[%s3 + $0xd0] sm:$0xff]
  %v524 = vld [vmem:[%s3 + $0xd8] sm:$0xff]
  %v525 = vld [vmem:[%s3 + $0xe0] sm:$0xff]
  %v526 = vld [vmem:[%s3 + $0xe8] sm:$0xff]
  %v527 = vld [vmem:[%s3 + $0xf0] sm:$0xff]
  %v528 = vld [vmem:[%s3 + $0xf8] sm:$0xff]
  %v529 = vld [vmem:[%s3 + $0x100] sm:$0xff]
  %v530 = vld [vmem:[%s3 + $0x108] sm:$0xff]
  %v531 = vld [vmem:[%s3 + $0x110] sm:$0xff]
  %v532 = vld [vmem:[%s3 + $0x118] sm:$0xff]
  %v533 = vld [vmem:[%s3 + $0x120] sm:$0xff]
  %v534 = vld [vmem:[%s3 + $0x128] sm:$0xff]
  %v535 = vld [vmem:[%s3 + $0x130] sm:$0xff]
  %v536 = vld [vmem:[%s3 + $0x138] sm:$0xff]
  %v537 = vld [vmem:[%s3 + $0x140] sm:$0xff]
  %v538 = vld [vmem:[%s3 + $0x148] sm:$0xff]
  %v539 = vld [vmem:[%s3 + $0x150] sm:$0xff]
  %v540 = vld [vmem:[%s3 + $0x158] sm:$0xff]
  %v541 = vld [vmem:[%s3 + $0x160] sm:$0xff]
  %v542 = vld [vmem:[%s3 + $0x168] sm:$0xff]
  %v543 = vld [vmem:[%s3 + $0x170] sm:$0xff]
  %v544 = vld [vmem:[%s3 + $0x178] sm:$0xff]
  %v545 = vld [vmem:[%s3 + $0x180] sm:$0xff]
  %v546 = vld [vmem:[%s3 + $0x188] sm:$0xff]
  %v547 = vld [vmem:[%s3 + $0x190] sm:$0xff]
  %v548 = vld [vmem:[%s3 + $0x198] sm:$0xff]
  %v549 = vld [vmem:[%s3 + $0x1a0] sm:$0xff]
  %v550 = vld [vmem:[%s3 + $0x1a8] sm:$0xff]
  %v551 = vld [vmem:[%s3 + $0x1b0] sm:$0xff]
  %v552 = vld [vmem:[%s3 + $0x1b8] sm:$0xff]
  %v553 = vld [vmem:[%s3 + $0x1c0] sm:$0xff]
  %v554 = vld [vmem:[%s3 + $0x1c8] sm:$0xff]
  %v555 = vld [vmem:[%s3 + $0x1d0] sm:$0xff]
  %v556 = vld [vmem:[%s3 + $0x1d8] sm:$0xff]
  %v557 = vld [vmem:[%s3 + $0x1e0] sm:$0xff]
  %v558 = vld [vmem:[%s3 + $0x1e8] sm:$0xff]
  %v559 = vld [vmem:[%s3 + $0x1f0] sm:$0xff]
  %v560 = vld [vmem:[%s3 + $0x1f8] sm:$0xff]
  %v561 = vld [vmem:[%s3 + $0x200] sm:$0xff]
  %v562 = vld [vmem:[%s3 + $0x208] sm:$0xff]
  %v563 = vld [vmem:[%s3 + $0x210] sm:$0xff]
  %v564 = vld [vmem:[%s3 + $0x218] sm:$0xff]
  %v565 = vld [vmem:[%s3 + $0x220] sm:$0xff]
  %v566 = vld [vmem:[%s3 + $0x228] sm:$0xff]
  %v567 = vld [vmem:[%s3 + $0x230] sm:$0xff]
  %v568 = vld [vmem:[%s3 + $0x238] sm:$0xff]
  %v569 = vld [vmem:[%s3 + $0x240] sm:$0xff]
  %v570 = vld [vmem:[%s3 + $0x248] sm:$0xff]
  %v571 = vld [vmem:[%s3 + $0x250] sm:$0xff]
  %v572 = vld [vmem:[%s3 + $0x258] sm:$0xff]
  %v573 = vld [vmem:[%s3 + $0x260] sm:$0xff]
  %v574 = vld [vmem:[%s3 + $0x268] sm:$0xff]
  %v575 = vld [vmem:[%s3 + $0x270] sm:$0xff]
  %v576 = vld [vmem:[%s3 + $0x278] sm:$0xff]
  %v577 = vld [vmem:[%s3 + $0x280] sm:$0xff]
  %v578 = vld [vmem:[%s3 + $0x288] sm:$0xff]
  %v579 = vld [vmem:[%s3 + $0x290] sm:$0xff]
  %v580 = vld [vmem:[%s3 + $0x298] sm:$0xff]
  %v581 = vld [vmem:[%s3 + $0x2a0] sm:$0xff]
  %v582 = vld [vmem:[%s3 + $0x2a8] sm:$0xff]
  %v583 = vld [vmem:[%s3 + $0x2b0] sm:$0xff]
  %v584 = vld [vmem:[%s3 + $0x2b8] sm:$0xff]
  %v585 = vld [vmem:[%s3 + $0x2c0] sm:$0xff]
  %v586 = vld [vmem:[%s3 + $0x2c8] sm:$0xff]
  %v587 = vld [vmem:[%s3 + $0x2d0] sm:$0xff]
  %v588 = vld [vmem:[%s3 + $0x2d8] sm:$0xff]
  %v589 = vld [vmem:[%s3 + $0x2e0] sm:$0xff]
  %v590 = vld [vmem:[%s3 + $0x2e8] sm:$0xff]
  %v591 = vld [vmem:[%s3 + $0x2f0] sm:$0xff]
  %v592 = vld [vmem:[%s3 + $0x2f8] sm:$0xff]
  %v593 = vld [vmem:[%s3 + $0x300] sm:$0xff]
  %v594 = vld [vmem:[%s3 + $0x308] sm:$0xff]
  %v595 = vld [vmem:[%s3 + $0x310] sm:$0xff]
  %v596 = vld [vmem:[%s3 + $0x318] sm:$0xff]
  %v597 = vld [vmem:[%s3 + $0x320] sm:$0xff]
  %v598 = vld [vmem:[%s3 + $0x328] sm:$0xff]
  %v599 = vld [vmem:[%s3 + $0x330] sm:$0xff]
  %v600 = vld [vmem:[%s3 + $0x338] sm:$0xff]
  %v601 = vld [vmem:[%s3 + $0x340] sm:$0xff]
  %v602 = vld [vmem:[%s3 + $0x348] sm:$0xff]
  %v603 = vld [vmem:[%s3 + $0x350] sm:$0xff]
  %v604 = vld [vmem:[%s3 + $0x358] sm:$0xff]
  %v605 = vld [vmem:[%s3 + $0x360] sm:$0xff]
  %v606 = vld [vmem:[%s3 + $0x368] sm:$0xff]
  %v607 = vld [vmem:[%s3 + $0x370] sm:$0xff]
  %v608 = vld [vmem:[%s3 + $0x378] sm:$0xff]
  %v609 = vld [vmem:[%s3 + $0x380] sm:$0xff]
  %v610 = vld [vmem:[%s3 + $0x388] sm:$0xff]
  %v611 = vld [vmem:[%s3 + $0x390] sm:$0xff]
  %v612 = vld [vmem:[%s3 + $0x398] sm:$0xff]
  %v613 = vld [vmem:[%s3 + $0x3a0] sm:$0xff]
  %v614 = vld [vmem:[%s3 + $0x3a8] sm:$0xff]
  %v615 = vld [vmem:[%s3 + $0x3b0] sm:$0xff]
  %v616 = vld [vmem:[%s3 + $0x3b8] sm:$0xff]
  %v617 = vld [vmem:[%s3 + $0x3c0] sm:$0xff]
  %v618 = vld [vmem:[%s3 + $0x3c8] sm:$0xff]
  %v619 = vld [vmem:[%s3 + $0x3d0] sm:$0xff]
  %v620 = vld [vmem:[%s3 + $0x3d8] sm:$0xff]
  %v621 = vld [vmem:[%s3 + $0x3e0] sm:$0xff]
  %v622 = vld [vmem:[%s3 + $0x3e8] sm:$0xff]
  %v623 = vld [vmem:[%s3 + $0x3f0] sm:$0xff]
  %v624 = vld [vmem:[%s3 + $0x3f8] sm:$0xff]
  %v625 = vld [vmem:[%s3 + $0x400] sm:$0xff]
  %v626 = vld [vmem:[%s3 + $0x408] sm:$0xff]
  %v627 = vld [vmem:[%s3 + $0x410] sm:$0xff]
  %v628 = vld [vmem:[%s3 + $0x418] sm:$0xff]
  %v629 = vld [vmem:[%s3 + $0x420] sm:$0xff]
  %v630 = vld [vmem:[%s3 + $0x428] sm:$0xff]
  %v631 = vld [vmem:[%s3 + $0x430] sm:$0xff]
  %v632 = vld [vmem:[%s3 + $0x438] sm:$0xff]
  %v633 = vld [vmem:[%s3 + $0x440] sm:$0xff]
  %v634 = vld [vmem:[%s3 + $0x448] sm:$0xff]
  %v635 = vld [vmem:[%s3 + $0x450] sm:$0xff]
  %v636 = vld [vmem:[%s3 + $0x458] sm:$0xff]
  %v637 = vld [vmem:[%s3 + $0x460] sm:$0xff]
  %v638 = vld [vmem:[%s3 + $0x468] sm:$0xff]
  %v639 = vld [vmem:[%s3 + $0x470] sm:$0xff]
  %v640 = vld [vmem:[%s3 + $0x478] sm:$0xff]
  %v641 = vld [vmem:[%s3 + $0x480] sm:$0xff]
  %v642 = vld [vmem:[%s3 + $0x488] sm:$0xff]
  %v643 = vld [vmem:[%s3 + $0x490] sm:$0xff]
  %v644 = vld [vmem:[%s3 + $0x498] sm:$0xff]
  %v645 = vld [vmem:[%s3 + $0x4a0] sm:$0xff]
  %v646 = vld [vmem:[%s3 + $0x4a8] sm:$0xff]
  %v647 = vld [vmem:[%s3 + $0x4b0] sm:$0xff]
  %v648 = vld [vmem:[%s3 + $0x4b8] sm:$0xff]
  %v649 = vld [vmem:[%s3 + $0x4c0] sm:$0xff]
  %v650 = vld [vmem:[%s3 + $0x4c8] sm:$0xff]
  %v651 = vld [vmem:[%s3 + $0x4d0] sm:$0xff]
  %v652 = vld [vmem:[%s3 + $0x4d8] sm:$0xff]
  %v653 = vld [vmem:[%s3 + $0x4e0] sm:$0xff]
  %v654 = vld [vmem:[%s3 + $0x4e8] sm:$0xff]
  %v655 = vld [vmem:[%s3 + $0x4f0] sm:$0xff]
  %v656 = vld [vmem:[%s3 + $0x4f8] sm:$0xff]
  %v657 = vld [vmem:[%s3 + $0x500] sm:$0xff]
  %v658 = vld [vmem:[%s3 + $0x508] sm:$0xff]
  %v659 = vld [vmem:[%s3 + $0x510] sm:$0xff]
  %v660 = vld [vmem:[%s3 + $0x518] sm:$0xff]
  %v661 = vld [vmem:[%s3 + $0x520] sm:$0xff]
  %v662 = vld [vmem:[%s3 + $0x528] sm:$0xff]
  %v663 = vld [vmem:[%s3 + $0x530] sm:$0xff]
  %v664 = vld [vmem:[%s3 + $0x538] sm:$0xff]
  %v665 = vld [vmem:[%s3 + $0x540] sm:$0xff]
  %v666 = vld [vmem:[%s3 + $0x548] sm:$0xff]
  %v667 = vld [vmem:[%s3 + $0x550] sm:$0xff]
  %v668 = vld [vmem:[%s3 + $0x558] sm:$0xff]
  %v669 = vld [vmem:[%s3 + $0x560] sm:$0xff]
  %v670 = vld [vmem:[%s3 + $0x568] sm:$0xff]
  %v671 = vld [vmem:[%s3 + $0x570] sm:$0xff]
  %v672 = vld [vmem:[%s3 + $0x578] sm:$0xff]
  %v673 = vld [vmem:[%s3 + $0x580] sm:$0xff]
  %v674 = vld [vmem:[%s3 + $0x588] sm:$0xff]
  %v675 = vld [vmem:[%s3 + $0x590] sm:$0xff]
  %v676 = vld [vmem:[%s3 + $0x598] sm:$0xff]
  %v677 = vld [vmem:[%s3 + $0x5a0] sm:$0xff]
  %v678 = vld [vmem:[%s3 + $0x5a8] sm:$0xff]
  %v679 = vld [vmem:[%s3 + $0x5b0] sm:$0xff]
  %v680 = vld [vmem:[%s3 + $0x5b8] sm:$0xff]
  %v681 = vld [vmem:[%s3 + $0x5c0] sm:$0xff]
  %v682 = vld [vmem:[%s3 + $0x5c8] sm:$0xff]
  %v683 = vld [vmem:[%s3 + $0x5d0] sm:$0xff]
  %v684 = vld [vmem:[%s3 + $0x5d8] sm:$0xff]
  %v685 = vld [vmem:[%s3 + $0x5e0] sm:$0xff]
  %v686 = vld [vmem:[%s3 + $0x5e8] sm:$0xff]
  %v687 = vld [vmem:[%s3 + $0x5f0] sm:$0xff]
  %v688 = vld [vmem:[%s3 + $0x5f8] sm:$0xff]
  %v689 = vld [vmem:[%s3 + $0x600] sm:$0xff]
  %v690 = vld [vmem:[%s3 + $0x608] sm:$0xff]
  %v691 = vld [vmem:[%s3 + $0x610] sm:$0xff]
  %v692 = vld [vmem:[%s3 + $0x618] sm:$0xff]
  %v693 = vld [vmem:[%s3 + $0x620] sm:$0xff]
  %v694 = vld [vmem:[%s3 + $0x628] sm:$0xff]
  %v695 = vld [vmem:[%s3 + $0x630] sm:$0xff]
  %v696 = vld [vmem:[%s3 + $0x638] sm:$0xff]
  %v697 = vld [vmem:[%s3 + $0x640] sm:$0xff]
  %v698 = vld [vmem:[%s3 + $0x648] sm:$0xff]
  %v699 = vld [vmem:[%s3 + $0x650] sm:$0xff]
  %v700 = vld [vmem:[%s3 + $0x658] sm:$0xff]
  %v701 = vld [vmem:[%s3 + $0x660] sm:$0xff]
  %v702 = vld [vmem:[%s3 + $0x668] sm:$0xff]
  %v703 = vld [vmem:[%s3 + $0x670] sm:$0xff]
  %v704 = vld [vmem:[%s3 + $0x678] sm:$0xff]
  %v705 = vld [vmem:[%s4] sm:$0xff]
  %v706 = vld [vmem:[%s4 + $0x8] sm:$0x1f]
  %v709 = vperm.slane %v705, 0
  %v710 = vperm.slane %v705, 1
  %v711 = vperm.slane %v705, 2
  %v712 = vperm.slane %v705, 3
  %v713 = vperm.slane %v705, 4
  %v714 = vperm.slane %v705, 5
  %v715 = vperm.slane %v705, 6
  %v716 = vperm.slane %v705, 7
  %v717 = vperm.slane %v706, 0
  %v718 = vperm.slane %v706, 1
  %v719 = vperm.slane %v706, 2
  %v720 = vperm.slane %v706, 3
  %v721 = vperm.slane %v706, 4
  %735 = vmatpush.msra.mxu0 %v692
  %736 = vmatpush.msra.mxu0 %v679
  %737 = vmatpush.msra.mxu0 %v666
  %738 = vmatpush.msra.mxu0 %v653
  %739 = vmatpush.msra.mxu0 %v640
  %740 = vmatpush.msra.mxu0 %v627
  %741 = vmatpush.msra.mxu0 %v614
  %742 = vmatpush.msra.mxu0 %v601
  %743 = vmatpush.msra.mxu0 %v588
  %744 = vmatpush.msra.mxu0 %v575
  %745 = vmatpush.msra.mxu0 %v562
  %746 = vmatpush.msra.mxu0 %v549
  %747 = vmatpush.msra.mxu0 %v536
  %748 = vmatpush.msra.mxu0 %v523
  %749 = vmatpush.msra.mxu0 %v510
  %750 = vmatpush.msra.mxu0 %v497
  %751 = vmatmul.f32.gmra.mxu0 %v495
  %v752 = vpop.f32.mrf.mxu0
  %v753 = vadd.f32 %v709, %v752
  %754 = vdwg.mxu0
  %755 = vmatpush.msra.mxu0 %v693
  %756 = vmatpush.msra.mxu0 %v680
  %757 = vmatpush.msra.mxu0 %v667
  %758 = vmatpush.msra.mxu0 %v654
  %759 = vmatpush.msra.mxu0 %v641
  %760 = vmatpush.msra.mxu0 %v628
  %761 = vmatpush.msra.mxu0 %v615
  %762 = vmatpush.msra.mxu0 %v602
  %763 = vmatpush.msra.mxu0 %v589
  %764 = vmatpush.msra.mxu0 %v576
  %765 = vmatpush.msra.mxu0 %v563
  %766 = vmatpush.msra.mxu0 %v550
  %767 = vmatpush.msra.mxu0 %v537
  %768 = vmatpush.msra.mxu0 %v524
  %769 = vmatpush.msra.mxu0 %v511
  %770 = vmatpush.msra.mxu0 %v498
  %771 = vmatmul.f32.gmra.mxu0 %v495
  %v772 = vpop.f32.mrf.mxu0
  %v773 = vadd.f32 %v710, %v772
  %774 = vdwg.mxu0
  %775 = vmatpush.msra.mxu0 %v694
  %776 = vmatpush.msra.mxu0 %v681
  %777 = vmatpush.msra.mxu0 %v668
  %778 = vmatpush.msra.mxu0 %v655
  %779 = vmatpush.msra.mxu0 %v642
  %780 = vmatpush.msra.mxu0 %v629
  %781 = vmatpush.msra.mxu0 %v616
  %782 = vmatpush.msra.mxu0 %v603
  %783 = vmatpush.msra.mxu0 %v590
  %784 = vmatpush.msra.mxu0 %v577
  %785 = vmatpush.msra.mxu0 %v564
  %786 = vmatpush.msra.mxu0 %v551
  %787 = vmatpush.msra.mxu0 %v538
  %788 = vmatpush.msra.mxu0 %v525
  %789 = vmatpush.msra.mxu0 %v512
  %790 = vmatpush.msra.mxu0 %v499
  %791 = vmatmul.f32.gmra.mxu0 %v495
  %v792 = vpop.f32.mrf.mxu0
  %v793 = vadd.f32 %v711, %v792
  %794 = vdwg.mxu0
  %795 = vmatpush.msra.mxu0 %v695
  %796 = vmatpush.msra.mxu0 %v682
  %797 = vmatpush.msra.mxu0 %v669
  %798 = vmatpush.msra.mxu0 %v656
  %799 = vmatpush.msra.mxu0 %v643
  %800 = vmatpush.msra.mxu0 %v630
  %801 = vmatpush.msra.mxu0 %v617
  %802 = vmatpush.msra.mxu0 %v604
  %803 = vmatpush.msra.mxu0 %v591
  %804 = vmatpush.msra.mxu0 %v578
  %805 = vmatpush.msra.mxu0 %v565
  %806 = vmatpush.msra.mxu0 %v552
  %807 = vmatpush.msra.mxu0 %v539
  %808 = vmatpush.msra.mxu0 %v526
  %809 = vmatpush.msra.mxu0 %v513
  %810 = vmatpush.msra.mxu0 %v500
  %811 = vmatmul.f32.gmra.mxu0 %v495
  %v812 = vpop.f32.mrf.mxu0
  %v813 = vadd.f32 %v712, %v812
  %814 = vdwg.mxu0
  %815 = vmatpush.msra.mxu0 %v696
  %816 = vmatpush.msra.mxu0 %v683
  %817 = vmatpush.msra.mxu0 %v670
  %818 = vmatpush.msra.mxu0 %v657
  %819 = vmatpush.msra.mxu0 %v644
  %820 = vmatpush.msra.mxu0 %v631
  %821 = vmatpush.msra.mxu0 %v618
  %822 = vmatpush.msra.mxu0 %v605
  %823 = vmatpush.msra.mxu0 %v592
  %824 = vmatpush.msra.mxu0 %v579
  %825 = vmatpush.msra.mxu0 %v566
  %826 = vmatpush.msra.mxu0 %v553
  %827 = vmatpush.msra.mxu0 %v540
  %828 = vmatpush.msra.mxu0 %v527
  %829 = vmatpush.msra.mxu0 %v514
  %830 = vmatpush.msra.mxu0 %v501
  %831 = vmatmul.f32.gmra.mxu0 %v495
  %v832 = vpop.f32.mrf.mxu0
  %v833 = vadd.f32 %v713, %v832
  %834 = vdwg.mxu0
  %835 = vmatpush.msra.mxu0 %v697
  %836 = vmatpush.msra.mxu0 %v684
  %837 = vmatpush.msra.mxu0 %v671
  %838 = vmatpush.msra.mxu0 %v658
  %839 = vmatpush.msra.mxu0 %v645
  %840 = vmatpush.msra.mxu0 %v632
  %841 = vmatpush.msra.mxu0 %v619
  %842 = vmatpush.msra.mxu0 %v606
  %843 = vmatpush.msra.mxu0 %v593
  %844 = vmatpush.msra.mxu0 %v580
  %845 = vmatpush.msra.mxu0 %v567
  %846 = vmatpush.msra.mxu0 %v554
  %847 = vmatpush.msra.mxu0 %v541
  %848 = vmatpush.msra.mxu0 %v528
  %849 = vmatpush.msra.mxu0 %v515
  %850 = vmatpush.msra.mxu0 %v502
  %851 = vmatmul.f32.gmra.mxu0 %v495
  %v852 = vpop.f32.mrf.mxu0
  %v853 = vadd.f32 %v714, %v852
  %854 = vdwg.mxu0
  %855 = vmatpush.msra.mxu0 %v698
  %856 = vmatpush.msra.mxu0 %v685
  %857 = vmatpush.msra.mxu0 %v672
  %858 = vmatpush.msra.mxu0 %v659
  %859 = vmatpush.msra.mxu0 %v646
  %860 = vmatpush.msra.mxu0 %v633
  %861 = vmatpush.msra.mxu0 %v620
  %862 = vmatpush.msra.mxu0 %v607
  %863 = vmatpush.msra.mxu0 %v594
  %864 = vmatpush.msra.mxu0 %v581
  %865 = vmatpush.msra.mxu0 %v568
  %866 = vmatpush.msra.mxu0 %v555
  %867 = vmatpush.msra.mxu0 %v542
  %868 = vmatpush.msra.mxu0 %v529
  %869 = vmatpush.msra.mxu0 %v516
  %870 = vmatpush.msra.mxu0 %v503
  %871 = vmatmul.f32.gmra.mxu0 %v495
  %v872 = vpop.f32.mrf.mxu0
  %v873 = vadd.f32 %v715, %v872
  %874 = vdwg.mxu0
  %875 = vmatpush.msra.mxu0 %v699
  %876 = vmatpush.msra.mxu0 %v686
  %877 = vmatpush.msra.mxu0 %v673
  %878 = vmatpush.msra.mxu0 %v660
  %879 = vmatpush.msra.mxu0 %v647
  %880 = vmatpush.msra.mxu0 %v634
  %881 = vmatpush.msra.mxu0 %v621
  %882 = vmatpush.msra.mxu0 %v608
  %883 = vmatpush.msra.mxu0 %v595
  %884 = vmatpush.msra.mxu0 %v582
  %885 = vmatpush.msra.mxu0 %v569
  %886 = vmatpush.msra.mxu0 %v556
  %887 = vmatpush.msra.mxu0 %v543
  %888 = vmatpush.msra.mxu0 %v530
  %889 = vmatpush.msra.mxu0 %v517
  %890 = vmatpush.msra.mxu0 %v504
  %891 = vmatmul.f32.gmra.mxu0 %v495
  %v892 = vpop.f32.mrf.mxu0
  %v893 = vadd.f32 %v716, %v892
  %894 = vdwg.mxu0
  %895 = vmatpush.msra.mxu0 %v700
  %896 = vmatpush.msra.mxu0 %v687
  %897 = vmatpush.msra.mxu0 %v674
  %898 = vmatpush.msra.mxu0 %v661
  %899 = vmatpush.msra.mxu0 %v648
  %900 = vmatpush.msra.mxu0 %v635
  %901 = vmatpush.msra.mxu0 %v622
  %902 = vmatpush.msra.mxu0 %v609
  %903 = vmatpush.msra.mxu0 %v596
  %904 = vmatpush.msra.mxu0 %v583
  %905 = vmatpush.msra.mxu0 %v570
  %906 = vmatpush.msra.mxu0 %v557
  %907 = vmatpush.msra.mxu0 %v544
  %908 = vmatpush.msra.mxu0 %v531
  %909 = vmatpush.msra.mxu0 %v518
  %910 = vmatpush.msra.mxu0 %v505
  %911 = vmatmul.f32.gmra.mxu0 %v495
  %v912 = vpop.f32.mrf.mxu0
  %v913 = vadd.f32 %v717, %v912
  %914 = vdwg.mxu0
  %915 = vmatpush.msra.mxu0 %v701
  %916 = vmatpush.msra.mxu0 %v688
  %917 = vmatpush.msra.mxu0 %v675
  %918 = vmatpush.msra.mxu0 %v662
  %919 = vmatpush.msra.mxu0 %v649
  %920 = vmatpush.msra.mxu0 %v636
  %921 = vmatpush.msra.mxu0 %v623
  %922 = vmatpush.msra.mxu0 %v610
  %923 = vmatpush.msra.mxu0 %v597
  %924 = vmatpush.msra.mxu0 %v584
  %925 = vmatpush.msra.mxu0 %v571
  %926 = vmatpush.msra.mxu0 %v558
  %927 = vmatpush.msra.mxu0 %v545
  %928 = vmatpush.msra.mxu0 %v532
  %929 = vmatpush.msra.mxu0 %v519
  %930 = vmatpush.msra.mxu0 %v506
  %931 = vmatmul.f32.gmra.mxu0 %v495
  %v932 = vpop.f32.mrf.mxu0
  %v933 = vadd.f32 %v718, %v932
  %934 = vdwg.mxu0
  %935 = vmatpush.msra.mxu0 %v702
  %936 = vmatpush.msra.mxu0 %v689
  %937 = vmatpush.msra.mxu0 %v676
  %938 = vmatpush.msra.mxu0 %v663
  %939 = vmatpush.msra.mxu0 %v650
  %940 = vmatpush.msra.mxu0 %v637
  %941 = vmatpush.msra.mxu0 %v624
  %942 = vmatpush.msra.mxu0 %v611
  %943 = vmatpush.msra.mxu0 %v598
  %944 = vmatpush.msra.mxu0 %v585
  %945 = vmatpush.msra.mxu0 %v572
  %946 = vmatpush.msra.mxu0 %v559
  %947 = vmatpush.msra.mxu0 %v546
  %948 = vmatpush.msra.mxu0 %v533
  %949 = vmatpush.msra.mxu0 %v520
  %950 = vmatpush.msra.mxu0 %v507
  %951 = vmatmul.f32.gmra.mxu0 %v495
  %v952 = vpop.f32.mrf.mxu0
  %v953 = vadd.f32 %v719, %v952
  %954 = vdwg.mxu0
  %955 = vmatpush.msra.mxu0 %v703
  %956 = vmatpush.msra.mxu0 %v690
  %957 = vmatpush.msra.mxu0 %v677
  %958 = vmatpush.msra.mxu0 %v664
  %959 = vmatpush.msra.mxu0 %v651
  %960 = vmatpush.msra.mxu0 %v638
  %961 = vmatpush.msra.mxu0 %v625
  %962 = vmatpush.msra.mxu0 %v612
  %963 = vmatpush.msra.mxu0 %v599
  %964 = vmatpush.msra.mxu0 %v586
  %965 = vmatpush.msra.mxu0 %v573
  %966 = vmatpush.msra.mxu0 %v560
  %967 = vmatpush.msra.mxu0 %v547
  %968 = vmatpush.msra.mxu0 %v534
  %969 = vmatpush.msra.mxu0 %v521
  %970 = vmatpush.msra.mxu0 %v508
  %971 = vmatmul.f32.gmra.mxu0 %v495
  %v972 = vpop.f32.mrf.mxu0
  %v973 = vadd.f32 %v720, %v972
  %974 = vdwg.mxu0
  %975 = vmatpush.msra.mxu0 %v704
  %976 = vmatpush.msra.mxu0 %v691
  %977 = vmatpush.msra.mxu0 %v678
  %978 = vmatpush.msra.mxu0 %v665
  %979 = vmatpush.msra.mxu0 %v652
  %980 = vmatpush.msra.mxu0 %v639
  %981 = vmatpush.msra.mxu0 %v626
  %982 = vmatpush.msra.mxu0 %v613
  %983 = vmatpush.msra.mxu0 %v600
  %984 = vmatpush.msra.mxu0 %v587
  %985 = vmatpush.msra.mxu0 %v574
  %986 = vmatpush.msra.mxu0 %v561
  %987 = vmatpush.msra.mxu0 %v548
  %988 = vmatpush.msra.mxu0 %v535
  %989 = vmatpush.msra.mxu0 %v522
  %990 = vmatpush.msra.mxu0 %v509
  %991 = vmatmul.f32.gmra.mxu0 %v495
  %v992 = vpop.f32.mrf.mxu0
  %v993 = vadd.f32 %v721, %v992
  %994 = vdwg.mxu0
  %v995 = vmax.f32 %v753, 0.0
  %v996 = vmax.f32 %v773, 0.0
  %v997 = vmax.f32 %v793, 0.0
  %v998 = vmax.f32 %v813, 0.0
  %v999 = vmax.f32 %v833, 0.0
  %v1000 = vmax.f32 %v853, 0.0
  %v1001 = vmax.f32 %v873, 0.0
  %v1002 = vmax.f32 %v893, 0.0
  %v1003 = vmax.f32 %v913, 0.0
  %v1004 = vmax.f32 %v933, 0.0
  %v1005 = vmax.f32 %v953, 0.0
  %v1006 = vmax.f32 %v973, 0.0
  %v1007 = vmax.f32 %v993, 0.0
  %1008 = vst [vmem:[%s5] sm:$0xff] %v995
  %1009 = vst [vmem:[%s5 + $0x8] sm:$0xff] %v996
  %1010 = vst [vmem:[%s5 + $0x10] sm:$0xff] %v997
  %1011 = vst [vmem:[%s5 + $0x18] sm:$0xff] %v998
  %1012 = vst [vmem:[%s5 + $0x20] sm:$0xff] %v999
  %1013 = vst [vmem:[%s5 + $0x28] sm:$0xff] %v1000
  %1014 = vst [vmem:[%s5 + $0x30] sm:$0xff] %v1001
  %1015 = vst [vmem:[%s5 + $0x38] sm:$0xff] %v1002
  %1016 = vst [vmem:[%s5 + $0x40] sm:$0xff] %v1003
  %1017 = vst [vmem:[%s5 + $0x48] sm:$0xff] %v1004
  %1018 = vst [vmem:[%s5 + $0x50] sm:$0xff] %v1005
  %1019 = vst [vmem:[%s5 + $0x58] sm:$0xff] %v1006
  %1020 = vst.msk [vmem:[%s5 + $0x60] sm:$0xff] %vm233, %v1007
  // Predicated region
  $region22: #{autoencoder_forward.7} parent=0 // pred_check
    _
  $region23: #{autoencoder_forward.7} parent=0 // pred_check_branch
    %1022 = sbr.rel (0) target = $region25
  $region24: #{autoencoder_forward.7} parent=0 // pred_region
    _
  $region25: #{autoencoder_forward.7} parent=0 // pred_fallthru
    _
  // Predicated region
  $region26: #{autoencoder_forward.7} parent=0 // pred_check
    _
  $region27: #{autoencoder_forward.7} parent=0 // pred_check_branch
    %1024 = sbr.rel (0) target = $region29
  $region28: #{autoencoder_forward.7} parent=0 // pred_region
    _
  $region29: #{autoencoder_forward.7} parent=0 // pred_fallthru
    _

// kernel: autoencoder_forward.8
$region0: #{autoencoder_forward.8}
  #allocation0 [shape = 'u32[]', space=smem, size = 0x4, offset = 0x4, fixed_abs, tag = 'smem constant byte address 0x4 - core index']
  #allocation1 [shape = 'u32[72,128]{1,0:T(1,128)}', space=vmem, size = 0x9000, scoped, tag = 'internal scratch']
  %s0 = inlined_call_operand.vmem [shape: f32[512,288], index: 0, kind: input, shape index: {}]
  %s1 = inlined_call_operand.vmem [shape: f32[288,128], index: 1, kind: input, shape index: {}]
  %s2 = inlined_call_operand.vmem [shape: f32[1,128], index: 2, kind: input, shape index: {}]
  %s3 = inlined_call_operand.vmem [shape: f32[512,128], index: 3, kind: output, shape index: {}]
  %s4 = sld [smem:[#allocation0]]
  $region45: #{autoencoder_forward.8} parent=0
    _
  %s6 = ssub.s32 1, %s4
  %s7 = scalar_select 0, %s6, %s4
  loop: start=0, step=1, limit=4
  $region2: #{autoencoder_forward.8} parent=0 // loop_pre_header
    _
  $region3: #{autoencoder_forward.8} parent=0 // loop_header
    %s9 = sphi 0, %s13
    %p10 = scmp.ge.s32.totalorder %s9, 4
    %s19 = sphi 0, %s21
    %s22 = sphi 0, %s19
    %s23 = sphi 0, %s22
    %s39 = sphi 0, %s23
    %s43 = sphi 0, %s43
    %s45 = sphi 0, %s43
    %s46 = sphi 0, %s45
    %s60 = sphi 0, %s46
    %s64 = sphi 0, %s64
    %s66 = sphi 0, %s64
    %s67 = sphi 0, %s66
    %s81 = sphi 0, %s67
    %s87 = sphi 0, %s89
    %s90 = sphi 0, %s87
    %s91 = sphi 0, %s90
    %s107 = sphi 0, %s91
  $region4: #{autoencoder_forward.8} parent=0 // loop_header_branch
    %12 = sbr.rel (%p10) target = $region8
  $region5: #{autoencoder_forward.8} parent=0 // loop_body
    %s14 = ssub.s32 %s9, 1
    %s15 = ssub.s32 %s9, 2
    %s16 = sadd.s32 %s9, 1
    %s17 = ssub.s32 %s9, %s16
    %p18 = scmp.eq.s32.totalorder %s17, 0
    %s20 = sadd.s32 %s19, 1
    %s21 = scalar_select %p18, %s19, %s20
    %p24 = pneg %p18
    %p25 = scmp.eq.s32.totalorder %s9, 1
    %p26 = por %p24, %p25
    %p27 = scmp.ne.s32.totalorder %s19, %s22
    %p28 = scmp.eq.s32.totalorder %s9, 0
    %p29 = por %p27, %p28
    %p30 = scmp.ne.s32.totalorder %s19, %s22
    %p31 = scmp.eq.s32.totalorder %s14, 1
    %p32 = por %p30, %p31
    %p33 = scmp.ne.s32.totalorder %s22, %s23
    %p34 = scmp.eq.s32.totalorder %s14, 0
    %p35 = por %p33, %p34
    %p36 = scmp.ne.s32.totalorder %s22, %s23
    %p37 = scmp.eq.s32.totalorder %s15, 1
    %p38 = por %p36, %p37
    %p40 = scmp.ne.s32.totalorder %s23, %s39
    %p41 = scmp.eq.s32.totalorder %s15, 0
    %p42 = por %p40, %p41
    %s44 = sadd.s32 %s43, 1
    %p47 = scmp.eq.s32.totalorder %s9, 1
    %p48 = scmp.ne.s32.totalorder %s43, %s45
    %p49 = scmp.eq.s32.totalorder %s9, 0
    %p50 = por %p48, %p49
    %p51 = scmp.ne.s32.totalorder %s43, %s45
    %p52 = scmp.eq.s32.totalorder %s14, 1
    %p53 = por %p51, %p52
    %p54 = scmp.ne.s32.totalorder %s45, %s46
    %p55 = scmp.eq.s32.totalorder %s14, 0
    %p56 = por %p54, %p55
    %p57 = scmp.ne.s32.totalorder %s45, %s46
    %p58 = scmp.eq.s32.totalorder %s15, 1
    %p59 = por %p57, %p58
    %p61 = scmp.ne.s32.totalorder %s46, %s60
    %p62 = scmp.eq.s32.totalorder %s15, 0
    %p63 = por %p61, %p62
    %s65 = sadd.s32 %s64, 1
    %p68 = scmp.eq.s32.totalorder %s9, 1
    %p69 = scmp.ne.s32.totalorder %s64, %s66
    %p70 = scmp.eq.s32.totalorder %s9, 0
    %p71 = por %p69, %p70
    %p72 = scmp.ne.s32.totalorder %s64, %s66
    %p73 = scmp.eq.s32.totalorder %s14, 1
    %p74 = por %p72, %p73
    %p75 = scmp.ne.s32.totalorder %s66, %s67
    %p76 = scmp.eq.s32.totalorder %s14, 0
    %p77 = por %p75, %p76
    %p78 = scmp.ne.s32.totalorder %s66, %s67
    %p79 = scmp.eq.s32.totalorder %s15, 1
    %p80 = por %p78, %p79
    %p82 = scmp.ne.s32.totalorder %s67, %s81
    %p83 = scmp.eq.s32.totalorder %s15, 0
    %p84 = por %p82, %p83
    %s85 = ssub.s32 %s9, %s16
    %p86 = scmp.eq.s32.totalorder %s85, 0
    %s88 = sadd.s32 %s87, 1
    %s89 = scalar_select %p86, %s87, %s88
    %p92 = pneg %p86
    %p93 = scmp.eq.s32.totalorder %s9, 1
    %p94 = por %p92, %p93
    %p95 = scmp.ne.s32.totalorder %s87, %s90
    %p96 = scmp.eq.s32.totalorder %s9, 0
    %p97 = por %p95, %p96
    %p98 = scmp.ne.s32.totalorder %s87, %s90
    %p99 = scmp.eq.s32.totalorder %s14, 1
    %p100 = por %p98, %p99
    %p101 = scmp.ne.s32.totalorder %s90, %s91
    %p102 = scmp.eq.s32.totalorder %s14, 0
    %p103 = por %p101, %p102
    %p104 = scmp.ne.s32.totalorder %s90, %s91
    %p105 = scmp.eq.s32.totalorder %s15, 1
    %p106 = por %p104, %p105
    %p108 = scmp.ne.s32.totalorder %s91, %s107
    %p109 = scmp.eq.s32.totalorder %s15, 0
    %p110 = por %p108, %p109
    %p111 = scmp.le.s32.totalorder 1, %s9
    %p112 = scmp.lt.s32.totalorder %s9, 3
    %p113 = pnand %p111, %p112
    %p114 = pneg %p113
    // Predicated region
    $region9: #{autoencoder_forward.8} parent=5 // pred_check
      _
    $region10: #{autoencoder_forward.8} parent=5 // pred_check_branch
      %116 = sbr.rel (%p113) target = $region12
    $region11: #{autoencoder_forward.8} parent=5 // pred_region
      %s117 = ssub.s32 %s9, 1
      // Predicated region
      $region13: #{autoencoder_forward.8} parent=11 // pred_check
        %p118 = pneg %p56
      $region14: #{autoencoder_forward.8} parent=11 // pred_check_branch
        %120 = sbr.rel (%p118) target = $region16
      $region15: #{autoencoder_forward.8} parent=11 // pred_region
        _
      $region16: #{autoencoder_forward.8} parent=11 // pred_fallthru
        _
      // Predicated region
      $region17: #{autoencoder_forward.8} parent=11 // pred_check
        %p121 = pneg %p77
      $region18: #{autoencoder_forward.8} parent=11 // pred_check_branch
        %123 = sbr.rel (%p121) target = $region20
      $region19: #{autoencoder_forward.8} parent=11 // pred_region
        _
      $region20: #{autoencoder_forward.8} parent=11 // pred_fallthru
        _
    $region12: #{autoencoder_forward.8} parent=5 // pred_fallthru
      _
    %p124 = scmp.lt.s32.totalorder %s9, 2
    // Predicated region
    $region21: #{autoencoder_forward.8} parent=5 // pred_check
      %p125 = pneg %p124
    $region22: #{autoencoder_forward.8} parent=5 // pred_check_branch
      %127 = sbr.rel (%p125) target = $region24
    $region23: #{autoencoder_forward.8} parent=5 // pred_region
      // Predicated region
      $region25: #{autoencoder_forward.8} parent=23 // pred_check
        %p128 = pneg %p29
      $region26: #{autoencoder_forward.8} parent=23 // pred_check_branch
        %130 = sbr.rel (%p128) target = $region28
      $region27: #{autoencoder_forward.8} parent=23 // pred_region
        %s131 = smul.u32 32, %s9
        %p132 = scmp.lt.s32.totalorder %s131, 63
        %s133 = scalar_select %p132, %s131, 63
        %s134 = smul.addr %s133, 3
        %s135 = smul.addr %s134, 8
        %s136 = scalar_lea.vmem %s0, %s135
        %s137 = smul.u32 32, %s9
      $region28: #{autoencoder_forward.8} parent=23 // pred_fallthru
        _
    $region24: #{autoencoder_forward.8} parent=5 // pred_fallthru
      _
    %p138 = scmp.le.s32.totalorder 1, %s9
    %p139 = scmp.lt.s32.totalorder %s9, 3
    %p140 = pnand %p138, %p139
    %p141 = pneg %p140
    // Predicated region
    $region29: #{autoencoder_forward.8} parent=5 // pred_check
      _
    $region30: #{autoencoder_forward.8} parent=5 // pred_check_branch
      %143 = sbr.rel (%p140) target = $region32
    $region31: #{autoencoder_forward.8} parent=5 // pred_region
      %s144 = ssub.s32 %s9, 1
      %s145 = smul.u32 32, %s14
      %p146 = scmp.lt.s32.totalorder %s145, 63
      %s147 = scalar_select %p146, %s145, 63
      %s148 = smul.addr %s147, 3
      %s149 = smul.addr %s148, 8
      %s150 = scalar_lea.vmem %s0, %s149
      %p151 = pneg %p35
      %p152 = pneg %p32
      %p153 = pneg %p56
      %p154 = pneg %p53
      %p155 = pneg %p77
      %p156 = pneg %p74
      %p157 = pneg %p103
      %p158 = pneg %p100
      %s159 = smul.u32 32, %s14
      %p160 = scmp.lt.s32.totalorder %s159, 63
      %s161 = scalar_select %p160, %s159, 63
      %s162 = smul.addr %s161, 8
      %s163 = scalar_lea.vmem %s3, %s162
      %s164 = smul.u32 32, %s14
      %p165 = scmp.lt.s32.totalorder %s164, 63
      %s166 = scalar_select %p165, %s164, 63
      %s167 = smul.addr %s166, 3
      %s168 = smul.addr %s167, 8
      %s169 = scalar_lea.vmem %s0, %s168
      %s170 = smul.u32 32, %s14
      %s171 = smul.u32 32, %s14
      %p172 = scmp.lt.s32.totalorder %s171, 63
      %s173 = scalar_select %p172, %s171, 63
      %s174 = smul.addr %s173, 8
      %s175 = scalar_lea.vmem %s3, %s174
      %s176 = smul.u32 32, %s14
      %v177 = vld [vmem:[%s169] sm:$0xff]
      %v178 = vld [vmem:[%s169 + $0x8] sm:$0xff]
      %v179 = vld [vmem:[%s169 + $0x10] sm:$0xff]
      %v180 = vld [vmem:[%s169 + $0x18] sm:$0xff]
      %v181 = vld [vmem:[%s169 + $0x20] sm:$0xff]
      %v182 = vld [vmem:[%s169 + $0x28] sm:$0xff]
      %v183 = vld [vmem:[%s169 + $0x30] sm:$0xff]
      %v184 = vld [vmem:[%s169 + $0x38] sm:$0xff]
      %v185 = vld [vmem:[%s169 + $0x40] sm:$0xff]
      %v186 = vld [vmem:[%s169 + $0x48] sm:$0xff]
      %v187 = vld [vmem:[%s169 + $0x50] sm:$0xff]
      %v188 = vld [vmem:[%s169 + $0x58] sm:$0xff]
      %v189 = vld [vmem:[%s169 + $0x60] sm:$0xff]
      %v190 = vld [vmem:[%s169 + $0x68] sm:$0xff]
      %v191 = vld [vmem:[%s169 + $0x70] sm:$0xff]
      %v192 = vld [vmem:[%s169 + $0x78] sm:$0xff]
      %v193 = vld [vmem:[%s169 + $0x80] sm:$0xff]
      %v194 = vld [vmem:[%s169 + $0x88] sm:$0xff]
      %v195 = vld [vmem:[%s169 + $0x90] sm:$0xff]
      %v196 = vld [vmem:[%s169 + $0x98] sm:$0xff]
      %v197 = vld [vmem:[%s169 + $0xa0] sm:$0xff]
      %v198 = vld [vmem:[%s169 + $0xa8] sm:$0xff]
      %v199 = vld [vmem:[%s169 + $0xb0] sm:$0xff]
      %v200 = vld [vmem:[%s169 + $0xb8] sm:$0xff]
      %v201 = vld [vmem:[%s169 + $0xc0] sm:$0xff]
      %v202 = vld [vmem:[%s169 + $0xc8] sm:$0xff]
      %v203 = vld [vmem:[%s169 + $0xd0] sm:$0xff]
      %v204 = vld [vmem:[%s169 + $0xd8] sm:$0xff]
      %v205 = vld [vmem:[%s169 + $0xe0] sm:$0xff]
      %v206 = vld [vmem:[%s169 + $0xe8] sm:$0xff]
      %v207 = vld [vmem:[%s169 + $0xf0] sm:$0xff]
      %v208 = vld [vmem:[%s169 + $0xf8] sm:$0xff]
      %v209 = vld [vmem:[%s169 + $0x100] sm:$0xff]
      %v210 = vld [vmem:[%s169 + $0x108] sm:$0xff]
      %v211 = vld [vmem:[%s169 + $0x110] sm:$0xff]
      %v212 = vld [vmem:[%s169 + $0x118] sm:$0xff]
      %v213 = vld [vmem:[%s169 + $0x120] sm:$0xff]
      %v214 = vld [vmem:[%s169 + $0x128] sm:$0xff]
      %v215 = vld [vmem:[%s169 + $0x130] sm:$0xff]
      %v216 = vld [vmem:[%s169 + $0x138] sm:$0xff]
      %v217 = vld [vmem:[%s169 + $0x140] sm:$0xff]
      %v218 = vld [vmem:[%s169 + $0x148] sm:$0xff]
      %v219 = vld [vmem:[%s169 + $0x150] sm:$0xff]
      %v220 = vld [vmem:[%s169 + $0x158] sm:$0xff]
      %v221 = vld [vmem:[%s169 + $0x160] sm:$0xff]
      %v222 = vld [vmem:[%s169 + $0x168] sm:$0xff]
      %v223 = vld [vmem:[%s169 + $0x170] sm:$0xff]
      %v224 = vld [vmem:[%s169 + $0x178] sm:$0xff]
      %v225 = vld [vmem:[%s169 + $0x180] sm:$0xff]
      %v226 = vld [vmem:[%s169 + $0x188] sm:$0xff]
      %v227 = vld [vmem:[%s169 + $0x190] sm:$0xff]
      %v228 = vld [vmem:[%s169 + $0x198] sm:$0xff]
      %v229 = vld [vmem:[%s169 + $0x1a0] sm:$0xff]
      %v230 = vld [vmem:[%s169 + $0x1a8] sm:$0xff]
      %v231 = vld [vmem:[%s169 + $0x1b0] sm:$0xff]
      %v232 = vld [vmem:[%s169 + $0x1b8] sm:$0xff]
      %v233 = vld [vmem:[%s169 + $0x1c0] sm:$0xff]
      %v234 = vld [vmem:[%s169 + $0x1c8] sm:$0xff]
      %v235 = vld [vmem:[%s169 + $0x1d0] sm:$0xff]
      %v236 = vld [vmem:[%s169 + $0x1d8] sm:$0xff]
      %v237 = vld [vmem:[%s169 + $0x1e0] sm:$0xff]
      %v238 = vld [vmem:[%s169 + $0x1e8] sm:$0xff]
      %v239 = vld [vmem:[%s169 + $0x1f0] sm:$0xff]
      %v240 = vld [vmem:[%s169 + $0x1f8] sm:$0xff]
      %v241 = vld [vmem:[%s169 + $0x200] sm:$0xff]
      %v242 = vld [vmem:[%s169 + $0x208] sm:$0xff]
      %v243 = vld [vmem:[%s169 + $0x210] sm:$0xff]
      %v244 = vld [vmem:[%s169 + $0x218] sm:$0xff]
      %v245 = vld [vmem:[%s169 + $0x220] sm:$0xff]
      %v246 = vld [vmem:[%s169 + $0x228] sm:$0xff]
      %v247 = vld [vmem:[%s169 + $0x230] sm:$0xff]
      %v248 = vld [vmem:[%s169 + $0x238] sm:$0xff]
      %v249 = vld [vmem:[%s169 + $0x240] sm:$0xff]
      %v250 = vld [vmem:[%s169 + $0x248] sm:$0xff]
      %v251 = vld [vmem:[%s169 + $0x250] sm:$0xff]
      %v252 = vld [vmem:[%s169 + $0x258] sm:$0xff]
      %v253 = vld [vmem:[%s169 + $0x260] sm:$0xff]
      %v254 = vld [vmem:[%s169 + $0x268] sm:$0xff]
      %v255 = vld [vmem:[%s169 + $0x270] sm:$0xff]
      %v256 = vld [vmem:[%s169 + $0x278] sm:$0xff]
      %v257 = vld [vmem:[%s169 + $0x280] sm:$0xff]
      %v258 = vld [vmem:[%s169 + $0x288] sm:$0xff]
      %v259 = vld [vmem:[%s169 + $0x290] sm:$0xff]
      %v260 = vld [vmem:[%s169 + $0x298] sm:$0xff]
      %v261 = vld [vmem:[%s169 + $0x2a0] sm:$0xff]
      %v262 = vld [vmem:[%s169 + $0x2a8] sm:$0xff]
      %v263 = vld [vmem:[%s169 + $0x2b0] sm:$0xff]
      %v264 = vld [vmem:[%s169 + $0x2b8] sm:$0xff]
      %v265 = vld [vmem:[%s169 + $0x2c0] sm:$0xff]
      %v266 = vld [vmem:[%s169 + $0x2c8] sm:$0xff]
      %v267 = vld [vmem:[%s169 + $0x2d0] sm:$0xff]
      %v268 = vld [vmem:[%s169 + $0x2d8] sm:$0xff]
      %v269 = vld [vmem:[%s169 + $0x2e0] sm:$0xff]
      %v270 = vld [vmem:[%s169 + $0x2e8] sm:$0xff]
      %v271 = vld [vmem:[%s169 + $0x2f0] sm:$0xff]
      %v272 = vld [vmem:[%s169 + $0x2f8] sm:$0xff]
      %v273 = vld [vmem:[%s1] sm:$0xff]
      %v274 = vld [vmem:[%s1 + $0x8] sm:$0xff]
      %v275 = vld [vmem:[%s1 + $0x10] sm:$0xff]
      %v276 = vld [vmem:[%s1 + $0x18] sm:$0xff]
      %v277 = vld [vmem:[%s1 + $0x20] sm:$0xff]
      %v278 = vld [vmem:[%s1 + $0x28] sm:$0xff]
      %v279 = vld [vmem:[%s1 + $0x30] sm:$0xff]
      %v280 = vld [vmem:[%s1 + $0x38] sm:$0xff]
      %v281 = vld [vmem:[%s1 + $0x40] sm:$0xff]
      %v282 = vld [vmem:[%s1 + $0x48] sm:$0xff]
      %v283 = vld [vmem:[%s1 + $0x50] sm:$0xff]
      %v284 = vld [vmem:[%s1 + $0x58] sm:$0xff]
      %v285 = vld [vmem:[%s1 + $0x60] sm:$0xff]
      %v286 = vld [vmem:[%s1 + $0x68] sm:$0xff]
      %v287 = vld [vmem:[%s1 + $0x70] sm:$0xff]
      %v288 = vld [vmem:[%s1 + $0x78] sm:$0xff]
      %v289 = vld [vmem:[%s1 + $0x80] sm:$0xff]
      %v290 = vld [vmem:[%s1 + $0x88] sm:$0xff]
      %v291 = vld [vmem:[%s1 + $0x90] sm:$0xff]
      %v292 = vld [vmem:[%s1 + $0x98] sm:$0xff]
      %v293 = vld [vmem:[%s1 + $0xa0] sm:$0xff]
      %v294 = vld [vmem:[%s1 + $0xa8] sm:$0xff]
      %v295 = vld [vmem:[%s1 + $0xb0] sm:$0xff]
      %v296 = vld [vmem:[%s1 + $0xb8] sm:$0xff]
      %v297 = vld [vmem:[%s1 + $0xc0] sm:$0xff]
      %v298 = vld [vmem:[%s1 + $0xc8] sm:$0xff]
      %v299 = vld [vmem:[%s1 + $0xd0] sm:$0xff]
      %v300 = vld [vmem:[%s1 + $0xd8] sm:$0xff]
      %v301 = vld [vmem:[%s1 + $0xe0] sm:$0xff]
      %v302 = vld [vmem:[%s1 + $0xe8] sm:$0xff]
      %v303 = vld [vmem:[%s1 + $0xf0] sm:$0xff]
      %v304 = vld [vmem:[%s1 + $0xf8] sm:$0xff]
      %v305 = vld [vmem:[%s1 + $0x100] sm:$0xff]
      %v306 = vld [vmem:[%s1 + $0x108] sm:$0xff]
      %v307 = vld [vmem:[%s1 + $0x110] sm:$0xff]
      %v308 = vld [vmem:[%s1 + $0x118] sm:$0xff]
      %v309 = vld [vmem:[%s2] sm:$0x1]
      %v311 = vperm.slane %v309, 0
      %vm313 = vcmask 261120
      %v315 = vsel %vm313, %v179, 0
      %v318 = vsel %vm313, %v182, 0
      %v321 = vsel %vm313, %v185, 0
      %v324 = vsel %vm313, %v188, 0
      %v327 = vsel %vm313, %v191, 0
      %v330 = vsel %vm313, %v194, 0
      %v333 = vsel %vm313, %v197, 0
      %v336 = vsel %vm313, %v200, 0
      %v339 = vsel %vm313, %v203, 0
      %v342 = vsel %vm313, %v206, 0
      %v345 = vsel %vm313, %v209, 0
      %v348 = vsel %vm313, %v212, 0
      %v351 = vsel %vm313, %v215, 0
      %v354 = vsel %vm313, %v218, 0
      %v357 = vsel %vm313, %v221, 0
      %v360 = vsel %vm313, %v224, 0
      %v363 = vsel %vm313, %v227, 0
      %v366 = vsel %vm313, %v230, 0
      %v369 = vsel %vm313, %v233, 0
      %v372 = vsel %vm313, %v236, 0
      %v375 = vsel %vm313, %v239, 0
      %v378 = vsel %vm313, %v242, 0
      %v381 = vsel %vm313, %v245, 0
      %v384 = vsel %vm313, %v248, 0
      %v387 = vsel %vm313, %v251, 0
      %v390 = vsel %vm313, %v254, 0
      %v393 = vsel %vm313, %v257, 0
      %v396 = vsel %vm313, %v260, 0
      %v399 = vsel %vm313, %v263, 0
      %v402 = vsel %vm313, %v266, 0
      %v405 = vsel %vm313, %v269, 0
      %v408 = vsel %vm313, %v272, 0
      %410 = vmatpush.msra.mxu0 %v288
      %411 = vmatpush.msra.mxu0 %v287
      %412 = vmatpush.msra.mxu0 %v286
      %413 = vmatpush.msra.mxu0 %v285
      %414 = vmatpush.msra.mxu0 %v284
      %415 = vmatpush.msra.mxu0 %v283
      %416 = vmatpush.msra.mxu0 %v282
      %417 = vmatpush.msra.mxu0 %v281
      %418 = vmatpush.msra.mxu0 %v280
      %419 = vmatpush.msra.mxu0 %v279
      %420 = vmatpush.msra.mxu0 %v278
      %421 = vmatpush.msra.mxu0 %v277
      %422 = vmatpush.msra.mxu0 %v276
      %423 = vmatpush.msra.mxu0 %v275
      %424 = vmatpush.msra.mxu0 %v274
      %425 = vmatpush.msra.mxu0 %v273
      %426 = vmatmul.f32.gmra.mxu0 %v177
      %v427 = vpop.f32.mrf.mxu0
      %v428 = vadd.f32 %v311, %v427
      %429 = vmatmul.f32.gmra.mxu0 %v180
      %v430 = vpop.f32.mrf.mxu0
      %v431 = vadd.f32 %v311, %v430
      %432 = vmatmul.f32.gmra.mxu0 %v183
      %v433 = vpop.f32.mrf.mxu0
      %v434 = vadd.f32 %v311, %v433
      %435 = vmatmul.f32.gmra.mxu0 %v186
      %v436 = vpop.f32.mrf.mxu0
      %v437 = vadd.f32 %v311, %v436
      %438 = vmatmul.f32.gmra.mxu0 %v189
      %v439 = vpop.f32.mrf.mxu0
      %v440 = vadd.f32 %v311, %v439
      %441 = vmatmul.f32.gmra.mxu0 %v192
      %v442 = vpop.f32.mrf.mxu0
      %v443 = vadd.f32 %v311, %v442
      %444 = vmatmul.f32.gmra.mxu0 %v195
      %v445 = vpop.f32.mrf.mxu0
      %v446 = vadd.f32 %v311, %v445
      %447 = vmatmul.f32.gmra.mxu0 %v198
      %v448 = vpop.f32.mrf.mxu0
      %v449 = vadd.f32 %v311, %v448
      %450 = vmatmul.f32.gmra.mxu0 %v201
      %v451 = vpop.f32.mrf.mxu0
      %v452 = vadd.f32 %v311, %v451
      %453 = vmatmul.f32.gmra.mxu0 %v204
      %v454 = vpop.f32.mrf.mxu0
      %v455 = vadd.f32 %v311, %v454
      %456 = vmatmul.f32.gmra.mxu0 %v207
      %v457 = vpop.f32.mrf.mxu0
      %v458 = vadd.f32 %v311, %v457
      %459 = vmatmul.f32.gmra.mxu0 %v210
      %v460 = vpop.f32.mrf.mxu0
      %v461 = vadd.f32 %v311, %v460
      %462 = vmatmul.f32.gmra.mxu0 %v213
      %v463 = vpop.f32.mrf.mxu0
      %v464 = vadd.f32 %v311, %v463
      %465 = vmatmul.f32.gmra.mxu0 %v216
      %v466 = vpop.f32.mrf.mxu0
      %v467 = vadd.f32 %v311, %v466
      %468 = vmatmul.f32.gmra.mxu0 %v219
      %v469 = vpop.f32.mrf.mxu0
      %v470 = vadd.f32 %v311, %v469
      %471 = vmatmul.f32.gmra.mxu0 %v222
      %v472 = vpop.f32.mrf.mxu0
      %v473 = vadd.f32 %v311, %v472
      %474 = vmatmul.f32.gmra.mxu0 %v225
      %v475 = vpop.f32.mrf.mxu0
      %v476 = vadd.f32 %v311, %v475
      %477 = vmatmul.f32.gmra.mxu0 %v228
      %v478 = vpop.f32.mrf.mxu0
      %v479 = vadd.f32 %v311, %v478
      %480 = vmatmul.f32.gmra.mxu0 %v231
      %v481 = vpop.f32.mrf.mxu0
      %v482 = vadd.f32 %v311, %v481
      %483 = vmatmul.f32.gmra.mxu0 %v234
      %v484 = vpop.f32.mrf.mxu0
      %v485 = vadd.f32 %v311, %v484
      %486 = vmatmul.f32.gmra.mxu0 %v237
      %v487 = vpop.f32.mrf.mxu0
      %v488 = vadd.f32 %v311, %v487
      %489 = vmatmul.f32.gmra.mxu0 %v240
      %v490 = vpop.f32.mrf.mxu0
      %v491 = vadd.f32 %v311, %v490
      %492 = vmatmul.f32.gmra.mxu0 %v243
      %v493 = vpop.f32.mrf.mxu0
      %v494 = vadd.f32 %v311, %v493
      %495 = vmatmul.f32.gmra.mxu0 %v246
      %v496 = vpop.f32.mrf.mxu0
      %v497 = vadd.f32 %v311, %v496
      %498 = vmatmul.f32.gmra.mxu0 %v249
      %v499 = vpop.f32.mrf.mxu0
      %v500 = vadd.f32 %v311, %v499
      %501 = vmatmul.f32.gmra.mxu0 %v252
      %v502 = vpop.f32.mrf.mxu0
      %v503 = vadd.f32 %v311, %v502
      %504 = vmatmul.f32.gmra.mxu0 %v255
      %v505 = vpop.f32.mrf.mxu0
      %v506 = vadd.f32 %v311, %v505
      %507 = vmatmul.f32.gmra.mxu0 %v258
      %v508 = vpop.f32.mrf.mxu0
      %v509 = vadd.f32 %v311, %v508
      %510 = vmatmul.f32.gmra.mxu0 %v261
      %v511 = vpop.f32.mrf.mxu0
      %v512 = vadd.f32 %v311, %v511
      %513 = vmatmul.f32.gmra.mxu0 %v264
      %v514 = vpop.f32.mrf.mxu0
      %v515 = vadd.f32 %v311, %v514
      %516 = vmatmul.f32.gmra.mxu0 %v267
      %v517 = vpop.f32.mrf.mxu0
      %v518 = vadd.f32 %v311, %v517
      %519 = vmatmul.f32.gmra.mxu0 %v270
      %v520 = vpop.f32.mrf.mxu0
      %v521 = vadd.f32 %v311, %v520
      %522 = vdwg.mxu0
      %523 = vmatpush.msra.mxu0 %v304
      %524 = vmatpush.msra.mxu0 %v303
      %525 = vmatpush.msra.mxu0 %v302
      %526 = vmatpush.msra.mxu0 %v301
      %527 = vmatpush.msra.mxu0 %v300
      %528 = vmatpush.msra.mxu0 %v299
      %529 = vmatpush.msra.mxu0 %v298
      %530 = vmatpush.msra.mxu0 %v297
      %531 = vmatpush.msra.mxu0 %v296
      %532 = vmatpush.msra.mxu0 %v295
      %533 = vmatpush.msra.mxu0 %v294
      %534 = vmatpush.msra.mxu0 %v293
      %535 = vmatpush.msra.mxu0 %v292
      %536 = vmatpush.msra.mxu0 %v291
      %537 = vmatpush.msra.mxu0 %v290
      %538 = vmatpush.msra.mxu0 %v289
      %539 = vmatmul.f32.gmra.mxu0 %v178
      %v540 = vpop.f32.mrf.mxu0
      %v541 = vadd.f32 %v428, %v540
      %542 = vmatmul.f32.gmra.mxu0 %v181
      %v543 = vpop.f32.mrf.mxu0
      %v544 = vadd.f32 %v431, %v543
      %545 = vmatmul.f32.gmra.mxu0 %v184
      %v546 = vpop.f32.mrf.mxu0
      %v547 = vadd.f32 %v434, %v546
      %548 = vmatmul.f32.gmra.mxu0 %v187
      %v549 = vpop.f32.mrf.mxu0
      %v550 = vadd.f32 %v437, %v549
      %551 = vmatmul.f32.gmra.mxu0 %v190
      %v552 = vpop.f32.mrf.mxu0
      %v553 = vadd.f32 %v440, %v552
      %554 = vmatmul.f32.gmra.mxu0 %v193
      %v555 = vpop.f32.mrf.mxu0
      %v556 = vadd.f32 %v443, %v555
      %557 = vmatmul.f32.gmra.mxu0 %v196
      %v558 = vpop.f32.mrf.mxu0
      %v559 = vadd.f32 %v446, %v558
      %560 = vmatmul.f32.gmra.mxu0 %v199
      %v561 = vpop.f32.mrf.mxu0
      %v562 = vadd.f32 %v449, %v561
      %563 = vmatmul.f32.gmra.mxu0 %v202
      %v564 = vpop.f32.mrf.mxu0
      %v565 = vadd.f32 %v452, %v564
      %566 = vmatmul.f32.gmra.mxu0 %v205
      %v567 = vpop.f32.mrf.mxu0
      %v568 = vadd.f32 %v455, %v567
      %569 = vmatmul.f32.gmra.mxu0 %v208
      %v570 = vpop.f32.mrf.mxu0
      %v571 = vadd.f32 %v458, %v570
      %572 = vmatmul.f32.gmra.mxu0 %v211
      %v573 = vpop.f32.mrf.mxu0
      %v574 = vadd.f32 %v461, %v573
      %575 = vmatmul.f32.gmra.mxu0 %v214
      %v576 = vpop.f32.mrf.mxu0
      %v577 = vadd.f32 %v464, %v576
      %578 = vmatmul.f32.gmra.mxu0 %v217
      %v579 = vpop.f32.mrf.mxu0
      %v580 = vadd.f32 %v467, %v579
      %581 = vmatmul.f32.gmra.mxu0 %v220
      %v582 = vpop.f32.mrf.mxu0
      %v583 = vadd.f32 %v470, %v582
      %584 = vmatmul.f32.gmra.mxu0 %v223
      %v585 = vpop.f32.mrf.mxu0
      %v586 = vadd.f32 %v473, %v585
      %587 = vmatmul.f32.gmra.mxu0 %v226
      %v588 = vpop.f32.mrf.mxu0
      %v589 = vadd.f32 %v476, %v588
      %590 = vmatmul.f32.gmra.mxu0 %v229
      %v591 = vpop.f32.mrf.mxu0
      %v592 = vadd.f32 %v479, %v591
      %593 = vmatmul.f32.gmra.mxu0 %v232
      %v594 = vpop.f32.mrf.mxu0
      %v595 = vadd.f32 %v482, %v594
      %596 = vmatmul.f32.gmra.mxu0 %v235
      %v597 = vpop.f32.mrf.mxu0
      %v598 = vadd.f32 %v485, %v597
      %599 = vmatmul.f32.gmra.mxu0 %v238
      %v600 = vpop.f32.mrf.mxu0
      %v601 = vadd.f32 %v488, %v600
      %602 = vmatmul.f32.gmra.mxu0 %v241
      %v603 = vpop.f32.mrf.mxu0
      %v604 = vadd.f32 %v491, %v603
      %605 = vmatmul.f32.gmra.mxu0 %v244
      %v606 = vpop.f32.mrf.mxu0
      %v607 = vadd.f32 %v494, %v606
      %608 = vmatmul.f32.gmra.mxu0 %v247
      %v609 = vpop.f32.mrf.mxu0
      %v610 = vadd.f32 %v497, %v609
      %611 = vmatmul.f32.gmra.mxu0 %v250
      %v612 = vpop.f32.mrf.mxu0
      %v613 = vadd.f32 %v500, %v612
      %614 = vmatmul.f32.gmra.mxu0 %v253
      %v615 = vpop.f32.mrf.mxu0
      %v616 = vadd.f32 %v503, %v615
      %617 = vmatmul.f32.gmra.mxu0 %v256
      %v618 = vpop.f32.mrf.mxu0
      %v619 = vadd.f32 %v506, %v618
      %620 = vmatmul.f32.gmra.mxu0 %v259
      %v621 = vpop.f32.mrf.mxu0
      %v622 = vadd.f32 %v509, %v621
      %623 = vmatmul.f32.gmra.mxu0 %v262
      %v624 = vpop.f32.mrf.mxu0
      %v625 = vadd.f32 %v512, %v624
      %626 = vmatmul.f32.gmra.mxu0 %v265
      %v627 = vpop.f32.mrf.mxu0
      %v628 = vadd.f32 %v515, %v627
      %629 = vmatmul.f32.gmra.mxu0 %v268
      %v630 = vpop.f32.mrf.mxu0
      %v631 = vadd.f32 %v518, %v630
      %632 = vmatmul.f32.gmra.mxu0 %v271
      %v633 = vpop.f32.mrf.mxu0
      %v634 = vadd.f32 %v521, %v633
      %635 = vdwg.mxu0
      %636 = vmatpush.msra.mxu0 0.0
      %637 = vmatpush.msra.mxu0 0.0
      %638 = vmatpush.msra.mxu0 0.0
      %639 = vmatpush.msra.mxu0 0.0
      %640 = vmatpush.msra.mxu0 0.0
      %641 = vmatpush.msra.mxu0 0.0
      %642 = vmatpush.msra.mxu0 0.0
      %643 = vmatpush.msra.mxu0 0.0
      %644 = vmatpush.msra.mxu0 0.0
      %645 = vmatpush.msra.mxu0 0.0
      %646 = vmatpush.msra.mxu0 0.0
      %647 = vmatpush.msra.mxu0 0.0
      %648 = vmatpush.msra.mxu0 %v308
      %649 = vmatpush.msra.mxu0 %v307
      %650 = vmatpush.msra.mxu0 %v306
      %651 = vmatpush.msra.mxu0 %v305
      %652 = vmatmul.f32.gmra.mxu0 %v315
      %v653 = vpop.f32.mrf.mxu0
      %v654 = vadd.f32 %v541, %v653
      %655 = vmatmul.f32.gmra.mxu0 %v318
      %v656 = vpop.f32.mrf.mxu0
      %v657 = vadd.f32 %v544, %v656
      %658 = vmatmul.f32.gmra.mxu0 %v321
      %v659 = vpop.f32.mrf.mxu0
      %v660 = vadd.f32 %v547, %v659
      %661 = vmatmul.f32.gmra.mxu0 %v324
      %v662 = vpop.f32.mrf.mxu0
      %v663 = vadd.f32 %v550, %v662
      %664 = vmatmul.f32.gmra.mxu0 %v327
      %v665 = vpop.f32.mrf.mxu0
      %v666 = vadd.f32 %v553, %v665
      %667 = vmatmul.f32.gmra.mxu0 %v330
      %v668 = vpop.f32.mrf.mxu0
      %v669 = vadd.f32 %v556, %v668
      %670 = vmatmul.f32.gmra.mxu0 %v333
      %v671 = vpop.f32.mrf.mxu0
      %v672 = vadd.f32 %v559, %v671
      %673 = vmatmul.f32.gmra.mxu0 %v336
      %v674 = vpop.f32.mrf.mxu0
      %v675 = vadd.f32 %v562, %v674
      %676 = vmatmul.f32.gmra.mxu0 %v339
      %v677 = vpop.f32.mrf.mxu0
      %v678 = vadd.f32 %v565, %v677
      %679 = vmatmul.f32.gmra.mxu0 %v342
      %v680 = vpop.f32.mrf.mxu0
      %v681 = vadd.f32 %v568, %v680
      %682 = vmatmul.f32.gmra.mxu0 %v345
      %v683 = vpop.f32.mrf.mxu0
      %v684 = vadd.f32 %v571, %v683
      %685 = vmatmul.f32.gmra.mxu0 %v348
      %v686 = vpop.f32.mrf.mxu0
      %v687 = vadd.f32 %v574, %v686
      %688 = vmatmul.f32.gmra.mxu0 %v351
      %v689 = vpop.f32.mrf.mxu0
      %v690 = vadd.f32 %v577, %v689
      %691 = vmatmul.f32.gmra.mxu0 %v354
      %v692 = vpop.f32.mrf.mxu0
      %v693 = vadd.f32 %v580, %v692
      %694 = vmatmul.f32.gmra.mxu0 %v357
      %v695 = vpop.f32.mrf.mxu0
      %v696 = vadd.f32 %v583, %v695
      %697 = vmatmul.f32.gmra.mxu0 %v360
      %v698 = vpop.f32.mrf.mxu0
      %v699 = vadd.f32 %v586, %v698
      %700 = vmatmul.f32.gmra.mxu0 %v363
      %v701 = vpop.f32.mrf.mxu0
      %v702 = vadd.f32 %v589, %v701
      %703 = vmatmul.f32.gmra.mxu0 %v366
      %v704 = vpop.f32.mrf.mxu0
      %v705 = vadd.f32 %v592, %v704
      %706 = vmatmul.f32.gmra.mxu0 %v369
      %v707 = vpop.f32.mrf.mxu0
      %v708 = vadd.f32 %v595, %v707
      %709 = vmatmul.f32.gmra.mxu0 %v372
      %v710 = vpop.f32.mrf.mxu0
      %v711 = vadd.f32 %v598, %v710
      %712 = vmatmul.f32.gmra.mxu0 %v375
      %v713 = vpop.f32.mrf.mxu0
      %v714 = vadd.f32 %v601, %v713
      %715 = vmatmul.f32.gmra.mxu0 %v378
      %v716 = vpop.f32.mrf.mxu0
      %v717 = vadd.f32 %v604, %v716
      %718 = vmatmul.f32.gmra.mxu0 %v381
      %v719 = vpop.f32.mrf.mxu0
      %v720 = vadd.f32 %v607, %v719
      %721 = vmatmul.f32.gmra.mxu0 %v384
      %v722 = vpop.f32.mrf.mxu0
      %v723 = vadd.f32 %v610, %v722
      %724 = vmatmul.f32.gmra.mxu0 %v387
      %v725 = vpop.f32.mrf.mxu0
      %v726 = vadd.f32 %v613, %v725
      %727 = vmatmul.f32.gmra.mxu0 %v390
      %v728 = vpop.f32.mrf.mxu0
      %v729 = vadd.f32 %v616, %v728
      %730 = vmatmul.f32.gmra.mxu0 %v393
      %v731 = vpop.f32.mrf.mxu0
      %v732 = vadd.f32 %v619, %v731
      %733 = vmatmul.f32.gmra.mxu0 %v396
      %v734 = vpop.f32.mrf.mxu0
      %v735 = vadd.f32 %v622, %v734
      %736 = vmatmul.f32.gmra.mxu0 %v399
      %v737 = vpop.f32.mrf.mxu0
      %v738 = vadd.f32 %v625, %v737
      %739 = vmatmul.f32.gmra.mxu0 %v402
      %v740 = vpop.f32.mrf.mxu0
      %v741 = vadd.f32 %v628, %v740
      %742 = vmatmul.f32.gmra.mxu0 %v405
      %v743 = vpop.f32.mrf.mxu0
      %v744 = vadd.f32 %v631, %v743
      %745 = vmatmul.f32.gmra.mxu0 %v408
      %v746 = vpop.f32.mrf.mxu0
      %v747 = vadd.f32 %v634, %v746
      %748 = vdwg.mxu0
      %v749 = vmax.f32 %v654, 0.0
      %v750 = vmax.f32 %v657, 0.0
      %v751 = vmax.f32 %v660, 0.0
      %v752 = vmax.f32 %v663, 0.0
      %v753 = vmax.f32 %v666, 0.0
      %v754 = vmax.f32 %v669, 0.0
      %v755 = vmax.f32 %v672, 0.0
      %v756 = vmax.f32 %v675, 0.0
      %v757 = vmax.f32 %v678, 0.0
      %v758 = vmax.f32 %v681, 0.0
      %v759 = vmax.f32 %v684, 0.0
      %v760 = vmax.f32 %v687, 0.0
      %v761 = vmax.f32 %v690, 0.0
      %v762 = vmax.f32 %v693, 0.0
      %v763 = vmax.f32 %v696, 0.0
      %v764 = vmax.f32 %v699, 0.0
      %v765 = vmax.f32 %v702, 0.0
      %v766 = vmax.f32 %v705, 0.0
      %v767 = vmax.f32 %v708, 0.0
      %v768 = vmax.f32 %v711, 0.0
      %v769 = vmax.f32 %v714, 0.0
      %v770 = vmax.f32 %v717, 0.0
      %v771 = vmax.f32 %v720, 0.0
      %v772 = vmax.f32 %v723, 0.0
      %v773 = vmax.f32 %v726, 0.0
      %v774 = vmax.f32 %v729, 0.0
      %v775 = vmax.f32 %v732, 0.0
      %v776 = vmax.f32 %v735, 0.0
      %v777 = vmax.f32 %v738, 0.0
      %v778 = vmax.f32 %v741, 0.0
      %v779 = vmax.f32 %v744, 0.0
      %v780 = vmax.f32 %v747, 0.0
      %781 = vst [vmem:[%s175] sm:$0xff] %v749
      %782 = vst [vmem:[%s175 + $0x8] sm:$0xff] %v750
      %783 = vst [vmem:[%s175 + $0x10] sm:$0xff] %v751
      %784 = vst [vmem:[%s175 + $0x18] sm:$0xff] %v752
      %785 = vst [vmem:[%s175 + $0x20] sm:$0xff] %v753
      %786 = vst [vmem:[%s175 + $0x28] sm:$0xff] %v754
      %787 = vst [vmem:[%s175 + $0x30] sm:$0xff] %v755
      %788 = vst [vmem:[%s175 + $0x38] sm:$0xff] %v756
      %789 = vst [vmem:[%s175 + $0x40] sm:$0xff] %v757
      %790 = vst [vmem:[%s175 + $0x48] sm:$0xff] %v758
      %791 = vst [vmem:[%s175 + $0x50] sm:$0xff] %v759
      %792 = vst [vmem:[%s175 + $0x58] sm:$0xff] %v760
      %793 = vst [vmem:[%s175 + $0x60] sm:$0xff] %v761
      %794 = vst [vmem:[%s175 + $0x68] sm:$0xff] %v762
      %795 = vst [vmem:[%s175 + $0x70] sm:$0xff] %v763
      %796 = vst [vmem:[%s175 + $0x78] sm:$0xff] %v764
      %797 = vst [vmem:[%s175 + $0x80] sm:$0xff] %v765
      %798 = vst [vmem:[%s175 + $0x88] sm:$0xff] %v766
      %799 = vst [vmem:[%s175 + $0x90] sm:$0xff] %v767
      %800 = vst [vmem:[%s175 + $0x98] sm:$0xff] %v768
      %801 = vst [vmem:[%s175 + $0xa0] sm:$0xff] %v769
      %802 = vst [vmem:[%s175 + $0xa8] sm:$0xff] %v770
      %803 = vst [vmem:[%s175 + $0xb0] sm:$0xff] %v771
      %804 = vst [vmem:[%s175 + $0xb8] sm:$0xff] %v772
      %805 = vst [vmem:[%s175 + $0xc0] sm:$0xff] %v773
      %806 = vst [vmem:[%s175 + $0xc8] sm:$0xff] %v774
      %807 = vst [vmem:[%s175 + $0xd0] sm:$0xff] %v775
      %808 = vst [vmem:[%s175 + $0xd8] sm:$0xff] %v776
      %809 = vst [vmem:[%s175 + $0xe0] sm:$0xff] %v777
      %810 = vst [vmem:[%s175 + $0xe8] sm:$0xff] %v778
      %811 = vst [vmem:[%s175 + $0xf0] sm:$0xff] %v779
      %812 = vst [vmem:[%s175 + $0xf8] sm:$0xff] %v780
      %s813 = smul.u32 32, %s14
      %p814 = scmp.lt.s32.totalorder %s813, 63
      %s815 = scalar_select %p814, %s813, 63
      %s816 = smul.addr %s815, 8
      %s817 = scalar_lea.vmem %s3, %s816
      // Predicated region
      $region33: #{autoencoder_forward.8} parent=31 // pred_check
        %p818 = pneg %p100
      $region34: #{autoencoder_forward.8} parent=31 // pred_check_branch
        %820 = sbr.rel (%p818) target = $region36
      $region35: #{autoencoder_forward.8} parent=31 // pred_region
        %s821 = smul.u32 32, %s14
      $region36: #{autoencoder_forward.8} parent=31 // pred_fallthru
        _
    $region32: #{autoencoder_forward.8} parent=5 // pred_fallthru
      _
    %p822 = scmp.le.s32.totalorder 2, %s9
    // Predicated region
    $region37: #{autoencoder_forward.8} parent=5 // pred_check
      %p823 = pneg %p822
    $region38: #{autoencoder_forward.8} parent=5 // pred_check_branch
      %825 = sbr.rel (%p823) target = $region40
    $region39: #{autoencoder_forward.8} parent=5 // pred_region
      %s826 = ssub.s32 %s9, 2
      // Predicated region
      $region41: #{autoencoder_forward.8} parent=39 // pred_check
        %p827 = pneg %p106
      $region42: #{autoencoder_forward.8} parent=39 // pred_check_branch
        %829 = sbr.rel (%p827) target = $region44
      $region43: #{autoencoder_forward.8} parent=39 // pred_region
        %s830 = smul.u32 32, %s15
        %p831 = scmp.lt.s32.totalorder %s830, 63
        %s832 = scalar_select %p831, %s830, 63
        %s833 = smul.addr %s832, 8
        %s834 = scalar_lea.vmem %s3, %s833
      $region44: #{autoencoder_forward.8} parent=39 // pred_fallthru
        _
    $region40: #{autoencoder_forward.8} parent=5 // pred_fallthru
      _
  $region6: #{autoencoder_forward.8} parent=0 // loop_footer
    %s13 = sadd.s32 1, %s9
  $region7: #{autoencoder_forward.8} parent=0 // loop_footer_branch
    %8 = sbr.rel target = $region3
  $region8: #{autoencoder_forward.8} parent=0 // loop_exit
    _

// kernel: autoencoder_forward.9
$region0: #{autoencoder_forward.9}
  #allocation0 [shape = 'u32[]', space=smem, size = 0x4, offset = 0x4, fixed_abs, tag = 'smem constant byte address 0x4 - core index']
  #allocation1 [shape = 'u32[72,128]{1,0:T(1,128)}', space=vmem, size = 0x9000, scoped, tag = 'internal scratch']
  %s0 = inlined_call_operand.vmem [shape: f32[1792,144], index: 0, kind: input, shape index: {}]
  %s1 = inlined_call_operand.vmem [shape: f32[144,128], index: 1, kind: input, shape index: {}]
  %s2 = inlined_call_operand.vmem [shape: f32[1,128], index: 2, kind: input, shape index: {}]
  %s3 = inlined_call_operand.vmem [shape: f32[1792,128], index: 3, kind: output, shape index: {}]
  %s4 = sld [smem:[#allocation0]]
  $region45: #{autoencoder_forward.9} parent=0
    _
  %s6 = ssub.s32 1, %s4
  %s7 = scalar_select 0, %s6, %s4
  loop: start=0, step=1, limit=9
  $region2: #{autoencoder_forward.9} parent=0 // loop_pre_header
    _
  $region3: #{autoencoder_forward.9} parent=0 // loop_header
    %s9 = sphi 0, %s13
    %p10 = scmp.ge.s32.totalorder %s9, 9
    %s19 = sphi 0, %s21
    %s22 = sphi 0, %s19
    %s23 = sphi 0, %s22
    %s39 = sphi 0, %s23
    %s43 = sphi 0, %s43
    %s45 = sphi 0, %s43
    %s46 = sphi 0, %s45
    %s60 = sphi 0, %s46
    %s64 = sphi 0, %s64
    %s66 = sphi 0, %s64
    %s67 = sphi 0, %s66
    %s81 = sphi 0, %s67
    %s87 = sphi 0, %s89
    %s90 = sphi 0, %s87
    %s91 = sphi 0, %s90
    %s107 = sphi 0, %s91
  $region4: #{autoencoder_forward.9} parent=0 // loop_header_branch
    %12 = sbr.rel (%p10) target = $region8
  $region5: #{autoencoder_forward.9} parent=0 // loop_body
    %s14 = ssub.s32 %s9, 1
    %s15 = ssub.s32 %s9, 2
    %s16 = sadd.s32 %s9, 1
    %s17 = ssub.s32 %s9, %s16
    %p18 = scmp.eq.s32.totalorder %s17, 0
    %s20 = sadd.s32 %s19, 1
    %s21 = scalar_select %p18, %s19, %s20
    %p24 = pneg %p18
    %p25 = scmp.eq.s32.totalorder %s9, 6
    %p26 = por %p24, %p25
    %p27 = scmp.ne.s32.totalorder %s19, %s22
    %p28 = scmp.eq.s32.totalorder %s9, 0
    %p29 = por %p27, %p28
    %p30 = scmp.ne.s32.totalorder %s19, %s22
    %p31 = scmp.eq.s32.totalorder %s14, 6
    %p32 = por %p30, %p31
    %p33 = scmp.ne.s32.totalorder %s22, %s23
    %p34 = scmp.eq.s32.totalorder %s14, 0
    %p35 = por %p33, %p34
    %p36 = scmp.ne.s32.totalorder %s22, %s23
    %p37 = scmp.eq.s32.totalorder %s15, 6
    %p38 = por %p36, %p37
    %p40 = scmp.ne.s32.totalorder %s23, %s39
    %p41 = scmp.eq.s32.totalorder %s15, 0
    %p42 = por %p40, %p41
    %s44 = sadd.s32 %s43, 1
    %p47 = scmp.eq.s32.totalorder %s9, 6
    %p48 = scmp.ne.s32.totalorder %s43, %s45
    %p49 = scmp.eq.s32.totalorder %s9, 0
    %p50 = por %p48, %p49
    %p51 = scmp.ne.s32.totalorder %s43, %s45
    %p52 = scmp.eq.s32.totalorder %s14, 6
    %p53 = por %p51, %p52
    %p54 = scmp.ne.s32.totalorder %s45, %s46
    %p55 = scmp.eq.s32.totalorder %s14, 0
    %p56 = por %p54, %p55
    %p57 = scmp.ne.s32.totalorder %s45, %s46
    %p58 = scmp.eq.s32.totalorder %s15, 6
    %p59 = por %p57, %p58
    %p61 = scmp.ne.s32.totalorder %s46, %s60
    %p62 = scmp.eq.s32.totalorder %s15, 0
    %p63 = por %p61, %p62
    %s65 = sadd.s32 %s64, 1
    %p68 = scmp.eq.s32.totalorder %s9, 6
    %p69 = scmp.ne.s32.totalorder %s64, %s66
    %p70 = scmp.eq.s32.totalorder %s9, 0
    %p71 = por %p69, %p70
    %p72 = scmp.ne.s32.totalorder %s64, %s66
    %p73 = scmp.eq.s32.totalorder %s14, 6
    %p74 = por %p72, %p73
    %p75 = scmp.ne.s32.totalorder %s66, %s67
    %p76 = scmp.eq.s32.totalorder %s14, 0
    %p77 = por %p75, %p76
    %p78 = scmp.ne.s32.totalorder %s66, %s67
    %p79 = scmp.eq.s32.totalorder %s15, 6
    %p80 = por %p78, %p79
    %p82 = scmp.ne.s32.totalorder %s67, %s81
    %p83 = scmp.eq.s32.totalorder %s15, 0
    %p84 = por %p82, %p83
    %s85 = ssub.s32 %s9, %s16
    %p86 = scmp.eq.s32.totalorder %s85, 0
    %s88 = sadd.s32 %s87, 1
    %s89 = scalar_select %p86, %s87, %s88
    %p92 = pneg %p86
    %p93 = scmp.eq.s32.totalorder %s9, 6
    %p94 = por %p92, %p93
    %p95 = scmp.ne.s32.totalorder %s87, %s90
    %p96 = scmp.eq.s32.totalorder %s9, 0
    %p97 = por %p95, %p96
    %p98 = scmp.ne.s32.totalorder %s87, %s90
    %p99 = scmp.eq.s32.totalorder %s14, 6
    %p100 = por %p98, %p99
    %p101 = scmp.ne.s32.totalorder %s90, %s91
    %p102 = scmp.eq.s32.totalorder %s14, 0
    %p103 = por %p101, %p102
    %p104 = scmp.ne.s32.totalorder %s90, %s91
    %p105 = scmp.eq.s32.totalorder %s15, 6
    %p106 = por %p104, %p105
    %p108 = scmp.ne.s32.totalorder %s91, %s107
    %p109 = scmp.eq.s32.totalorder %s15, 0
    %p110 = por %p108, %p109
    %p111 = scmp.le.s32.totalorder 1, %s9
    %p112 = scmp.lt.s32.totalorder %s9, 8
    %p113 = pnand %p111, %p112
    %p114 = pneg %p113
    // Predicated region
    $region9: #{autoencoder_forward.9} parent=5 // pred_check
      _
    $region10: #{autoencoder_forward.9} parent=5 // pred_check_branch
      %116 = sbr.rel (%p113) target = $region12
    $region11: #{autoencoder_forward.9} parent=5 // pred_region
      %s117 = ssub.s32 %s9, 1
      // Predicated region
      $region13: #{autoencoder_forward.9} parent=11 // pred_check
        %p118 = pneg %p56
      $region14: #{autoencoder_forward.9} parent=11 // pred_check_branch
        %120 = sbr.rel (%p118) target = $region16
      $region15: #{autoencoder_forward.9} parent=11 // pred_region
        _
      $region16: #{autoencoder_forward.9} parent=11 // pred_fallthru
        _
      // Predicated region
      $region17: #{autoencoder_forward.9} parent=11 // pred_check
        %p121 = pneg %p77
      $region18: #{autoencoder_forward.9} parent=11 // pred_check_branch
        %123 = sbr.rel (%p121) target = $region20
      $region19: #{autoencoder_forward.9} parent=11 // pred_region
        _
      $region20: #{autoencoder_forward.9} parent=11 // pred_fallthru
        _
    $region12: #{autoencoder_forward.9} parent=5 // pred_fallthru
      _
    %p124 = scmp.lt.s32.totalorder %s9, 7
    // Predicated region
    $region21: #{autoencoder_forward.9} parent=5 // pred_check
      %p125 = pneg %p124
    $region22: #{autoencoder_forward.9} parent=5 // pred_check_branch
      %127 = sbr.rel (%p125) target = $region24
    $region23: #{autoencoder_forward.9} parent=5 // pred_region
      // Predicated region
      $region25: #{autoencoder_forward.9} parent=23 // pred_check
        %p128 = pneg %p29
      $region26: #{autoencoder_forward.9} parent=23 // pred_check_branch
        %130 = sbr.rel (%p128) target = $region28
      $region27: #{autoencoder_forward.9} parent=23 // pred_region
        %s131 = smul.u32 32, %s9
        %p132 = scmp.lt.s32.totalorder %s131, 223
        %s133 = scalar_select %p132, %s131, 223
        %s134 = smul.addr %s133, 2
        %s135 = smul.addr %s134, 8
        %s136 = scalar_lea.vmem %s0, %s135
        %s137 = smul.u32 32, %s9
      $region28: #{autoencoder_forward.9} parent=23 // pred_fallthru
        _
    $region24: #{autoencoder_forward.9} parent=5 // pred_fallthru
      _
    %p138 = scmp.le.s32.totalorder 1, %s9
    %p139 = scmp.lt.s32.totalorder %s9, 8
    %p140 = pnand %p138, %p139
    %p141 = pneg %p140
    // Predicated region
    $region29: #{autoencoder_forward.9} parent=5 // pred_check
      _
    $region30: #{autoencoder_forward.9} parent=5 // pred_check_branch
      %143 = sbr.rel (%p140) target = $region32
    $region31: #{autoencoder_forward.9} parent=5 // pred_region
      %s144 = ssub.s32 %s9, 1
      %s145 = smul.u32 32, %s14
      %p146 = scmp.lt.s32.totalorder %s145, 223
      %s147 = scalar_select %p146, %s145, 223
      %s148 = smul.addr %s147, 2
      %s149 = smul.addr %s148, 8
      %s150 = scalar_lea.vmem %s0, %s149
      %p151 = pneg %p35
      %p152 = pneg %p32
      %p153 = pneg %p56
      %p154 = pneg %p53
      %p155 = pneg %p77
      %p156 = pneg %p74
      %p157 = pneg %p103
      %p158 = pneg %p100
      %s159 = smul.u32 32, %s14
      %p160 = scmp.lt.s32.totalorder %s159, 223
      %s161 = scalar_select %p160, %s159, 223
      %s162 = smul.addr %s161, 8
      %s163 = scalar_lea.vmem %s3, %s162
      %s164 = smul.u32 32, %s14
      %p165 = scmp.lt.s32.totalorder %s164, 223
      %s166 = scalar_select %p165, %s164, 223
      %s167 = smul.addr %s166, 2
      %s168 = smul.addr %s167, 8
      %s169 = scalar_lea.vmem %s0, %s168
      %s170 = smul.u32 32, %s14
      %s171 = smul.u32 32, %s14
      %p172 = scmp.lt.s32.totalorder %s171, 223
      %s173 = scalar_select %p172, %s171, 223
      %s174 = smul.addr %s173, 8
      %s175 = scalar_lea.vmem %s3, %s174
      %s176 = smul.u32 32, %s14
      %v177 = vld [vmem:[%s169] sm:$0xff]
      %v178 = vld [vmem:[%s169 + $0x8] sm:$0xff]
      %v179 = vld [vmem:[%s169 + $0x10] sm:$0xff]
      %v180 = vld [vmem:[%s169 + $0x18] sm:$0xff]
      %v181 = vld [vmem:[%s169 + $0x20] sm:$0xff]
      %v182 = vld [vmem:[%s169 + $0x28] sm:$0xff]
      %v183 = vld [vmem:[%s169 + $0x30] sm:$0xff]
      %v184 = vld [vmem:[%s169 + $0x38] sm:$0xff]
      %v185 = vld [vmem:[%s169 + $0x40] sm:$0xff]
      %v186 = vld [vmem:[%s169 + $0x48] sm:$0xff]
      %v187 = vld [vmem:[%s169 + $0x50] sm:$0xff]
      %v188 = vld [vmem:[%s169 + $0x58] sm:$0xff]
      %v189 = vld [vmem:[%s169 + $0x60] sm:$0xff]
      %v190 = vld [vmem:[%s169 + $0x68] sm:$0xff]
      %v191 = vld [vmem:[%s169 + $0x70] sm:$0xff]
      %v192 = vld [vmem:[%s169 + $0x78] sm:$0xff]
      %v193 = vld [vmem:[%s169 + $0x80] sm:$0xff]
      %v194 = vld [vmem:[%s169 + $0x88] sm:$0xff]
      %v195 = vld [vmem:[%s169 + $0x90] sm:$0xff]
      %v196 = vld [vmem:[%s169 + $0x98] sm:$0xff]
      %v197 = vld [vmem:[%s169 + $0xa0] sm:$0xff]
      %v198 = vld [vmem:[%s169 + $0xa8] sm:$0xff]
      %v199 = vld [vmem:[%s169 + $0xb0] sm:$0xff]
      %v200 = vld [vmem:[%s169 + $0xb8] sm:$0xff]
      %v201 = vld [vmem:[%s169 + $0xc0] sm:$0xff]
      %v202 = vld [vmem:[%s169 + $0xc8] sm:$0xff]
      %v203 = vld [vmem:[%s169 + $0xd0] sm:$0xff]
      %v204 = vld [vmem:[%s169 + $0xd8] sm:$0xff]
      %v205 = vld [vmem:[%s169 + $0xe0] sm:$0xff]
      %v206 = vld [vmem:[%s169 + $0xe8] sm:$0xff]
      %v207 = vld [vmem:[%s169 + $0xf0] sm:$0xff]
      %v208 = vld [vmem:[%s169 + $0xf8] sm:$0xff]
      %v209 = vld [vmem:[%s169 + $0x100] sm:$0xff]
      %v210 = vld [vmem:[%s169 + $0x108] sm:$0xff]
      %v211 = vld [vmem:[%s169 + $0x110] sm:$0xff]
      %v212 = vld [vmem:[%s169 + $0x118] sm:$0xff]
      %v213 = vld [vmem:[%s169 + $0x120] sm:$0xff]
      %v214 = vld [vmem:[%s169 + $0x128] sm:$0xff]
      %v215 = vld [vmem:[%s169 + $0x130] sm:$0xff]
      %v216 = vld [vmem:[%s169 + $0x138] sm:$0xff]
      %v217 = vld [vmem:[%s169 + $0x140] sm:$0xff]
      %v218 = vld [vmem:[%s169 + $0x148] sm:$0xff]
      %v219 = vld [vmem:[%s169 + $0x150] sm:$0xff]
      %v220 = vld [vmem:[%s169 + $0x158] sm:$0xff]
      %v221 = vld [vmem:[%s169 + $0x160] sm:$0xff]
      %v222 = vld [vmem:[%s169 + $0x168] sm:$0xff]
      %v223 = vld [vmem:[%s169 + $0x170] sm:$0xff]
      %v224 = vld [vmem:[%s169 + $0x178] sm:$0xff]
      %v225 = vld [vmem:[%s169 + $0x180] sm:$0xff]
      %v226 = vld [vmem:[%s169 + $0x188] sm:$0xff]
      %v227 = vld [vmem:[%s169 + $0x190] sm:$0xff]
      %v228 = vld [vmem:[%s169 + $0x198] sm:$0xff]
      %v229 = vld [vmem:[%s169 + $0x1a0] sm:$0xff]
      %v230 = vld [vmem:[%s169 + $0x1a8] sm:$0xff]
      %v231 = vld [vmem:[%s169 + $0x1b0] sm:$0xff]
      %v232 = vld [vmem:[%s169 + $0x1b8] sm:$0xff]
      %v233 = vld [vmem:[%s169 + $0x1c0] sm:$0xff]
      %v234 = vld [vmem:[%s169 + $0x1c8] sm:$0xff]
      %v235 = vld [vmem:[%s169 + $0x1d0] sm:$0xff]
      %v236 = vld [vmem:[%s169 + $0x1d8] sm:$0xff]
      %v237 = vld [vmem:[%s169 + $0x1e0] sm:$0xff]
      %v238 = vld [vmem:[%s169 + $0x1e8] sm:$0xff]
      %v239 = vld [vmem:[%s169 + $0x1f0] sm:$0xff]
      %v240 = vld [vmem:[%s169 + $0x1f8] sm:$0xff]
      %v241 = vld [vmem:[%s1] sm:$0xff]
      %v242 = vld [vmem:[%s1 + $0x8] sm:$0xff]
      %v243 = vld [vmem:[%s1 + $0x10] sm:$0xff]
      %v244 = vld [vmem:[%s1 + $0x18] sm:$0xff]
      %v245 = vld [vmem:[%s1 + $0x20] sm:$0xff]
      %v246 = vld [vmem:[%s1 + $0x28] sm:$0xff]
      %v247 = vld [vmem:[%s1 + $0x30] sm:$0xff]
      %v248 = vld [vmem:[%s1 + $0x38] sm:$0xff]
      %v249 = vld [vmem:[%s1 + $0x40] sm:$0xff]
      %v250 = vld [vmem:[%s1 + $0x48] sm:$0xff]
      %v251 = vld [vmem:[%s1 + $0x50] sm:$0xff]
      %v252 = vld [vmem:[%s1 + $0x58] sm:$0xff]
      %v253 = vld [vmem:[%s1 + $0x60] sm:$0xff]
      %v254 = vld [vmem:[%s1 + $0x68] sm:$0xff]
      %v255 = vld [vmem:[%s1 + $0x70] sm:$0xff]
      %v256 = vld [vmem:[%s1 + $0x78] sm:$0xff]
      %v257 = vld [vmem:[%s1 + $0x80] sm:$0xff]
      %v258 = vld [vmem:[%s1 + $0x88] sm:$0xff]
      %v259 = vld [vmem:[%s2] sm:$0x1]
      %v261 = vperm.slane %v259, 0
      %vm263 = vcmask 130048
      %v265 = vsel %vm263, %v178, 0
      %v268 = vsel %vm263, %v180, 0
      %v271 = vsel %vm263, %v182, 0
      %v274 = vsel %vm263, %v184, 0
      %v277 = vsel %vm263, %v186, 0
      %v280 = vsel %vm263, %v188, 0
      %v283 = vsel %vm263, %v190, 0
      %v286 = vsel %vm263, %v192, 0
      %v289 = vsel %vm263, %v194, 0
      %v292 = vsel %vm263, %v196, 0
      %v295 = vsel %vm263, %v198, 0
      %v298 = vsel %vm263, %v200, 0
      %v301 = vsel %vm263, %v202, 0
      %v304 = vsel %vm263, %v204, 0
      %v307 = vsel %vm263, %v206, 0
      %v310 = vsel %vm263, %v208, 0
      %v313 = vsel %vm263, %v210, 0
      %v316 = vsel %vm263, %v212, 0
      %v319 = vsel %vm263, %v214, 0
      %v322 = vsel %vm263, %v216, 0
      %v325 = vsel %vm263, %v218, 0
      %v328 = vsel %vm263, %v220, 0
      %v331 = vsel %vm263, %v222, 0
      %v334 = vsel %vm263, %v224, 0
      %v337 = vsel %vm263, %v226, 0
      %v340 = vsel %vm263, %v228, 0
      %v343 = vsel %vm263, %v230, 0
      %v346 = vsel %vm263, %v232, 0
      %v349 = vsel %vm263, %v234, 0
      %v352 = vsel %vm263, %v236, 0
      %v355 = vsel %vm263, %v238, 0
      %v358 = vsel %vm263, %v240, 0
      %360 = vmatpush.msra.mxu0 %v256
      %361 = vmatpush.msra.mxu0 %v255
      %362 = vmatpush.msra.mxu0 %v254
      %363 = vmatpush.msra.mxu0 %v253
      %364 = vmatpush.msra.mxu0 %v252
      %365 = vmatpush.msra.mxu0 %v251
      %366 = vmatpush.msra.mxu0 %v250
      %367 = vmatpush.msra.mxu0 %v249
      %368 = vmatpush.msra.mxu0 %v248
      %369 = vmatpush.msra.mxu0 %v247
      %370 = vmatpush.msra.mxu0 %v246
      %371 = vmatpush.msra.mxu0 %v245
      %372 = vmatpush.msra.mxu0 %v244
      %373 = vmatpush.msra.mxu0 %v243
      %374 = vmatpush.msra.mxu0 %v242
      %375 = vmatpush.msra.mxu0 %v241
      %376 = vmatmul.f32.gmra.mxu0 %v177
      %v377 = vpop.f32.mrf.mxu0
      %v378 = vadd.f32 %v261, %v377
      %379 = vmatmul.f32.gmra.mxu0 %v179
      %v380 = vpop.f32.mrf.mxu0
      %v381 = vadd.f32 %v261, %v380
      %382 = vmatmul.f32.gmra.mxu0 %v181
      %v383 = vpop.f32.mrf.mxu0
      %v384 = vadd.f32 %v261, %v383
      %385 = vmatmul.f32.gmra.mxu0 %v183
      %v386 = vpop.f32.mrf.mxu0
      %v387 = vadd.f32 %v261, %v386
      %388 = vmatmul.f32.gmra.mxu0 %v185
      %v389 = vpop.f32.mrf.mxu0
      %v390 = vadd.f32 %v261, %v389
      %391 = vmatmul.f32.gmra.mxu0 %v187
      %v392 = vpop.f32.mrf.mxu0
      %v393 = vadd.f32 %v261, %v392
      %394 = vmatmul.f32.gmra.mxu0 %v189
      %v395 = vpop.f32.mrf.mxu0
      %v396 = vadd.f32 %v261, %v395
      %397 = vmatmul.f32.gmra.mxu0 %v191
      %v398 = vpop.f32.mrf.mxu0
      %v399 = vadd.f32 %v261, %v398
      %400 = vmatmul.f32.gmra.mxu0 %v193
      %v401 = vpop.f32.mrf.mxu0
      %v402 = vadd.f32 %v261, %v401
      %403 = vmatmul.f32.gmra.mxu0 %v195
      %v404 = vpop.f32.mrf.mxu0
      %v405 = vadd.f32 %v261, %v404
      %406 = vmatmul.f32.gmra.mxu0 %v197
      %v407 = vpop.f32.mrf.mxu0
      %v408 = vadd.f32 %v261, %v407
      %409 = vmatmul.f32.gmra.mxu0 %v199
      %v410 = vpop.f32.mrf.mxu0
      %v411 = vadd.f32 %v261, %v410
      %412 = vmatmul.f32.gmra.mxu0 %v201
      %v413 = vpop.f32.mrf.mxu0
      %v414 = vadd.f32 %v261, %v413
      %415 = vmatmul.f32.gmra.mxu0 %v203
      %v416 = vpop.f32.mrf.mxu0
      %v417 = vadd.f32 %v261, %v416
      %418 = vmatmul.f32.gmra.mxu0 %v205
      %v419 = vpop.f32.mrf.mxu0
      %v420 = vadd.f32 %v261, %v419
      %421 = vmatmul.f32.gmra.mxu0 %v207
      %v422 = vpop.f32.mrf.mxu0
      %v423 = vadd.f32 %v261, %v422
      %424 = vmatmul.f32.gmra.mxu0 %v209
      %v425 = vpop.f32.mrf.mxu0
      %v426 = vadd.f32 %v261, %v425
      %427 = vmatmul.f32.gmra.mxu0 %v211
      %v428 = vpop.f32.mrf.mxu0
      %v429 = vadd.f32 %v261, %v428
      %430 = vmatmul.f32.gmra.mxu0 %v213
      %v431 = vpop.f32.mrf.mxu0
      %v432 = vadd.f32 %v261, %v431
      %433 = vmatmul.f32.gmra.mxu0 %v215
      %v434 = vpop.f32.mrf.mxu0
      %v435 = vadd.f32 %v261, %v434
      %436 = vmatmul.f32.gmra.mxu0 %v217
      %v437 = vpop.f32.mrf.mxu0
      %v438 = vadd.f32 %v261, %v437
      %439 = vmatmul.f32.gmra.mxu0 %v219
      %v440 = vpop.f32.mrf.mxu0
      %v441 = vadd.f32 %v261, %v440
      %442 = vmatmul.f32.gmra.mxu0 %v221
      %v443 = vpop.f32.mrf.mxu0
      %v444 = vadd.f32 %v261, %v443
      %445 = vmatmul.f32.gmra.mxu0 %v223
      %v446 = vpop.f32.mrf.mxu0
      %v447 = vadd.f32 %v261, %v446
      %448 = vmatmul.f32.gmra.mxu0 %v225
      %v449 = vpop.f32.mrf.mxu0
      %v450 = vadd.f32 %v261, %v449
      %451 = vmatmul.f32.gmra.mxu0 %v227
      %v452 = vpop.f32.mrf.mxu0
      %v453 = vadd.f32 %v261, %v452
      %454 = vmatmul.f32.gmra.mxu0 %v229
      %v455 = vpop.f32.mrf.mxu0
      %v456 = vadd.f32 %v261, %v455
      %457 = vmatmul.f32.gmra.mxu0 %v231
      %v458 = vpop.f32.mrf.mxu0
      %v459 = vadd.f32 %v261, %v458
      %460 = vmatmul.f32.gmra.mxu0 %v233
      %v461 = vpop.f32.mrf.mxu0
      %v462 = vadd.f32 %v261, %v461
      %463 = vmatmul.f32.gmra.mxu0 %v235
      %v464 = vpop.f32.mrf.mxu0
      %v465 = vadd.f32 %v261, %v464
      %466 = vmatmul.f32.gmra.mxu0 %v237
      %v467 = vpop.f32.mrf.mxu0
      %v468 = vadd.f32 %v261, %v467
      %469 = vmatmul.f32.gmra.mxu0 %v239
      %v470 = vpop.f32.mrf.mxu0
      %v471 = vadd.f32 %v261, %v470
      %472 = vdwg.mxu0
      %473 = vmatpush.msra.mxu0 0.0
      %474 = vmatpush.msra.mxu0 0.0
      %475 = vmatpush.msra.mxu0 0.0
      %476 = vmatpush.msra.mxu0 0.0
      %477 = vmatpush.msra.mxu0 0.0
      %478 = vmatpush.msra.mxu0 0.0
      %479 = vmatpush.msra.mxu0 0.0
      %480 = vmatpush.msra.mxu0 0.0
      %481 = vmatpush.msra.mxu0 0.0
      %482 = vmatpush.msra.mxu0 0.0
      %483 = vmatpush.msra.mxu0 0.0
      %484 = vmatpush.msra.mxu0 0.0
      %485 = vmatpush.msra.mxu0 0.0
      %486 = vmatpush.msra.mxu0 0.0
      %487 = vmatpush.msra.mxu0 %v258
      %488 = vmatpush.msra.mxu0 %v257
      %489 = vmatmul.f32.gmra.mxu0 %v265
      %v490 = vpop.f32.mrf.mxu0
      %v491 = vadd.f32 %v378, %v490
      %492 = vmatmul.f32.gmra.mxu0 %v268
      %v493 = vpop.f32.mrf.mxu0
      %v494 = vadd.f32 %v381, %v493
      %495 = vmatmul.f32.gmra.mxu0 %v271
      %v496 = vpop.f32.mrf.mxu0
      %v497 = vadd.f32 %v384, %v496
      %498 = vmatmul.f32.gmra.mxu0 %v274
      %v499 = vpop.f32.mrf.mxu0
      %v500 = vadd.f32 %v387, %v499
      %501 = vmatmul.f32.gmra.mxu0 %v277
      %v502 = vpop.f32.mrf.mxu0
      %v503 = vadd.f32 %v390, %v502
      %504 = vmatmul.f32.gmra.mxu0 %v280
      %v505 = vpop.f32.mrf.mxu0
      %v506 = vadd.f32 %v393, %v505
      %507 = vmatmul.f32.gmra.mxu0 %v283
      %v508 = vpop.f32.mrf.mxu0
      %v509 = vadd.f32 %v396, %v508
      %510 = vmatmul.f32.gmra.mxu0 %v286
      %v511 = vpop.f32.mrf.mxu0
      %v512 = vadd.f32 %v399, %v511
      %513 = vmatmul.f32.gmra.mxu0 %v289
      %v514 = vpop.f32.mrf.mxu0
      %v515 = vadd.f32 %v402, %v514
      %516 = vmatmul.f32.gmra.mxu0 %v292
      %v517 = vpop.f32.mrf.mxu0
      %v518 = vadd.f32 %v405, %v517
      %519 = vmatmul.f32.gmra.mxu0 %v295
      %v520 = vpop.f32.mrf.mxu0
      %v521 = vadd.f32 %v408, %v520
      %522 = vmatmul.f32.gmra.mxu0 %v298
      %v523 = vpop.f32.mrf.mxu0
      %v524 = vadd.f32 %v411, %v523
      %525 = vmatmul.f32.gmra.mxu0 %v301
      %v526 = vpop.f32.mrf.mxu0
      %v527 = vadd.f32 %v414, %v526
      %528 = vmatmul.f32.gmra.mxu0 %v304
      %v529 = vpop.f32.mrf.mxu0
      %v530 = vadd.f32 %v417, %v529
      %531 = vmatmul.f32.gmra.mxu0 %v307
      %v532 = vpop.f32.mrf.mxu0
      %v533 = vadd.f32 %v420, %v532
      %534 = vmatmul.f32.gmra.mxu0 %v310
      %v535 = vpop.f32.mrf.mxu0
      %v536 = vadd.f32 %v423, %v535
      %537 = vmatmul.f32.gmra.mxu0 %v313
      %v538 = vpop.f32.mrf.mxu0
      %v539 = vadd.f32 %v426, %v538
      %540 = vmatmul.f32.gmra.mxu0 %v316
      %v541 = vpop.f32.mrf.mxu0
      %v542 = vadd.f32 %v429, %v541
      %543 = vmatmul.f32.gmra.mxu0 %v319
      %v544 = vpop.f32.mrf.mxu0
      %v545 = vadd.f32 %v432, %v544
      %546 = vmatmul.f32.gmra.mxu0 %v322
      %v547 = vpop.f32.mrf.mxu0
      %v548 = vadd.f32 %v435, %v547
      %549 = vmatmul.f32.gmra.mxu0 %v325
      %v550 = vpop.f32.mrf.mxu0
      %v551 = vadd.f32 %v438, %v550
      %552 = vmatmul.f32.gmra.mxu0 %v328
      %v553 = vpop.f32.mrf.mxu0
      %v554 = vadd.f32 %v441, %v553
      %555 = vmatmul.f32.gmra.mxu0 %v331
      %v556 = vpop.f32.mrf.mxu0
      %v557 = vadd.f32 %v444, %v556
      %558 = vmatmul.f32.gmra.mxu0 %v334
      %v559 = vpop.f32.mrf.mxu0
      %v560 = vadd.f32 %v447, %v559
      %561 = vmatmul.f32.gmra.mxu0 %v337
      %v562 = vpop.f32.mrf.mxu0
      %v563 = vadd.f32 %v450, %v562
      %564 = vmatmul.f32.gmra.mxu0 %v340
      %v565 = vpop.f32.mrf.mxu0
      %v566 = vadd.f32 %v453, %v565
      %567 = vmatmul.f32.gmra.mxu0 %v343
      %v568 = vpop.f32.mrf.mxu0
      %v569 = vadd.f32 %v456, %v568
      %570 = vmatmul.f32.gmra.mxu0 %v346
      %v571 = vpop.f32.mrf.mxu0
      %v572 = vadd.f32 %v459, %v571
      %573 = vmatmul.f32.gmra.mxu0 %v349
      %v574 = vpop.f32.mrf.mxu0
      %v575 = vadd.f32 %v462, %v574
      %576 = vmatmul.f32.gmra.mxu0 %v352
      %v577 = vpop.f32.mrf.mxu0
      %v578 = vadd.f32 %v465, %v577
      %579 = vmatmul.f32.gmra.mxu0 %v355
      %v580 = vpop.f32.mrf.mxu0
      %v581 = vadd.f32 %v468, %v580
      %582 = vmatmul.f32.gmra.mxu0 %v358
      %v583 = vpop.f32.mrf.mxu0
      %v584 = vadd.f32 %v471, %v583
      %585 = vdwg.mxu0
      %v586 = vtanh.pop %v491
      %v587 = vtanh.pop %v494
      %v588 = vtanh.pop %v497
      %v589 = vtanh.pop %v500
      %v590 = vtanh.pop %v503
      %v591 = vtanh.pop %v506
      %v592 = vtanh.pop %v509
      %v593 = vtanh.pop %v512
      %v594 = vtanh.pop %v515
      %v595 = vtanh.pop %v518
      %v596 = vtanh.pop %v521
      %v597 = vtanh.pop %v524
      %v598 = vtanh.pop %v527
      %v599 = vtanh.pop %v530
      %v600 = vtanh.pop %v533
      %v601 = vtanh.pop %v536
      %v602 = vtanh.pop %v539
      %v603 = vtanh.pop %v542
      %v604 = vtanh.pop %v545
      %v605 = vtanh.pop %v548
      %v606 = vtanh.pop %v551
      %v607 = vtanh.pop %v554
      %v608 = vtanh.pop %v557
      %v609 = vtanh.pop %v560
      %v610 = vtanh.pop %v563
      %v611 = vtanh.pop %v566
      %v612 = vtanh.pop %v569
      %v613 = vtanh.pop %v572
      %v614 = vtanh.pop %v575
      %v615 = vtanh.pop %v578
      %v616 = vtanh.pop %v581
      %v617 = vtanh.pop %v584
      %618 = vst [vmem:[%s175] sm:$0xff] %v586
      %619 = vst [vmem:[%s175 + $0x8] sm:$0xff] %v587
      %620 = vst [vmem:[%s175 + $0x10] sm:$0xff] %v588
      %621 = vst [vmem:[%s175 + $0x18] sm:$0xff] %v589
      %622 = vst [vmem:[%s175 + $0x20] sm:$0xff] %v590
      %623 = vst [vmem:[%s175 + $0x28] sm:$0xff] %v591
      %624 = vst [vmem:[%s175 + $0x30] sm:$0xff] %v592
      %625 = vst [vmem:[%s175 + $0x38] sm:$0xff] %v593
      %626 = vst [vmem:[%s175 + $0x40] sm:$0xff] %v594
      %627 = vst [vmem:[%s175 + $0x48] sm:$0xff] %v595
      %628 = vst [vmem:[%s175 + $0x50] sm:$0xff] %v596
      %629 = vst [vmem:[%s175 + $0x58] sm:$0xff] %v597
      %630 = vst [vmem:[%s175 + $0x60] sm:$0xff] %v598
      %631 = vst [vmem:[%s175 + $0x68] sm:$0xff] %v599
      %632 = vst [vmem:[%s175 + $0x70] sm:$0xff] %v600
      %633 = vst [vmem:[%s175 + $0x78] sm:$0xff] %v601
      %634 = vst [vmem:[%s175 + $0x80] sm:$0xff] %v602
      %635 = vst [vmem:[%s175 + $0x88] sm:$0xff] %v603
      %636 = vst [vmem:[%s175 + $0x90] sm:$0xff] %v604
      %637 = vst [vmem:[%s175 + $0x98] sm:$0xff] %v605
      %638 = vst [vmem:[%s175 + $0xa0] sm:$0xff] %v606
      %639 = vst [vmem:[%s175 + $0xa8] sm:$0xff] %v607
      %640 = vst [vmem:[%s175 + $0xb0] sm:$0xff] %v608
      %641 = vst [vmem:[%s175 + $0xb8] sm:$0xff] %v609
      %642 = vst [vmem:[%s175 + $0xc0] sm:$0xff] %v610
      %643 = vst [vmem:[%s175 + $0xc8] sm:$0xff] %v611
      %644 = vst [vmem:[%s175 + $0xd0] sm:$0xff] %v612
      %645 = vst [vmem:[%s175 + $0xd8] sm:$0xff] %v613
      %646 = vst [vmem:[%s175 + $0xe0] sm:$0xff] %v614
      %647 = vst [vmem:[%s175 + $0xe8] sm:$0xff] %v615
      %648 = vst [vmem:[%s175 + $0xf0] sm:$0xff] %v616
      %649 = vst [vmem:[%s175 + $0xf8] sm:$0xff] %v617
      %s650 = smul.u32 32, %s14
      %p651 = scmp.lt.s32.totalorder %s650, 223
      %s652 = scalar_select %p651, %s650, 223
      %s653 = smul.addr %s652, 8
      %s654 = scalar_lea.vmem %s3, %s653
      // Predicated region
      $region33: #{autoencoder_forward.9} parent=31 // pred_check
        %p655 = pneg %p100
      $region34: #{autoencoder_forward.9} parent=31 // pred_check_branch
        %657 = sbr.rel (%p655) target = $region36
      $region35: #{autoencoder_forward.9} parent=31 // pred_region
        %s658 = smul.u32 32, %s14
      $region36: #{autoencoder_forward.9} parent=31 // pred_fallthru
        _
    $region32: #{autoencoder_forward.9} parent=5 // pred_fallthru
      _
    %p659 = scmp.le.s32.totalorder 2, %s9
    // Predicated region
    $region37: #{autoencoder_forward.9} parent=5 // pred_check
      %p660 = pneg %p659
    $region38: #{autoencoder_forward.9} parent=5 // pred_check_branch
      %662 = sbr.rel (%p660) target = $region40
    $region39: #{autoencoder_forward.9} parent=5 // pred_region
      %s663 = ssub.s32 %s9, 2
      // Predicated region
      $region41: #{autoencoder_forward.9} parent=39 // pred_check
        %p664 = pneg %p106
      $region42: #{autoencoder_forward.9} parent=39 // pred_check_branch
        %666 = sbr.rel (%p664) target = $region44
      $region43: #{autoencoder_forward.9} parent=39 // pred_region
        %s667 = smul.u32 32, %s15
        %p668 = scmp.lt.s32.totalorder %s667, 223
        %s669 = scalar_select %p668, %s667, 223
        %s670 = smul.addr %s669, 8
        %s671 = scalar_lea.vmem %s3, %s670
      $region44: #{autoencoder_forward.9} parent=39 // pred_fallthru
        _
    $region40: #{autoencoder_forward.9} parent=5 // pred_fallthru
      _
  $region6: #{autoencoder_forward.9} parent=0 // loop_footer
    %s13 = sadd.s32 1, %s9
  $region7: #{autoencoder_forward.9} parent=0 // loop_footer_branch
    %8 = sbr.rel target = $region3
  $region8: #{autoencoder_forward.9} parent=0 // loop_exit
    _

</llo_original>
